<compile_context>
chip_gen: v7x
topology: tpu7x:2x2x1
jax: 0.10.0
libtpu: 0.0.40
codegen_flags: <defaults>
</compile_context>

<pallas_src>
import functools
import math

import jax
import jax.numpy as jnp
from jax import lax
from jax.experimental import pallas as pl
from jax.experimental.pallas import tpu as pltpu  # noqa: F401  (TPU backend assumed)


def _layer_norm(x, w, b, eps=1e-5):
    mu = jnp.mean(x, axis=-1, keepdims=True)
    var = jnp.mean((x - mu) ** 2, axis=-1, keepdims=True)
    return (x - mu) * jax.lax.rsqrt(var + eps) * w + b


def _onehot_div(n_rows, n_cols, block):
    """M[r, c] = 1.0 iff c == r // block (built from iota + compares only)."""
    r = lax.broadcasted_iota(jnp.int32, (n_rows, n_cols), 0)
    c = lax.broadcasted_iota(jnp.int32, (n_rows, n_cols), 1)
    return jnp.logical_and(r >= c * block, r < (c + 1) * block).astype(jnp.float32)


def _onehot_div_t(n_rows, n_cols, block):
    """M[r, c] = 1.0 iff r == c // block."""
    r = lax.broadcasted_iota(jnp.int32, (n_rows, n_cols), 0)
    c = lax.broadcasted_iota(jnp.int32, (n_rows, n_cols), 1)
    return jnp.logical_and(c >= r * block, c < (r + 1) * block).astype(jnp.float32)


def _custom_model_kernel(
    seq_l, batch_b, nhead, n_ff_chunks,
    x_ref,       # (L*B, H)  f32   flattened (L, B, H) hidden states
    qkvw_ref,    # (H, 3H)   bf16  fused in_proj weight, (in, out) layout
    ow_ref,      # (H, H)    bf16  out_proj weight, (in, out) layout
    w1_ref,      # (H, FF)   bf16
    b1_ref,      # (1, FF)   f32
    w2_ref,      # (FF, H)   bf16
    vec_ref,     # (11, H)   f32   packed: qb,kb,vb,ob,ln1w,ln1b,ln2w,ln2b,b2,rfw,[rfb..]
    fc_ref,      # (L+1, T)  f32   rows 0..L-1 = fc.weight^T, row L = fc.bias
    o_ref,       # (B, T)    f32   output, written exactly once
):
    l, b = seq_l, batch_b
    x2d = x_ref[...]                                  # (LB, H) f32
    lb, h = x2d.shape
    hd = h // nhead
    m = lb * nhead
    ff = w1_ref.shape[1]
    ffc = ff // n_ff_chunks
    scale = 1.0 / math.sqrt(hd)

    # ---- packed small operands (single DMA) ----
    qb = vec_ref[0:1, :]
    kb = vec_ref[1:2, :]
    vb = vec_ref[2:3, :]
    ob = vec_ref[3:4, :]
    ln1w = vec_ref[4:5, :]
    ln1b = vec_ref[5:6, :]
    ln2w = vec_ref[6:7, :]
    ln2b = vec_ref[7:8, :]
    b2 = vec_ref[8:9, :]
    rfw = vec_ref[9:10, :]
    rfb = vec_ref[10:11, 0:1]                         # (1, 1)

    # ---- fused q/k/v projection (bf16 MXU inputs, f32 accumulate) ----
    x_bf = x2d.astype(jnp.bfloat16)
    qkv = jnp.dot(x_bf, qkvw_ref[...], preferred_element_type=jnp.float32)   # (LB, 3H)
    q2d = qkv[:, 0:h] + qb
    k2d = qkv[:, h:2 * h] + kb
    v2d = qkv[:, 2 * h:3 * h] + vb

    # ---- in-kernel index matrices (iota + compares; no vector int div/mod, no DMA) ----
    i_row = lax.broadcasted_iota(jnp.int32, (1, lb), 1).astype(jnp.float32)   # 0..LB-1
    l_row = lax.broadcasted_iota(jnp.int32, (1, l), 1).astype(jnp.float32)    # 0..L-1
    l_col = lax.broadcasted_iota(jnp.int32, (l, 1), 0).astype(jnp.float32)
    r_col = lax.broadcasted_iota(jnp.int32, (m, 1), 0).astype(jnp.float32)
    d_row = lax.broadcasted_iota(jnp.int32, (1, h), 1).astype(jnp.float32)
    bq_col = lax.broadcasted_iota(jnp.int32, (b, 1), 0).astype(jnp.float32)

    e_mat = _onehot_div(m, lb, nhead)          # (M, LB): 1 iff col == row // nhead
    coll = _onehot_div_t(lb, m, nhead)         # (LB, M): 1 iff row == col // nhead
    lr_oh = _onehot_div(m, l, b * nhead)       # (M, L):  1 iff col == row // (B*nhead)
    lc_oh = _onehot_div_t(l, lb, b)            # (L, LB): 1 iff row == col // B
    erep = _onehot_div(lb, l, b)               # (LB, L): 1 iff col == row // B

    i_vec = jnp.sum(e_mat * i_row, axis=1, keepdims=True)      # (M, 1)  r // nhead
    n_vec = r_col - float(nhead) * i_vec                        # (M, 1)  r % nhead
    l_of_r = jnp.sum(lr_oh * l_row, axis=1, keepdims=True)      # (M, 1)  r // (B*nhead)
    l_of_c = jnp.sum(lc_oh * l_col, axis=0, keepdims=True)      # (1, LB) c // B
    bmod = i_row - float(b) * l_of_c                            # (1, LB) c % B

    addmask = jnp.where(l_of_r == l_of_c, 0.0, -1e9)            # (M, LB) finite mask
    colmask = jnp.logical_and(d_row >= n_vec * hd,
                              d_row < (n_vec + 1.0) * hd).astype(jnp.float32)  # (M, H)
    sel = (bmod == bq_col).astype(jnp.float32)                  # (B, LB)

    # ---- flattened multi-head self-attention (all 2-D, MXU-friendly) ----
    q_exp = jnp.dot(e_mat, q2d, preferred_element_type=jnp.float32) * colmask   # (M, H)
    s2 = jnp.dot(q_exp, k2d.T, preferred_element_type=jnp.float32) * scale + addmask
    s2 = s2 - jnp.max(s2, axis=-1, keepdims=True)
    p2 = jnp.exp(s2)
    p2 = p2 * pl.reciprocal(jnp.sum(p2, axis=-1, keepdims=True), approx=True)
    ctx_exp = jnp.dot(p2, v2d, preferred_element_type=jnp.float32)               # (M, H)
    ctx2d = jnp.dot(coll, ctx_exp * colmask,
                    preferred_element_type=jnp.float32)                          # (LB, H)

    attn2d = jnp.dot(ctx2d.astype(jnp.bfloat16), ow_ref[...],
                     preferred_element_type=jnp.float32) + ob

    # ---- post-LN encoder layer (norm_first=False, relu FFN) ----
    h1 = _layer_norm(x2d + attn2d, ln1w, ln1b)

    # FFN chunked over FF so the live intermediate stays small (no vreg-file spill).
    h1_bf = h1.astype(jnp.bfloat16)
    acc = jnp.zeros((lb, h), jnp.float32)
    for c in range(n_ff_chunks):
        lo = c * ffc
        z = jnp.dot(h1_bf, w1_ref[:, lo:lo + ffc], preferred_element_type=jnp.float32)
        z = jnp.maximum(z + b1_ref[:, lo:lo + ffc], 0.0)
        acc = acc + jnp.dot(z.astype(jnp.bfloat16), w2_ref[lo:lo + ffc, :],
                            preferred_element_type=jnp.float32)
    h2 = _layer_norm(h1 + acc + b2, ln2w, ln2b)                                   # (LB, H)

    # ---- row_fc (Linear H->1) + fc (Linear L->T), single store ----
    feat = jnp.sum(h2 * rfw, axis=-1, keepdims=True) + rfb                        # (LB, 1)
    fcw_rep = jnp.dot(erep, fc_ref[0:l, :], preferred_element_type=jnp.float32)   # (LB, T)
    cmat = feat * fcw_rep                                                         # (LB, T)
    out = jnp.dot(sel, cmat, preferred_element_type=jnp.float32) + fc_ref[l:l + 1, :]
    o_ref[...] = out                                                              # (B, T)


def init_params(key, hidden, ff, max_length, target_size, std=0.02):
    """Deterministic synthetic parameters mirroring the PyTorch module layouts."""
    ks = jax.random.split(key, 6)
    return {
        'in_proj_weight': std * jax.random.normal(ks[0], (3 * hidden, hidden), jnp.float32),
        'in_proj_bias': jnp.zeros((3 * hidden,), jnp.float32),
        'out_proj_weight': std * jax.random.normal(ks[1], (hidden, hidden), jnp.float32),
        'out_proj_bias': jnp.zeros((hidden,), jnp.float32),
        'ln1_weight': jnp.ones((hidden,), jnp.float32),
        'ln1_bias': jnp.zeros((hidden,), jnp.float32),
        'ln2_weight': jnp.ones((hidden,), jnp.float32),
        'ln2_bias': jnp.zeros((hidden,), jnp.float32),
        'linear1_weight': std * jax.random.normal(ks[2], (ff, hidden), jnp.float32),
        'linear1_bias': jnp.zeros((ff,), jnp.float32),
        'linear2_weight': std * jax.random.normal(ks[3], (hidden, ff), jnp.float32),
        'linear2_bias': jnp.zeros((hidden,), jnp.float32),
        'row_fc_weight': std * jax.random.normal(ks[4], (1, hidden), jnp.float32),
        'row_fc_bias': jnp.zeros((1,), jnp.float32),
        'fc_weight': std * jax.random.normal(ks[5], (target_size, max_length), jnp.float32),
        'fc_bias': jnp.zeros((target_size,), jnp.float32),
    }


def prepare_params(params):
    """One-time wrapper-side prep: transposes, qkv fusion, bf16 casts, operand packing."""
    h = params['out_proj_weight'].shape[0]
    ff = params['linear1_weight'].shape[0]
    t = params['fc_weight'].shape[0]

    ipw = params['in_proj_weight']
    ipb = params['in_proj_bias']
    qkvw = jnp.concatenate([ipw[0:h].T, ipw[h:2 * h].T, ipw[2 * h:3 * h].T], axis=1)

    def row(v):
        return jnp.asarray(v, jnp.float32).reshape(1, h)

    rfb_row = jnp.zeros((1, h), jnp.float32).at[0, 0].set(
        jnp.asarray(params['row_fc_bias'], jnp.float32)[0])

    vec = jnp.concatenate([
        row(ipb[0:h]), row(ipb[h:2 * h]), row(ipb[2 * h:3 * h]),
        row(params['out_proj_bias']),
        row(params['ln1_weight']), row(params['ln1_bias']),
        row(params['ln2_weight']), row(params['ln2_bias']),
        row(params['linear2_bias']),
        row(params['row_fc_weight'].reshape(-1)),
        rfb_row,
    ], axis=0).astype(jnp.float32)                                  # (11, H)

    fc_slab = jnp.concatenate([
        jnp.asarray(params['fc_weight'], jnp.float32).T,            # (L, T)
        jnp.asarray(params['fc_bias'], jnp.float32).reshape(1, t),  # (1, T)
    ], axis=0)                                                      # (L+1, T)

    return {
        'qkvw': qkvw.astype(jnp.bfloat16),                          # (H, 3H)
        'ow': params['out_proj_weight'].T.astype(jnp.bfloat16),     # (H, H)
        'w1': params['linear1_weight'].T.astype(jnp.bfloat16),      # (H, FF)
        'b1': jnp.asarray(params['linear1_bias'], jnp.float32).reshape(1, ff),
        'w2': params['linear2_weight'].T.astype(jnp.bfloat16),      # (FF, H)
        'vec': vec,
        'fc': fc_slab,
    }


@functools.partial(jax.jit, static_argnames=('nhead', 'ff_chunk'))
def custom_model_forward(last_hidden_states, prepped, *, nhead=8, ff_chunk=512):
    """last_hidden_states: (B, L, H) f32 -> (B, target_size) f32."""
    b, l, h = last_hidden_states.shape
    ff = prepped['w1'].shape[1]
    t = prepped['fc'].shape[1]
    assert prepped['fc'].shape[0] == l + 1, "L must equal fc.in_features (max_length)"
    assert h % nhead == 0 and ff % ff_chunk == 0
    n_chunks = ff // ff_chunk

    # (B, L, H) -> (L, B, H) -> (L*B, H): single relayout; everything inside is 2-D.
    x2d = jnp.transpose(last_hidden_states, (1, 0, 2)).reshape(l * b, h).astype(jnp.float32)

    kernel = functools.partial(_custom_model_kernel, l, b, nhead, n_chunks)
    # Gridless single invocation: all operands (<1 MiB) fit VMEM on v5e/v6e/v7x,
    # no pipeline overhead, output stored exactly once.
    return pl.pallas_call(
        kernel,
        out_shape=jax.ShapeDtypeStruct((b, t), jnp.float32),
    )(x2d, prepped['qkvw'], prepped['ow'], prepped['w1'], prepped['b1'],
      prepped['w2'], prepped['vec'], prepped['fc'])


def _reference_forward(last_hidden_states, params, *, nhead=8):
    """Pure-JAX f32 reference mirroring the PyTorch module (eval-mode dropouts)."""
    b, l, h = last_hidden_states.shape
    hd = h // nhead
    x = jnp.transpose(last_hidden_states, (1, 0, 2)).astype(jnp.float32)   # (L, B, H)
    ipw, ipb = params['in_proj_weight'], params['in_proj_bias']
    q = x @ ipw[0:h].T + ipb[0:h]
    k = x @ ipw[h:2 * h].T + ipb[h:2 * h]
    v = x @ ipw[2 * h:3 * h].T + ipb[2 * h:3 * h]
    qh = q.reshape(l, b, nhead, hd)
    kh = k.reshape(l, b, nhead, hd)
    vh = v.reshape(l, b, nhead, hd)
    s = jnp.einsum('lqnd,lknd->lnqk', qh, kh) / math.sqrt(hd)
    p = jax.nn.softmax(s, axis=-1)
    ctx = jnp.einsum('lnqk,lknd->lqnd', p, vh).reshape(l, b, h)
    attn = ctx @ params['out_proj_weight'].T + params['out_proj_bias']
    h1 = _layer_norm(x + attn, params['ln1_weight'], params['ln1_bias'])
    ffz = jnp.maximum(h1 @ params['linear1_weight'].T + params['linear1_bias'], 0.0)
    ffo = ffz @ params['linear2_weight'].T + params['linear2_bias']
    h2 = _layer_norm(h1 + ffo, params['ln2_weight'], params['ln2_bias'])
    feat = (h2 @ params['row_fc_weight'].T)[..., 0] + params['row_fc_bias'][0]   # (L, B)
    return feat.T @ params['fc_weight'].T + params['fc_bias']                    # (B, T)


if __name__ == "__main__":
    # Toy shapes consistent with the module: HF batch B=2, seq L=16 (== max_length ==
    # fc.in_features), hidden H=32 (divisible by nhead=8), FF=2048 (encoder-layer
    # default), cfg.target_size T=2.
    B, L, H, NH, FF, T = 2, 16, 32, 8, 2048, 2
    key = jax.random.PRNGKey(0)
    kx, kp = jax.random.split(key)
    last_hidden_states = jax.random.normal(kx, (B, L, H), jnp.float32)
    params = init_params(kp, H, FF, L, T)
    prepped = prepare_params(params)        # hoisted one-time weight prep

    out = custom_model_forward(last_hidden_states, prepped, nhead=NH)
    out = jax.block_until_ready(out)
    assert out.shape == (B, T) and out.dtype == jnp.float32

    ref = _reference_forward(last_hidden_states, params, nhead=NH)
    max_err = float(jnp.max(jnp.abs(out - ref)))
    assert max_err < 2e-2, f"kernel deviates from reference: max |err| = {max_err}"
    print("KERNEL_OK")
</pallas_src>

<mosaic_0001>
module attributes {stable_mosaic.version = 11 : i64} {
  func.func @_custom_model_kernel(%arg0: memref<32x32xf32, #tpu.memory_space<vmem>>, %arg1: memref<32x96xbf16, #tpu.memory_space<vmem>>, %arg2: memref<32x32xbf16, #tpu.memory_space<vmem>>, %arg3: memref<32x2048xbf16, #tpu.memory_space<vmem>>, %arg4: memref<1x2048xf32, #tpu.memory_space<vmem>>, %arg5: memref<2048x32xbf16, #tpu.memory_space<vmem>>, %arg6: memref<11x32xf32, #tpu.memory_space<vmem>>, %arg7: memref<17x2xf32, #tpu.memory_space<vmem>>, %arg8: memref<2x2xf32, #tpu.memory_space<vmem>>) attributes {dimension_semantics = [], scalar_prefetch = 0 : i64, scratch_operands = 0 : i64, tpu.core_type = #tpu.core_type<tc>} {
    %c0 = arith.constant 0 : index
    %c0_0 = arith.constant 0 : index
    %0 = vector.load %arg0[%c0, %c0_0] : memref<32x32xf32, #tpu.memory_space<vmem>>, vector<32x32xf32>
    %c0_1 = arith.constant 0 : index
    %c0_2 = arith.constant 0 : index
    %1 = vector.load %arg6[%c0_1, %c0_2] : memref<11x32xf32, #tpu.memory_space<vmem>>, vector<1x32xf32>
    %c1 = arith.constant 1 : index
    %c0_3 = arith.constant 0 : index
    %2 = vector.load %arg6[%c1, %c0_3] : memref<11x32xf32, #tpu.memory_space<vmem>>, vector<1x32xf32>
    %c2 = arith.constant 2 : index
    %c0_4 = arith.constant 0 : index
    %3 = vector.load %arg6[%c2, %c0_4] : memref<11x32xf32, #tpu.memory_space<vmem>>, vector<1x32xf32>
    %c3 = arith.constant 3 : index
    %c0_5 = arith.constant 0 : index
    %4 = vector.load %arg6[%c3, %c0_5] : memref<11x32xf32, #tpu.memory_space<vmem>>, vector<1x32xf32>
    %c4 = arith.constant 4 : index
    %c0_6 = arith.constant 0 : index
    %5 = vector.load %arg6[%c4, %c0_6] : memref<11x32xf32, #tpu.memory_space<vmem>>, vector<1x32xf32>
    %c5 = arith.constant 5 : index
    %c0_7 = arith.constant 0 : index
    %6 = vector.load %arg6[%c5, %c0_7] : memref<11x32xf32, #tpu.memory_space<vmem>>, vector<1x32xf32>
    %c6 = arith.constant 6 : index
    %c0_8 = arith.constant 0 : index
    %7 = vector.load %arg6[%c6, %c0_8] : memref<11x32xf32, #tpu.memory_space<vmem>>, vector<1x32xf32>
    %c7 = arith.constant 7 : index
    %c0_9 = arith.constant 0 : index
    %8 = vector.load %arg6[%c7, %c0_9] : memref<11x32xf32, #tpu.memory_space<vmem>>, vector<1x32xf32>
    %c8 = arith.constant 8 : index
    %c0_10 = arith.constant 0 : index
    %9 = vector.load %arg6[%c8, %c0_10] : memref<11x32xf32, #tpu.memory_space<vmem>>, vector<1x32xf32>
    %c9 = arith.constant 9 : index
    %c0_11 = arith.constant 0 : index
    %10 = vector.load %arg6[%c9, %c0_11] : memref<11x32xf32, #tpu.memory_space<vmem>>, vector<1x32xf32>
    %c10 = arith.constant 10 : index
    %c0_12 = arith.constant 0 : index
    %11 = vector.load %arg6[%c10, %c0_12] : memref<11x32xf32, #tpu.memory_space<vmem>>, vector<1x1xf32>
    %12 = arith.truncf %0 : vector<32x32xf32> to vector<32x32xbf16>
    %c0_13 = arith.constant 0 : index
    %c0_14 = arith.constant 0 : index
    %13 = vector.load %arg1[%c0_13, %c0_14] : memref<32x96xbf16, #tpu.memory_space<vmem>>, vector<32x96xbf16>
    %cst = arith.constant dense<0.000000e+00> : vector<32x96xf32>
    %14 = tpu.matmul %12, %13, %cst {dimension_numbers = #tpu.dot_dimension_numbers<[1], [0], [0], [1], [0, 0, 1, 1], [], []>} : vector<32x32xbf16>, vector<32x96xbf16>, vector<32x96xf32> -> vector<32x96xf32>
    %15 = vector.extract_strided_slice %14 {offsets = [0, 0], sizes = [32, 32], strides = [1, 1]} : vector<32x96xf32> to vector<32x32xf32>
    %16 = vector.broadcast %1 : vector<1x32xf32> to vector<32x32xf32>
    %17 = arith.addf %15, %16 : vector<32x32xf32>
    %18 = vector.extract_strided_slice %14 {offsets = [0, 32], sizes = [32, 32], strides = [1, 1]} : vector<32x96xf32> to vector<32x32xf32>
    %19 = vector.broadcast %2 : vector<1x32xf32> to vector<32x32xf32>
    %20 = arith.addf %18, %19 : vector<32x32xf32>
    %21 = vector.extract_strided_slice %14 {offsets = [0, 64], sizes = [32, 32], strides = [1, 1]} : vector<32x96xf32> to vector<32x32xf32>
    %22 = vector.broadcast %3 : vector<1x32xf32> to vector<32x32xf32>
    %23 = arith.addf %21, %22 : vector<32x32xf32>
    %24 = tpu.iota {dimensions = array<i32: 1>} : vector<1x32xi32>
    %25 = arith.sitofp %24 : vector<1x32xi32> to vector<1x32xf32>
    %26 = tpu.iota {dimensions = array<i32: 1>} : vector<1x16xi32>
    %27 = arith.sitofp %26 : vector<1x16xi32> to vector<1x16xf32>
    %28 = tpu.iota {dimensions = array<i32: 0>} : vector<16x1xi32>
    %29 = arith.sitofp %28 : vector<16x1xi32> to vector<16x1xf32>
    %30 = tpu.iota {dimensions = array<i32: 0>} : vector<256x1xi32>
    %31 = arith.sitofp %30 : vector<256x1xi32> to vector<256x1xf32>
    %32 = tpu.iota {dimensions = array<i32: 1>} : vector<1x32xi32>
    %33 = arith.sitofp %32 : vector<1x32xi32> to vector<1x32xf32>
    %34 = tpu.iota {dimensions = array<i32: 0>} : vector<2x1xi32>
    %35 = arith.sitofp %34 : vector<2x1xi32> to vector<2x1xf32>
    %36 = tpu.iota {dimensions = array<i32: 0>} : vector<256x32xi32>
    %37 = tpu.iota {dimensions = array<i32: 1>} : vector<256x32xi32>
    %c8_i32 = arith.constant 8 : i32
    %38 = vector.broadcast %c8_i32 : i32 to vector<256x32xi32>
    %39 = arith.muli %37, %38 : vector<256x32xi32>
    %40 = arith.cmpi sge, %36, %39 : vector<256x32xi32>
    %c1_i32 = arith.constant 1 : i32
    %41 = vector.broadcast %c1_i32 : i32 to vector<256x32xi32>
    %42 = arith.addi %37, %41 : vector<256x32xi32>
    %c8_i32_15 = arith.constant 8 : i32
    %43 = vector.broadcast %c8_i32_15 : i32 to vector<256x32xi32>
    %44 = arith.muli %42, %43 : vector<256x32xi32>
    %45 = arith.cmpi slt, %36, %44 : vector<256x32xi32>
    %46 = arith.andi %40, %45 : vector<256x32xi1>
    %47 = arith.extui %46 : vector<256x32xi1> to vector<256x32xi32>
    %48 = arith.sitofp %47 : vector<256x32xi32> to vector<256x32xf32>
    %49 = tpu.iota {dimensions = array<i32: 0>} : vector<32x256xi32>
    %50 = tpu.iota {dimensions = array<i32: 1>} : vector<32x256xi32>
    %c8_i32_16 = arith.constant 8 : i32
    %51 = vector.broadcast %c8_i32_16 : i32 to vector<32x256xi32>
    %52 = arith.muli %49, %51 : vector<32x256xi32>
    %53 = arith.cmpi sge, %50, %52 : vector<32x256xi32>
    %c1_i32_17 = arith.constant 1 : i32
    %54 = vector.broadcast %c1_i32_17 : i32 to vector<32x256xi32>
    %55 = arith.addi %49, %54 : vector<32x256xi32>
    %c8_i32_18 = arith.constant 8 : i32
    %56 = vector.broadcast %c8_i32_18 : i32 to vector<32x256xi32>
    %57 = arith.muli %55, %56 : vector<32x256xi32>
    %58 = arith.cmpi slt, %50, %57 : vector<32x256xi32>
    %59 = arith.andi %53, %58 : vector<32x256xi1>
    %60 = arith.extui %59 : vector<32x256xi1> to vector<32x256xi32>
    %61 = arith.sitofp %60 : vector<32x256xi32> to vector<32x256xf32>
    %62 = tpu.iota {dimensions = array<i32: 0>} : vector<256x16xi32>
    %63 = tpu.iota {dimensions = array<i32: 1>} : vector<256x16xi32>
    %c16_i32 = arith.constant 16 : i32
    %64 = vector.broadcast %c16_i32 : i32 to vector<256x16xi32>
    %65 = arith.muli %63, %64 : vector<256x16xi32>
    %66 = arith.cmpi sge, %62, %65 : vector<256x16xi32>
    %c1_i32_19 = arith.constant 1 : i32
    %67 = vector.broadcast %c1_i32_19 : i32 to vector<256x16xi32>
    %68 = arith.addi %63, %67 : vector<256x16xi32>
    %c16_i32_20 = arith.constant 16 : i32
    %69 = vector.broadcast %c16_i32_20 : i32 to vector<256x16xi32>
    %70 = arith.muli %68, %69 : vector<256x16xi32>
    %71 = arith.cmpi slt, %62, %70 : vector<256x16xi32>
    %72 = arith.andi %66, %71 : vector<256x16xi1>
    %73 = arith.extui %72 : vector<256x16xi1> to vector<256x16xi32>
    %74 = arith.sitofp %73 : vector<256x16xi32> to vector<256x16xf32>
    %75 = tpu.iota {dimensions = array<i32: 0>} : vector<16x32xi32>
    %76 = tpu.iota {dimensions = array<i32: 1>} : vector<16x32xi32>
    %c2_i32 = arith.constant 2 : i32
    %77 = vector.broadcast %c2_i32 : i32 to vector<16x32xi32>
    %78 = arith.muli %75, %77 : vector<16x32xi32>
    %79 = arith.cmpi sge, %76, %78 : vector<16x32xi32>
    %c1_i32_21 = arith.constant 1 : i32
    %80 = vector.broadcast %c1_i32_21 : i32 to vector<16x32xi32>
    %81 = arith.addi %75, %80 : vector<16x32xi32>
    %c2_i32_22 = arith.constant 2 : i32
    %82 = vector.broadcast %c2_i32_22 : i32 to vector<16x32xi32>
    %83 = arith.muli %81, %82 : vector<16x32xi32>
    %84 = arith.cmpi slt, %76, %83 : vector<16x32xi32>
    %85 = arith.andi %79, %84 : vector<16x32xi1>
    %86 = arith.extui %85 : vector<16x32xi1> to vector<16x32xi32>
    %87 = arith.sitofp %86 : vector<16x32xi32> to vector<16x32xf32>
    %88 = tpu.iota {dimensions = array<i32: 0>} : vector<32x16xi32>
    %89 = tpu.iota {dimensions = array<i32: 1>} : vector<32x16xi32>
    %c2_i32_23 = arith.constant 2 : i32
    %90 = vector.broadcast %c2_i32_23 : i32 to vector<32x16xi32>
    %91 = arith.muli %89, %90 : vector<32x16xi32>
    %92 = arith.cmpi sge, %88, %91 : vector<32x16xi32>
    %c1_i32_24 = arith.constant 1 : i32
    %93 = vector.broadcast %c1_i32_24 : i32 to vector<32x16xi32>
    %94 = arith.addi %89, %93 : vector<32x16xi32>
    %c2_i32_25 = arith.constant 2 : i32
    %95 = vector.broadcast %c2_i32_25 : i32 to vector<32x16xi32>
    %96 = arith.muli %94, %95 : vector<32x16xi32>
    %97 = arith.cmpi slt, %88, %96 : vector<32x16xi32>
    %98 = arith.andi %92, %97 : vector<32x16xi1>
    %99 = arith.extui %98 : vector<32x16xi1> to vector<32x16xi32>
    %100 = arith.sitofp %99 : vector<32x16xi32> to vector<32x16xf32>
    %101 = vector.broadcast %25 : vector<1x32xf32> to vector<256x32xf32>
    %102 = arith.mulf %48, %101 : vector<256x32xf32>
    %cst_26 = arith.constant dense<0.000000e+00> : vector<256xf32>
    %103 = vector.multi_reduction <add>, %102, %cst_26 [1] : vector<256x32xf32> to vector<256xf32>
    %104 = vector.shape_cast %103 : vector<256xf32> to vector<256x1xf32>
    %cst_27 = arith.constant 8.000000e+00 : f32
    %105 = vector.broadcast %cst_27 : f32 to vector<256x1xf32>
    %106 = arith.mulf %105, %104 : vector<256x1xf32>
    %107 = arith.subf %31, %106 : vector<256x1xf32>
    %108 = vector.broadcast %27 : vector<1x16xf32> to vector<256x16xf32>
    %109 = arith.mulf %74, %108 : vector<256x16xf32>
    %cst_28 = arith.constant dense<0.000000e+00> : vector<256xf32>
    %110 = vector.multi_reduction <add>, %109, %cst_28 [1] : vector<256x16xf32> to vector<256xf32>
    %111 = vector.shape_cast %110 : vector<256xf32> to vector<256x1xf32>
    %112 = vector.broadcast %29 : vector<16x1xf32> to vector<16x32xf32>
    %113 = arith.mulf %87, %112 : vector<16x32xf32>
    %cst_29 = arith.constant dense<0.000000e+00> : vector<32xf32>
    %114 = vector.multi_reduction <add>, %113, %cst_29 [0] : vector<16x32xf32> to vector<32xf32>
    %115 = vector.shape_cast %114 : vector<32xf32> to vector<1x32xf32>
    %cst_30 = arith.constant 2.000000e+00 : f32
    %116 = vector.broadcast %cst_30 : f32 to vector<1x32xf32>
    %117 = arith.mulf %116, %115 : vector<1x32xf32>
    %118 = arith.subf %25, %117 : vector<1x32xf32>
    %119 = vector.broadcast %111 : vector<256x1xf32> to vector<256x32xf32>
    %120 = vector.broadcast %115 : vector<1x32xf32> to vector<256x32xf32>
    %121 = arith.cmpf oeq, %119, %120 : vector<256x32xf32>
    %cst_31 = arith.constant 0.000000e+00 : f32
    %cst_32 = arith.constant -1.000000e+09 : f32
    %122 = vector.broadcast %cst_31 : f32 to vector<256x32xf32>
    %123 = vector.broadcast %cst_32 : f32 to vector<256x32xf32>
    %124 = arith.select %121, %122, %123 : vector<256x32xi1>, vector<256x32xf32>
    %cst_33 = arith.constant 4.000000e+00 : f32
    %125 = vector.broadcast %cst_33 : f32 to vector<256x1xf32>
    %126 = arith.mulf %107, %125 : vector<256x1xf32>
    %127 = vector.broadcast %33 : vector<1x32xf32> to vector<256x32xf32>
    %128 = vector.broadcast %126 : vector<256x1xf32> to vector<256x32xf32>
    %129 = arith.cmpf oge, %127, %128 : vector<256x32xf32>
    %cst_34 = arith.constant 1.000000e+00 : f32
    %130 = vector.broadcast %cst_34 : f32 to vector<256x1xf32>
    %131 = arith.addf %107, %130 : vector<256x1xf32>
    %cst_35 = arith.constant 4.000000e+00 : f32
    %132 = vector.broadcast %cst_35 : f32 to vector<256x1xf32>
    %133 = arith.mulf %131, %132 : vector<256x1xf32>
    %134 = vector.broadcast %33 : vector<1x32xf32> to vector<256x32xf32>
    %135 = vector.broadcast %133 : vector<256x1xf32> to vector<256x32xf32>
    %136 = arith.cmpf olt, %134, %135 : vector<256x32xf32>
    %137 = arith.andi %129, %136 : vector<256x32xi1>
    %138 = arith.extui %137 : vector<256x32xi1> to vector<256x32xi32>
    %139 = arith.sitofp %138 : vector<256x32xi32> to vector<256x32xf32>
    %140 = vector.broadcast %118 : vector<1x32xf32> to vector<2x32xf32>
    %141 = vector.broadcast %35 : vector<2x1xf32> to vector<2x32xf32>
    %142 = arith.cmpf oeq, %140, %141 : vector<2x32xf32>
    %143 = arith.extui %142 : vector<2x32xi1> to vector<2x32xi32>
    %144 = arith.sitofp %143 : vector<2x32xi32> to vector<2x32xf32>
    %cst_36 = arith.constant dense<0.000000e+00> : vector<256x32xf32>
    %145 = tpu.matmul %48, %17, %cst_36 {dimension_numbers = #tpu.dot_dimension_numbers<[1], [0], [0], [1], [0, 0, 1, 1], [], []>} : vector<256x32xf32>, vector<32x32xf32>, vector<256x32xf32> -> vector<256x32xf32>
    %146 = arith.mulf %145, %139 : vector<256x32xf32>
    %147 = tpu.transpose %20, [1, 0] : vector<32x32xf32> -> vector<32x32xf32>
    %cst_37 = arith.constant dense<0.000000e+00> : vector<256x32xf32>
    %148 = tpu.matmul %146, %147, %cst_37 {dimension_numbers = #tpu.dot_dimension_numbers<[1], [0], [0], [1], [0, 0, 1, 1], [], []>} : vector<256x32xf32>, vector<32x32xf32>, vector<256x32xf32> -> vector<256x32xf32>
    %cst_38 = arith.constant 5.000000e-01 : f32
    %149 = vector.broadcast %cst_38 : f32 to vector<256x32xf32>
    %150 = arith.mulf %148, %149 : vector<256x32xf32>
    %151 = arith.addf %150, %124 : vector<256x32xf32>
    %cst_39 = arith.constant dense<0xFF800000> : vector<256xf32>
    %152 = vector.multi_reduction <maximumf>, %151, %cst_39 [1] : vector<256x32xf32> to vector<256xf32>
    %153 = vector.shape_cast %152 : vector<256xf32> to vector<256x1xf32>
    %154 = vector.broadcast %153 : vector<256x1xf32> to vector<256x32xf32>
    %155 = arith.subf %151, %154 : vector<256x32xf32>
    %156 = math.exp %155 : vector<256x32xf32>
    %cst_40 = arith.constant dense<0.000000e+00> : vector<256xf32>
    %157 = vector.multi_reduction <add>, %156, %cst_40 [1] : vector<256x32xf32> to vector<256xf32>
    %158 = vector.shape_cast %157 : vector<256xf32> to vector<256x1xf32>
    %159 = tpu.reciprocal %158 {approx = true} : vector<256x1xf32> -> vector<256x1xf32>
    %160 = vector.broadcast %159 : vector<256x1xf32> to vector<256x32xf32>
    %161 = arith.mulf %156, %160 : vector<256x32xf32>
    %cst_41 = arith.constant dense<0.000000e+00> : vector<256x32xf32>
    %162 = tpu.matmul %161, %23, %cst_41 {dimension_numbers = #tpu.dot_dimension_numbers<[1], [0], [0], [1], [0, 0, 1, 1], [], []>} : vector<256x32xf32>, vector<32x32xf32>, vector<256x32xf32> -> vector<256x32xf32>
    %163 = arith.mulf %162, %139 : vector<256x32xf32>
    %cst_42 = arith.constant dense<0.000000e+00> : vector<32x32xf32>
    %164 = tpu.matmul %61, %163, %cst_42 {dimension_numbers = #tpu.dot_dimension_numbers<[1], [0], [0], [1], [0, 0, 1, 1], [], []>} : vector<32x256xf32>, vector<256x32xf32>, vector<32x32xf32> -> vector<32x32xf32>
    %165 = arith.truncf %164 : vector<32x32xf32> to vector<32x32xbf16>
    %c0_43 = arith.constant 0 : index
    %c0_44 = arith.constant 0 : index
    %166 = vector.load %arg2[%c0_43, %c0_44] : memref<32x32xbf16, #tpu.memory_space<vmem>>, vector<32x32xbf16>
    %cst_45 = arith.constant dense<0.000000e+00> : vector<32x32xf32>
    %167 = tpu.matmul %165, %166, %cst_45 {dimension_numbers = #tpu.dot_dimension_numbers<[1], [0], [0], [1], [0, 0, 1, 1], [], []>} : vector<32x32xbf16>, vector<32x32xbf16>, vector<32x32xf32> -> vector<32x32xf32>
    %168 = vector.broadcast %4 : vector<1x32xf32> to vector<32x32xf32>
    %169 = arith.addf %167, %168 : vector<32x32xf32>
    %170 = arith.addf %0, %169 : vector<32x32xf32>
    %cst_46 = arith.constant dense<0.000000e+00> : vector<32xf32>
    %171 = vector.multi_reduction <add>, %170, %cst_46 [1] : vector<32x32xf32> to vector<32xf32>
    %172 = vector.shape_cast %171 : vector<32xf32> to vector<32x1xf32>
    %cst_47 = arith.constant 3.200000e+01 : f32
    %173 = vector.broadcast %cst_47 : f32 to vector<32x1xf32>
    %174 = arith.divf %172, %173 : vector<32x1xf32>
    %175 = vector.broadcast %174 : vector<32x1xf32> to vector<32x32xf32>
    %176 = arith.subf %170, %175 : vector<32x32xf32>
    %177 = arith.mulf %176, %176 : vector<32x32xf32>
    %cst_48 = arith.constant dense<0.000000e+00> : vector<32xf32>
    %178 = vector.multi_reduction <add>, %177, %cst_48 [1] : vector<32x32xf32> to vector<32xf32>
    %179 = vector.shape_cast %178 : vector<32xf32> to vector<32x1xf32>
    %cst_49 = arith.constant 3.200000e+01 : f32
    %180 = vector.broadcast %cst_49 : f32 to vector<32x1xf32>
    %181 = arith.divf %179, %180 : vector<32x1xf32>
    %182 = vector.broadcast %174 : vector<32x1xf32> to vector<32x32xf32>
    %183 = arith.subf %170, %182 : vector<32x32xf32>
    %cst_50 = arith.constant 9.99999974E-6 : f32
    %184 = vector.broadcast %cst_50 : f32 to vector<32x1xf32>
    %185 = arith.addf %181, %184 : vector<32x1xf32>
    %186 = math.rsqrt %185 : vector<32x1xf32>
    %187 = vector.broadcast %186 : vector<32x1xf32> to vector<32x32xf32>
    %188 = arith.mulf %183, %187 : vector<32x32xf32>
    %189 = vector.broadcast %5 : vector<1x32xf32> to vector<32x32xf32>
    %190 = arith.mulf %188, %189 : vector<32x32xf32>
    %191 = vector.broadcast %6 : vector<1x32xf32> to vector<32x32xf32>
    %192 = arith.addf %190, %191 : vector<32x32xf32>
    %193 = arith.truncf %192 : vector<32x32xf32> to vector<32x32xbf16>
    %cst_51 = arith.constant 0.000000e+00 : f32
    %194 = vector.broadcast %cst_51 : f32 to vector<32x32xf32>
    %c0_52 = arith.constant 0 : index
    %c0_53 = arith.constant 0 : index
    %195 = vector.load %arg3[%c0_52, %c0_53] : memref<32x2048xbf16, #tpu.memory_space<vmem>>, vector<32x512xbf16>
    %cst_54 = arith.constant dense<0.000000e+00> : vector<32x512xf32>
    %196 = tpu.matmul %193, %195, %cst_54 {dimension_numbers = #tpu.dot_dimension_numbers<[1], [0], [0], [1], [0, 0, 1, 1], [], []>} : vector<32x32xbf16>, vector<32x512xbf16>, vector<32x512xf32> -> vector<32x512xf32>
    %c0_55 = arith.constant 0 : index
    %c0_56 = arith.constant 0 : index
    %197 = vector.load %arg4[%c0_55, %c0_56] : memref<1x2048xf32, #tpu.memory_space<vmem>>, vector<1x512xf32>
    %198 = vector.broadcast %197 : vector<1x512xf32> to vector<32x512xf32>
    %199 = arith.addf %196, %198 : vector<32x512xf32>
    %cst_57 = arith.constant 0.000000e+00 : f32
    %200 = vector.broadcast %cst_57 : f32 to vector<32x512xf32>
    %201 = arith.maximumf %199, %200 : vector<32x512xf32>
    %202 = arith.truncf %201 : vector<32x512xf32> to vector<32x512xbf16>
    %c0_58 = arith.constant 0 : index
    %c0_59 = arith.constant 0 : index
    %203 = vector.load %arg5[%c0_58, %c0_59] : memref<2048x32xbf16, #tpu.memory_space<vmem>>, vector<512x32xbf16>
    %cst_60 = arith.constant dense<0.000000e+00> : vector<32x32xf32>
    %204 = tpu.matmul %202, %203, %cst_60 {dimension_numbers = #tpu.dot_dimension_numbers<[1], [0], [0], [1], [0, 0, 1, 1], [], []>} : vector<32x512xbf16>, vector<512x32xbf16>, vector<32x32xf32> -> vector<32x32xf32>
    %205 = arith.addf %194, %204 : vector<32x32xf32>
    %c0_61 = arith.constant 0 : index
    %c512 = arith.constant 512 : index
    %206 = vector.load %arg3[%c0_61, %c512] : memref<32x2048xbf16, #tpu.memory_space<vmem>>, vector<32x512xbf16>
    %cst_62 = arith.constant dense<0.000000e+00> : vector<32x512xf32>
    %207 = tpu.matmul %193, %206, %cst_62 {dimension_numbers = #tpu.dot_dimension_numbers<[1], [0], [0], [1], [0, 0, 1, 1], [], []>} : vector<32x32xbf16>, vector<32x512xbf16>, vector<32x512xf32> -> vector<32x512xf32>
    %c0_63 = arith.constant 0 : index
    %c512_64 = arith.constant 512 : index
    %208 = vector.load %arg4[%c0_63, %c512_64] : memref<1x2048xf32, #tpu.memory_space<vmem>>, vector<1x512xf32>
    %209 = vector.broadcast %208 : vector<1x512xf32> to vector<32x512xf32>
    %210 = arith.addf %207, %209 : vector<32x512xf32>
    %cst_65 = arith.constant 0.000000e+00 : f32
    %211 = vector.broadcast %cst_65 : f32 to vector<32x512xf32>
    %212 = arith.maximumf %210, %211 : vector<32x512xf32>
    %213 = arith.truncf %212 : vector<32x512xf32> to vector<32x512xbf16>
    %c512_66 = arith.constant 512 : index
    %c0_67 = arith.constant 0 : index
    %214 = vector.load %arg5[%c512_66, %c0_67] : memref<2048x32xbf16, #tpu.memory_space<vmem>>, vector<512x32xbf16>
    %cst_68 = arith.constant dense<0.000000e+00> : vector<32x32xf32>
    %215 = tpu.matmul %213, %214, %cst_68 {dimension_numbers = #tpu.dot_dimension_numbers<[1], [0], [0], [1], [0, 0, 1, 1], [], []>} : vector<32x512xbf16>, vector<512x32xbf16>, vector<32x32xf32> -> vector<32x32xf32>
    %216 = arith.addf %205, %215 : vector<32x32xf32>
    %c0_69 = arith.constant 0 : index
    %c1024 = arith.constant 1024 : index
    %217 = vector.load %arg3[%c0_69, %c1024] : memref<32x2048xbf16, #tpu.memory_space<vmem>>, vector<32x512xbf16>
    %cst_70 = arith.constant dense<0.000000e+00> : vector<32x512xf32>
    %218 = tpu.matmul %193, %217, %cst_70 {dimension_numbers = #tpu.dot_dimension_numbers<[1], [0], [0], [1], [0, 0, 1, 1], [], []>} : vector<32x32xbf16>, vector<32x512xbf16>, vector<32x512xf32> -> vector<32x512xf32>
    %c0_71 = arith.constant 0 : index
    %c1024_72 = arith.constant 1024 : index
    %219 = vector.load %arg4[%c0_71, %c1024_72] : memref<1x2048xf32, #tpu.memory_space<vmem>>, vector<1x512xf32>
    %220 = vector.broadcast %219 : vector<1x512xf32> to vector<32x512xf32>
    %221 = arith.addf %218, %220 : vector<32x512xf32>
    %cst_73 = arith.constant 0.000000e+00 : f32
    %222 = vector.broadcast %cst_73 : f32 to vector<32x512xf32>
    %223 = arith.maximumf %221, %222 : vector<32x512xf32>
    %224 = arith.truncf %223 : vector<32x512xf32> to vector<32x512xbf16>
    %c1024_74 = arith.constant 1024 : index
    %c0_75 = arith.constant 0 : index
    %225 = vector.load %arg5[%c1024_74, %c0_75] : memref<2048x32xbf16, #tpu.memory_space<vmem>>, vector<512x32xbf16>
    %cst_76 = arith.constant dense<0.000000e+00> : vector<32x32xf32>
    %226 = tpu.matmul %224, %225, %cst_76 {dimension_numbers = #tpu.dot_dimension_numbers<[1], [0], [0], [1], [0, 0, 1, 1], [], []>} : vector<32x512xbf16>, vector<512x32xbf16>, vector<32x32xf32> -> vector<32x32xf32>
    %227 = arith.addf %216, %226 : vector<32x32xf32>
    %c0_77 = arith.constant 0 : index
    %c1536 = arith.constant 1536 : index
    %228 = vector.load %arg3[%c0_77, %c1536] : memref<32x2048xbf16, #tpu.memory_space<vmem>>, vector<32x512xbf16>
    %cst_78 = arith.constant dense<0.000000e+00> : vector<32x512xf32>
    %229 = tpu.matmul %193, %228, %cst_78 {dimension_numbers = #tpu.dot_dimension_numbers<[1], [0], [0], [1], [0, 0, 1, 1], [], []>} : vector<32x32xbf16>, vector<32x512xbf16>, vector<32x512xf32> -> vector<32x512xf32>
    %c0_79 = arith.constant 0 : index
    %c1536_80 = arith.constant 1536 : index
    %230 = vector.load %arg4[%c0_79, %c1536_80] : memref<1x2048xf32, #tpu.memory_space<vmem>>, vector<1x512xf32>
    %231 = vector.broadcast %230 : vector<1x512xf32> to vector<32x512xf32>
    %232 = arith.addf %229, %231 : vector<32x512xf32>
    %cst_81 = arith.constant 0.000000e+00 : f32
    %233 = vector.broadcast %cst_81 : f32 to vector<32x512xf32>
    %234 = arith.maximumf %232, %233 : vector<32x512xf32>
    %235 = arith.truncf %234 : vector<32x512xf32> to vector<32x512xbf16>
    %c1536_82 = arith.constant 1536 : index
    %c0_83 = arith.constant 0 : index
    %236 = vector.load %arg5[%c1536_82, %c0_83] : memref<2048x32xbf16, #tpu.memory_space<vmem>>, vector<512x32xbf16>
    %cst_84 = arith.constant dense<0.000000e+00> : vector<32x32xf32>
    %237 = tpu.matmul %235, %236, %cst_84 {dimension_numbers = #tpu.dot_dimension_numbers<[1], [0], [0], [1], [0, 0, 1, 1], [], []>} : vector<32x512xbf16>, vector<512x32xbf16>, vector<32x32xf32> -> vector<32x32xf32>
    %238 = arith.addf %227, %237 : vector<32x32xf32>
    %239 = arith.addf %192, %238 : vector<32x32xf32>
    %240 = vector.broadcast %9 : vector<1x32xf32> to vector<32x32xf32>
    %241 = arith.addf %239, %240 : vector<32x32xf32>
    %cst_85 = arith.constant dense<0.000000e+00> : vector<32xf32>
    %242 = vector.multi_reduction <add>, %241, %cst_85 [1] : vector<32x32xf32> to vector<32xf32>
    %243 = vector.shape_cast %242 : vector<32xf32> to vector<32x1xf32>
    %cst_86 = arith.constant 3.200000e+01 : f32
    %244 = vector.broadcast %cst_86 : f32 to vector<32x1xf32>
    %245 = arith.divf %243, %244 : vector<32x1xf32>
    %246 = vector.broadcast %245 : vector<32x1xf32> to vector<32x32xf32>
    %247 = arith.subf %241, %246 : vector<32x32xf32>
    %248 = arith.mulf %247, %247 : vector<32x32xf32>
    %cst_87 = arith.constant dense<0.000000e+00> : vector<32xf32>
    %249 = vector.multi_reduction <add>, %248, %cst_87 [1] : vector<32x32xf32> to vector<32xf32>
    %250 = vector.shape_cast %249 : vector<32xf32> to vector<32x1xf32>
    %cst_88 = arith.constant 3.200000e+01 : f32
    %251 = vector.broadcast %cst_88 : f32 to vector<32x1xf32>
    %252 = arith.divf %250, %251 : vector<32x1xf32>
    %253 = vector.broadcast %245 : vector<32x1xf32> to vector<32x32xf32>
    %254 = arith.subf %241, %253 : vector<32x32xf32>
    %cst_89 = arith.constant 9.99999974E-6 : f32
    %255 = vector.broadcast %cst_89 : f32 to vector<32x1xf32>
    %256 = arith.addf %252, %255 : vector<32x1xf32>
    %257 = math.rsqrt %256 : vector<32x1xf32>
    %258 = vector.broadcast %257 : vector<32x1xf32> to vector<32x32xf32>
    %259 = arith.mulf %254, %258 : vector<32x32xf32>
    %260 = vector.broadcast %7 : vector<1x32xf32> to vector<32x32xf32>
    %261 = arith.mulf %259, %260 : vector<32x32xf32>
    %262 = vector.broadcast %8 : vector<1x32xf32> to vector<32x32xf32>
    %263 = arith.addf %261, %262 : vector<32x32xf32>
    %264 = vector.broadcast %10 : vector<1x32xf32> to vector<32x32xf32>
    %265 = arith.mulf %263, %264 : vector<32x32xf32>
    %cst_90 = arith.constant dense<0.000000e+00> : vector<32xf32>
    %266 = vector.multi_reduction <add>, %265, %cst_90 [1] : vector<32x32xf32> to vector<32xf32>
    %267 = vector.shape_cast %266 : vector<32xf32> to vector<32x1xf32>
    %268 = vector.broadcast %11 : vector<1x1xf32> to vector<32x1xf32>
    %269 = arith.addf %267, %268 : vector<32x1xf32>
    %c0_91 = arith.constant 0 : index
    %c0_92 = arith.constant 0 : index
    %270 = vector.load %arg7[%c0_91, %c0_92] : memref<17x2xf32, #tpu.memory_space<vmem>>, vector<16x2xf32>
    %cst_93 = arith.constant dense<0.000000e+00> : vector<32x2xf32>
    %271 = tpu.matmul %100, %270, %cst_93 {dimension_numbers = #tpu.dot_dimension_numbers<[1], [0], [0], [1], [0, 0, 1, 1], [], []>} : vector<32x16xf32>, vector<16x2xf32>, vector<32x2xf32> -> vector<32x2xf32>
    %272 = vector.broadcast %269 : vector<32x1xf32> to vector<32x2xf32>
    %273 = arith.mulf %272, %271 : vector<32x2xf32>
    %cst_94 = arith.constant dense<0.000000e+00> : vector<2x2xf32>
    %274 = tpu.matmul %144, %273, %cst_94 {dimension_numbers = #tpu.dot_dimension_numbers<[1], [0], [0], [1], [0, 0, 1, 1], [], []>} : vector<2x32xf32>, vector<32x2xf32>, vector<2x2xf32> -> vector<2x2xf32>
    %c16 = arith.constant 16 : index
    %c0_95 = arith.constant 0 : index
    %275 = vector.load %arg7[%c16, %c0_95] : memref<17x2xf32, #tpu.memory_space<vmem>>, vector<1x2xf32>
    %276 = vector.broadcast %275 : vector<1x2xf32> to vector<2x2xf32>
    %277 = arith.addf %274, %276 : vector<2x2xf32>
    %c0_96 = arith.constant 0 : index
    %c0_97 = arith.constant 0 : index
    %278 = vector.load %arg8[%c0_96, %c0_97] : memref<2x2xf32, #tpu.memory_space<vmem>>, vector<2x2xf32>
    tpu.vector_store %arg8[%c0_96, %c0_97], %277 {strides = array<i32>} : memref<2x2xf32, #tpu.memory_space<vmem>>, vector<2x2xf32>,
    return
  }
}

</mosaic_0001>

<llo_original>
// kernel: custom_model_forward.1
$region0: #{custom_model_forward.1}
  #allocation0 [shape = 'u32[]', space=smem, size = 0x4, offset = 0x4, fixed_abs, tag = 'smem constant byte address 0x4 - core index']
  #allocation1 [shape = 'u32[144,128]{1,0:T(1,128)}', space=vmem, size = 0x12000, scoped, tag = 'internal scratch']
  %s0 = inlined_call_operand.vmem [shape: f32[32,32], index: 0, kind: input, shape index: {}]
  %s1 = inlined_call_operand.vmem [shape: bf16[32,96], index: 1, kind: input, shape index: {}]
  %s2 = inlined_call_operand.vmem [shape: bf16[32,32], index: 2, kind: input, shape index: {}]
  %s3 = inlined_call_operand.vmem [shape: bf16[32,2048], index: 3, kind: input, shape index: {}]
  %s4 = inlined_call_operand.vmem [shape: f32[1,2048], index: 4, kind: input, shape index: {}]
  %s5 = inlined_call_operand.vmem [shape: bf16[2048,32], index: 5, kind: input, shape index: {}]
  %s6 = inlined_call_operand.vmem [shape: f32[11,32], index: 6, kind: input, shape index: {}]
  %s7 = inlined_call_operand.vmem [shape: f32[17,2], index: 7, kind: input, shape index: {}]
  %s8 = inlined_call_operand.hbm [shape: f32[2,2], index: 8, kind: output, shape index: {}]
  %s9 = sld [smem:[#allocation0]]
  $region42: #{custom_model_forward.1} parent=0
    _
  %s11 = ssub.s32 1, %s9
  %s12 = scalar_select 0, %s11, %s9
  $region1: #{custom_model_forward.1} parent=0
    #allocation2 [shape = 'u8[1024]{0}', space=vmem, size = 0x400, scoped, tag = 'output window, operand 0, single buffered']
    #allocation3 [shape = 's32[1]{0}', space=sflag, size = 0x4, scoped, tag = 'scoped memory for custom_model_forward.1']
    %13 = vsyncpa [#allocation3], 0
    // Predicated region
    $region2: #{custom_model_forward.1} parent=1 // pred_check
      _
    $region3: #{custom_model_forward.1} parent=1 // pred_check_branch
      %15 = sbr.rel (0) target = $region5
    $region4: #{custom_model_forward.1} parent=1 // pred_region
      _
    $region5: #{custom_model_forward.1} parent=1 // pred_fallthru
      _
    // Predicated region
    $region6: #{custom_model_forward.1} parent=1 // pred_check
      _
    $region7: #{custom_model_forward.1} parent=1 // pred_check_branch
      %17 = sbr.rel (0) target = $region9
    $region8: #{custom_model_forward.1} parent=1 // pred_region
      _
    $region9: #{custom_model_forward.1} parent=1 // pred_fallthru
      _
    // Predicated region
    $region10: #{custom_model_forward.1} parent=1 // pred_check
      _
    $region11: #{custom_model_forward.1} parent=1 // pred_check_branch
      %19 = sbr.rel (0) target = $region13
    $region12: #{custom_model_forward.1} parent=1 // pred_region
      _
    $region13: #{custom_model_forward.1} parent=1 // pred_fallthru
      _
    // Predicated region
    $region14: #{custom_model_forward.1} parent=1 // pred_check
      _
    $region15: #{custom_model_forward.1} parent=1 // pred_check_branch
      %21 = sbr.rel (0) target = $region17
    $region16: #{custom_model_forward.1} parent=1 // pred_region
      _
    $region17: #{custom_model_forward.1} parent=1 // pred_fallthru
      _
    // Predicated region
    $region18: #{custom_model_forward.1} parent=1 // pred_check
      _
    $region19: #{custom_model_forward.1} parent=1 // pred_check_branch
      %23 = sbr.rel (0) target = $region21
    $region20: #{custom_model_forward.1} parent=1 // pred_region
      _
    $region21: #{custom_model_forward.1} parent=1 // pred_fallthru
      _
    // Predicated region
    $region22: #{custom_model_forward.1} parent=1 // pred_check
      _
    $region23: #{custom_model_forward.1} parent=1 // pred_check_branch
      %25 = sbr.rel (0) target = $region25
    $region24: #{custom_model_forward.1} parent=1 // pred_region
      _
    $region25: #{custom_model_forward.1} parent=1 // pred_fallthru
      _
    // Predicated region
    $region26: #{custom_model_forward.1} parent=1 // pred_check
      _
    $region27: #{custom_model_forward.1} parent=1 // pred_check_branch
      %27 = sbr.rel (0) target = $region29
    $region28: #{custom_model_forward.1} parent=1 // pred_region
      _
    $region29: #{custom_model_forward.1} parent=1 // pred_fallthru
      _
    // Predicated region
    $region30: #{custom_model_forward.1} parent=1 // pred_check
      _
    $region31: #{custom_model_forward.1} parent=1 // pred_check_branch
      %29 = sbr.rel (0) target = $region33
    $region32: #{custom_model_forward.1} parent=1 // pred_region
      _
    $region33: #{custom_model_forward.1} parent=1 // pred_fallthru
      _
    %v31 = vld [vmem:[%s0] sm:$0xff]
    %v32 = vld [vmem:[%s0 + $0x8] sm:$0xff]
    %v33 = vld [vmem:[%s0 + $0x10] sm:$0xff]
    %v34 = vld [vmem:[%s0 + $0x18] sm:$0xff]
    %v35 = vld [vmem:[%s6] sm:$0x1]
    %v36 = vld [vmem:[%s6 + $0x1] sm:$0x1]
    %v37 = vld [vmem:[%s6 + $0x2] sm:$0x1]
    %v38 = vld [vmem:[%s6 + $0x3] sm:$0x1]
    %v39 = vld [vmem:[%s6 + $0x4] sm:$0x1]
    %v40 = vld [vmem:[%s6 + $0x5] sm:$0x1]
    %v41 = vld [vmem:[%s6 + $0x6] sm:$0x1]
    %v42 = vld [vmem:[%s6 + $0x7] sm:$0x1]
    %v43 = vld [vmem:[%s6 + $0x8] sm:$0x1]
    %v44 = vld [vmem:[%s6 + $0x9] sm:$0x1]
    %v45 = vld [vmem:[%s6 + $0xa] sm:$0x1]
    %v46 = vpack.c.bf16 %v32, %v31
    %v47 = vpack.c.bf16 %v34, %v33
    %v48 = vld [vmem:[%s1] sm:$0xf]
    %v49 = vld [vmem:[%s1 + $0x4] sm:$0xf]
    %v50 = vld [vmem:[%s1 + $0x8] sm:$0xf]
    %v51 = vld [vmem:[%s1 + $0xc] sm:$0xf]
    %v56 = vunpack.c.l.b16 %v48
    %v57 = vunpack.c.l.b16 %v49
    %v58 = vunpack.c.l.b16 %v50
    %v59 = vunpack.c.l.b16 %v51
    %v60 = vpack.c.b16 %v57, %v56
    %v61 = vpack.c.b16 %v59, %v58
    %vm64 = vcmask 261120
    %v66 = vsel %vm64, %v46, 0
    %v69 = vsel %vm64, %v47, 0
    %71 = vmatprep.subr.bf16.mxu0 0
    %72 = vmatpush1.bf16.msra.mxu0 %v60
    %73 = vmatprep.subr.bf16.mxu0 0
    %74 = vmatpush1.bf16.msra.mxu0 %v61
    %75 = vmatprep.subr.bf16.mxu0 0
    %76 = vmatpush1.bf16.msra.mxu0 0
    %77 = vmatprep.subr.bf16.mxu0 0
    %78 = vmatpush1.bf16.msra.mxu0 0
    %79 = vmatprep.subr.bf16.mxu0 0
    %80 = vmatpush1.bf16.msra.mxu0 0
    %81 = vmatprep.subr.bf16.mxu0 0
    %82 = vmatpush1.bf16.msra.mxu0 0
    %83 = vmatprep.subr.bf16.mxu0 0
    %84 = vmatpush1.bf16.msra.mxu0 0
    %85 = vmatprep.subr.bf16.mxu0 0
    %86 = vmatpush1.bf16.msra.mxu0 0
    %87 = vmatprep.subr.bf16.mxu0 0
    %88 = vmatpush1.bf16.msra.mxu0 0
    %89 = vmatprep.subr.bf16.mxu0 0
    %90 = vmatpush1.bf16.msra.mxu0 0
    %91 = vmatprep.subr.bf16.mxu0 0
    %92 = vmatpush1.bf16.msra.mxu0 0
    %93 = vmatprep.subr.bf16.mxu0 0
    %94 = vmatpush1.bf16.msra.mxu0 0
    %95 = vmatprep.subr.bf16.mxu0 0
    %96 = vmatpush1.bf16.msra.mxu0 0
    %97 = vmatprep.subr.bf16.mxu0 0
    %98 = vmatpush1.bf16.msra.mxu0 0
    %99 = vmatprep.subr.bf16.mxu0 0
    %100 = vmatpush1.bf16.msra.mxu0 0
    %101 = vmatprep.subr.bf16.mxu0 0
    %102 = vmatpush1.bf16.msra.mxu0 0
    %103 = vmatprep.mubr.bf16.mxu0 0
    %104 = vmatmul.mubr.bf16.gmra.mrb[0].mxu0 %v66
    %v105 = vpop.f32.mrb[0].mxu0
    %v106 = vadd.f32 0.0, %v105
    %v107 = vpop.f32.mrb[0].mxu0
    %v108 = vpop.f32.mrb[0].mxu0
    %v109 = vadd.f32 0.0, %v108
    %v110 = vpop.f32.mrb[0].mxu0
    %111 = vmatprep.mubr.bf16.mxu0 0
    %112 = vmatmul.mubr.bf16.gmra.mrb[0].mxu0 %v69
    %v113 = vpop.f32.mrb[0].mxu0
    %v114 = vadd.f32 0.0, %v113
    %v115 = vpop.f32.mrb[0].mxu0
    %v116 = vpop.f32.mrb[0].mxu0
    %v117 = vadd.f32 0.0, %v116
    %v118 = vpop.f32.mrb[0].mxu0
    %119 = vdwg.mxu0
    %v120 = vlaneseq
    %v121 = vshrl.u32 %v120, 7
    %v122 = vsub.s32 0, %v121
    %v123 = vrot.slane %v35, %v122
    %v124 = vadd.f32 %v106, %v123
    %v125 = vadd.f32 %v109, %v123
    %v126 = vadd.f32 %v114, %v123
    %v127 = vadd.f32 %v117, %v123
    %v128 = vlaneseq
    %v129 = vshrl.u32 %v128, 7
    %v130 = vsub.s32 0, %v129
    %v131 = vrot.slane %v36, %v130
    %133 = vrot.lane.b32.xlu0 %v131, 32
    %v134 = vpop.permute.xlu0 %133
    %v136 = vadd.f32 %v106, %v134
    %v137 = vadd.f32 %v109, %v134
    %v138 = vadd.f32 %v114, %v134
    %v139 = vadd.f32 %v117, %v134
    %v140 = vlaneseq
    %v141 = vshrl.u32 %v140, 7
    %v142 = vsub.s32 0, %v141
    %v143 = vrot.slane %v37, %v142
    %145 = vrot.lane.b32.xlu0 %v143, 64
    %v146 = vpop.permute.xlu0 %145
    %v148 = vadd.f32 %v106, %v146
    %v149 = vadd.f32 %v109, %v146
    %v150 = vadd.f32 %v114, %v146
    %v151 = vadd.f32 %v117, %v146
    %v152 = vlaneseq
    %v153 = vand.u32 %v152, 127
    %v154 = vcvt.s32.f32 %v153
    %v155 = vlaneseq
    %v156 = vshrl.u32 %v155, 7
    %v157 = vadd.s32 %v156, 8
    %v158 = vcvt.s32.f32 %v156
    %v159 = vcvt.s32.f32 %v157
    %v160 = vadd.s32 %v156, 16
    %v161 = vadd.s32 %v156, 24
    %v162 = vadd.s32 %v156, 32
    %v163 = vadd.s32 %v156, 40
    %v164 = vadd.s32 %v156, 48
    %v165 = vadd.s32 %v156, 56
    %v166 = vadd.s32 %v156, 64
    %v167 = vadd.s32 %v156, 72
    %v168 = vadd.s32 %v156, 80
    %v169 = vadd.s32 %v156, 88
    %v170 = vadd.s32 %v156, 96
    %v171 = vadd.s32 %v156, 104
    %v172 = vadd.s32 %v156, 112
    %v173 = vadd.s32 %v156, 120
    %v174 = vadd.s32 %v156, 128
    %v175 = vadd.s32 %v156, 136
    %v176 = vadd.s32 %v156, 144
    %v177 = vadd.s32 %v156, 152
    %v178 = vadd.s32 %v156, 160
    %v179 = vadd.s32 %v156, 168
    %v180 = vadd.s32 %v156, 176
    %v181 = vadd.s32 %v156, 184
    %v182 = vadd.s32 %v156, 192
    %v183 = vadd.s32 %v156, 200
    %v184 = vadd.s32 %v156, 208
    %v185 = vadd.s32 %v156, 216
    %v186 = vadd.s32 %v156, 224
    %v187 = vadd.s32 %v156, 232
    %v188 = vadd.s32 %v156, 240
    %v189 = vadd.s32 %v156, 248
    %v190 = vcvt.s32.f32 %v160
    %v191 = vcvt.s32.f32 %v161
    %v192 = vcvt.s32.f32 %v162
    %v193 = vcvt.s32.f32 %v163
    %v194 = vcvt.s32.f32 %v164
    %v195 = vcvt.s32.f32 %v165
    %v196 = vcvt.s32.f32 %v166
    %v197 = vcvt.s32.f32 %v167
    %v198 = vcvt.s32.f32 %v168
    %v199 = vcvt.s32.f32 %v169
    %v200 = vcvt.s32.f32 %v170
    %v201 = vcvt.s32.f32 %v171
    %v202 = vcvt.s32.f32 %v172
    %v203 = vcvt.s32.f32 %v173
    %v204 = vcvt.s32.f32 %v174
    %v205 = vcvt.s32.f32 %v175
    %v206 = vcvt.s32.f32 %v176
    %v207 = vcvt.s32.f32 %v177
    %v208 = vcvt.s32.f32 %v178
    %v209 = vcvt.s32.f32 %v179
    %v210 = vcvt.s32.f32 %v180
    %v211 = vcvt.s32.f32 %v181
    %v212 = vcvt.s32.f32 %v182
    %v213 = vcvt.s32.f32 %v183
    %v214 = vcvt.s32.f32 %v184
    %v215 = vcvt.s32.f32 %v185
    %v216 = vcvt.s32.f32 %v186
    %v217 = vcvt.s32.f32 %v187
    %v218 = vcvt.s32.f32 %v188
    %v219 = vcvt.s32.f32 %v189
    %v220 = vmul.u32 %v153, 8
    %vm221 = vcmp.ge.s32.totalorder %v156, %v220
    %vm222 = vcmp.ge.s32.totalorder %v157, %v220
    %vm223 = vcmp.ge.s32.totalorder %v160, %v220
    %vm224 = vcmp.ge.s32.totalorder %v161, %v220
    %vm225 = vcmp.ge.s32.totalorder %v162, %v220
    %vm226 = vcmp.ge.s32.totalorder %v163, %v220
    %vm227 = vcmp.ge.s32.totalorder %v164, %v220
    %vm228 = vcmp.ge.s32.totalorder %v165, %v220
    %vm229 = vcmp.ge.s32.totalorder %v166, %v220
    %vm230 = vcmp.ge.s32.totalorder %v167, %v220
    %vm231 = vcmp.ge.s32.totalorder %v168, %v220
    %vm232 = vcmp.ge.s32.totalorder %v169, %v220
    %vm233 = vcmp.ge.s32.totalorder %v170, %v220
    %vm234 = vcmp.ge.s32.totalorder %v171, %v220
    %vm235 = vcmp.ge.s32.totalorder %v172, %v220
    %vm236 = vcmp.ge.s32.totalorder %v173, %v220
    %vm237 = vcmp.ge.s32.totalorder %v174, %v220
    %vm238 = vcmp.ge.s32.totalorder %v175, %v220
    %vm239 = vcmp.ge.s32.totalorder %v176, %v220
    %vm240 = vcmp.ge.s32.totalorder %v177, %v220
    %vm241 = vcmp.ge.s32.totalorder %v178, %v220
    %vm242 = vcmp.ge.s32.totalorder %v179, %v220
    %vm243 = vcmp.ge.s32.totalorder %v180, %v220
    %vm244 = vcmp.ge.s32.totalorder %v181, %v220
    %vm245 = vcmp.ge.s32.totalorder %v182, %v220
    %vm246 = vcmp.ge.s32.totalorder %v183, %v220
    %vm247 = vcmp.ge.s32.totalorder %v184, %v220
    %vm248 = vcmp.ge.s32.totalorder %v185, %v220
    %vm249 = vcmp.ge.s32.totalorder %v186, %v220
    %vm250 = vcmp.ge.s32.totalorder %v187, %v220
    %vm251 = vcmp.ge.s32.totalorder %v188, %v220
    %vm252 = vcmp.ge.s32.totalorder %v189, %v220
    %v253 = vadd.s32 %v153, 1
    %v254 = vmul.u32 %v253, 8
    %vm255 = vcmp.lt.s32.totalorder %v156, %v254
    %vm256 = vcmp.lt.s32.totalorder %v157, %v254
    %vm257 = vcmp.lt.s32.totalorder %v160, %v254
    %vm258 = vcmp.lt.s32.totalorder %v161, %v254
    %vm259 = vcmp.lt.s32.totalorder %v162, %v254
    %vm260 = vcmp.lt.s32.totalorder %v163, %v254
    %vm261 = vcmp.lt.s32.totalorder %v164, %v254
    %vm262 = vcmp.lt.s32.totalorder %v165, %v254
    %vm263 = vcmp.lt.s32.totalorder %v166, %v254
    %vm264 = vcmp.lt.s32.totalorder %v167, %v254
    %vm265 = vcmp.lt.s32.totalorder %v168, %v254
    %vm266 = vcmp.lt.s32.totalorder %v169, %v254
    %vm267 = vcmp.lt.s32.totalorder %v170, %v254
    %vm268 = vcmp.lt.s32.totalorder %v171, %v254
    %vm269 = vcmp.lt.s32.totalorder %v172, %v254
    %vm270 = vcmp.lt.s32.totalorder %v173, %v254
    %vm271 = vcmp.lt.s32.totalorder %v174, %v254
    %vm272 = vcmp.lt.s32.totalorder %v175, %v254
    %vm273 = vcmp.lt.s32.totalorder %v176, %v254
    %vm274 = vcmp.lt.s32.totalorder %v177, %v254
    %vm275 = vcmp.lt.s32.totalorder %v178, %v254
    %vm276 = vcmp.lt.s32.totalorder %v179, %v254
    %vm277 = vcmp.lt.s32.totalorder %v180, %v254
    %vm278 = vcmp.lt.s32.totalorder %v181, %v254
    %vm279 = vcmp.lt.s32.totalorder %v182, %v254
    %vm280 = vcmp.lt.s32.totalorder %v183, %v254
    %vm281 = vcmp.lt.s32.totalorder %v184, %v254
    %vm282 = vcmp.lt.s32.totalorder %v185, %v254
    %vm283 = vcmp.lt.s32.totalorder %v186, %v254
    %vm284 = vcmp.lt.s32.totalorder %v187, %v254
    %vm285 = vcmp.lt.s32.totalorder %v188, %v254
    %vm286 = vcmp.lt.s32.totalorder %v189, %v254
    %vm287 = vmand %vm221, %vm255
    %vm288 = vmand %vm222, %vm256
    %vm289 = vmand %vm223, %vm257
    %vm290 = vmand %vm224, %vm258
    %vm291 = vmand %vm225, %vm259
    %vm292 = vmand %vm226, %vm260
    %vm293 = vmand %vm227, %vm261
    %vm294 = vmand %vm228, %vm262
    %vm295 = vmand %vm229, %vm263
    %vm296 = vmand %vm230, %vm264
    %vm297 = vmand %vm231, %vm265
    %vm298 = vmand %vm232, %vm266
    %vm299 = vmand %vm233, %vm267
    %vm300 = vmand %vm234, %vm268
    %vm301 = vmand %vm235, %vm269
    %vm302 = vmand %vm236, %vm270
    %vm303 = vmand %vm237, %vm271
    %vm304 = vmand %vm238, %vm272
    %vm305 = vmand %vm239, %vm273
    %vm306 = vmand %vm240, %vm274
    %vm307 = vmand %vm241, %vm275
    %vm308 = vmand %vm242, %vm276
    %vm309 = vmand %vm243, %vm277
    %vm310 = vmand %vm244, %vm278
    %vm311 = vmand %vm245, %vm279
    %vm312 = vmand %vm246, %vm280
    %vm313 = vmand %vm247, %vm281
    %vm314 = vmand %vm248, %vm282
    %vm315 = vmand %vm249, %vm283
    %vm316 = vmand %vm250, %vm284
    %vm317 = vmand %vm251, %vm285
    %vm318 = vmand %vm252, %vm286
    %v319 = vsel %vm287, 1, 0
    %v320 = vsel %vm288, 1, 0
    %v321 = vsel %vm289, 1, 0
    %v322 = vsel %vm290, 1, 0
    %v323 = vsel %vm291, 1, 0
    %v324 = vsel %vm292, 1, 0
    %v325 = vsel %vm293, 1, 0
    %v326 = vsel %vm294, 1, 0
    %v327 = vsel %vm295, 1, 0
    %v328 = vsel %vm296, 1, 0
    %v329 = vsel %vm297, 1, 0
    %v330 = vsel %vm298, 1, 0
    %v331 = vsel %vm299, 1, 0
    %v332 = vsel %vm300, 1, 0
    %v333 = vsel %vm301, 1, 0
    %v334 = vsel %vm302, 1, 0
    %v335 = vsel %vm303, 1, 0
    %v336 = vsel %vm304, 1, 0
    %v337 = vsel %vm305, 1, 0
    %v338 = vsel %vm306, 1, 0
    %v339 = vsel %vm307, 1, 0
    %v340 = vsel %vm308, 1, 0
    %v341 = vsel %vm309, 1, 0
    %v342 = vsel %vm310, 1, 0
    %v343 = vsel %vm311, 1, 0
    %v344 = vsel %vm312, 1, 0
    %v345 = vsel %vm313, 1, 0
    %v346 = vsel %vm314, 1, 0
    %v347 = vsel %vm315, 1, 0
    %v348 = vsel %vm316, 1, 0
    %v349 = vsel %vm317, 1, 0
    %v350 = vsel %vm318, 1, 0
    %v351 = vcvt.s32.f32 %v319
    %v352 = vcvt.s32.f32 %v320
    %v353 = vcvt.s32.f32 %v321
    %v354 = vcvt.s32.f32 %v322
    %v355 = vcvt.s32.f32 %v323
    %v356 = vcvt.s32.f32 %v324
    %v357 = vcvt.s32.f32 %v325
    %v358 = vcvt.s32.f32 %v326
    %v359 = vcvt.s32.f32 %v327
    %v360 = vcvt.s32.f32 %v328
    %v361 = vcvt.s32.f32 %v329
    %v362 = vcvt.s32.f32 %v330
    %v363 = vcvt.s32.f32 %v331
    %v364 = vcvt.s32.f32 %v332
    %v365 = vcvt.s32.f32 %v333
    %v366 = vcvt.s32.f32 %v334
    %v367 = vcvt.s32.f32 %v335
    %v368 = vcvt.s32.f32 %v336
    %v369 = vcvt.s32.f32 %v337
    %v370 = vcvt.s32.f32 %v338
    %v371 = vcvt.s32.f32 %v339
    %v372 = vcvt.s32.f32 %v340
    %v373 = vcvt.s32.f32 %v341
    %v374 = vcvt.s32.f32 %v342
    %v375 = vcvt.s32.f32 %v343
    %v376 = vcvt.s32.f32 %v344
    %v377 = vcvt.s32.f32 %v345
    %v378 = vcvt.s32.f32 %v346
    %v379 = vcvt.s32.f32 %v347
    %v380 = vcvt.s32.f32 %v348
    %v381 = vcvt.s32.f32 %v349
    %v382 = vcvt.s32.f32 %v350
    %v383 = vadd.s32 %v153, 128
    %v384 = vmul.u32 %v156, 8
    %v385 = vmul.u32 %v157, 8
    %v386 = vmul.u32 %v160, 8
    %v387 = vmul.u32 %v161, 8
    %vm388 = vcmp.ge.s32.totalorder %v153, %v384
    %vm389 = vcmp.ge.s32.totalorder %v383, %v384
    %vm390 = vcmp.ge.s32.totalorder %v153, %v385
    %vm391 = vcmp.ge.s32.totalorder %v383, %v385
    %vm392 = vcmp.ge.s32.totalorder %v153, %v386
    %vm393 = vcmp.ge.s32.totalorder %v383, %v386
    %vm394 = vcmp.ge.s32.totalorder %v153, %v387
    %vm395 = vcmp.ge.s32.totalorder %v383, %v387
    %v396 = vadd.s32 %v156, 1
    %v397 = vadd.s32 %v157, 1
    %v398 = vadd.s32 %v160, 1
    %v399 = vadd.s32 %v161, 1
    %v400 = vmul.u32 %v396, 8
    %v401 = vmul.u32 %v397, 8
    %v402 = vmul.u32 %v398, 8
    %v403 = vmul.u32 %v399, 8
    %vm404 = vcmp.lt.s32.totalorder %v153, %v400
    %vm405 = vcmp.lt.s32.totalorder %v383, %v400
    %vm406 = vcmp.lt.s32.totalorder %v153, %v401
    %vm407 = vcmp.lt.s32.totalorder %v383, %v401
    %vm408 = vcmp.lt.s32.totalorder %v153, %v402
    %vm409 = vcmp.lt.s32.totalorder %v383, %v402
    %vm410 = vcmp.lt.s32.totalorder %v153, %v403
    %vm411 = vcmp.lt.s32.totalorder %v383, %v403
    %vm412 = vmand %vm388, %vm404
    %vm413 = vmand %vm389, %vm405
    %vm414 = vmand %vm390, %vm406
    %vm415 = vmand %vm391, %vm407
    %vm416 = vmand %vm392, %vm408
    %vm417 = vmand %vm393, %vm409
    %vm418 = vmand %vm394, %vm410
    %vm419 = vmand %vm395, %vm411
    %v420 = vsel %vm412, 1, 0
    %v421 = vsel %vm413, 1, 0
    %v422 = vsel %vm414, 1, 0
    %v423 = vsel %vm415, 1, 0
    %v424 = vsel %vm416, 1, 0
    %v425 = vsel %vm417, 1, 0
    %v426 = vsel %vm418, 1, 0
    %v427 = vsel %vm419, 1, 0
    %v428 = vcvt.s32.f32 %v420
    %v429 = vcvt.s32.f32 %v421
    %v430 = vcvt.s32.f32 %v422
    %v431 = vcvt.s32.f32 %v423
    %v432 = vcvt.s32.f32 %v424
    %v433 = vcvt.s32.f32 %v425
    %v434 = vcvt.s32.f32 %v426
    %v435 = vcvt.s32.f32 %v427
    %v436 = vmul.u32 %v153, 16
    %vm437 = vcmp.ge.s32.totalorder %v156, %v436
    %vm438 = vcmp.ge.s32.totalorder %v157, %v436
    %vm439 = vcmp.ge.s32.totalorder %v160, %v436
    %vm440 = vcmp.ge.s32.totalorder %v161, %v436
    %vm441 = vcmp.ge.s32.totalorder %v162, %v436
    %vm442 = vcmp.ge.s32.totalorder %v163, %v436
    %vm443 = vcmp.ge.s32.totalorder %v164, %v436
    %vm444 = vcmp.ge.s32.totalorder %v165, %v436
    %vm445 = vcmp.ge.s32.totalorder %v166, %v436
    %vm446 = vcmp.ge.s32.totalorder %v167, %v436
    %vm447 = vcmp.ge.s32.totalorder %v168, %v436
    %vm448 = vcmp.ge.s32.totalorder %v169, %v436
    %vm449 = vcmp.ge.s32.totalorder %v170, %v436
    %vm450 = vcmp.ge.s32.totalorder %v171, %v436
    %vm451 = vcmp.ge.s32.totalorder %v172, %v436
    %vm452 = vcmp.ge.s32.totalorder %v173, %v436
    %vm453 = vcmp.ge.s32.totalorder %v174, %v436
    %vm454 = vcmp.ge.s32.totalorder %v175, %v436
    %vm455 = vcmp.ge.s32.totalorder %v176, %v436
    %vm456 = vcmp.ge.s32.totalorder %v177, %v436
    %vm457 = vcmp.ge.s32.totalorder %v178, %v436
    %vm458 = vcmp.ge.s32.totalorder %v179, %v436
    %vm459 = vcmp.ge.s32.totalorder %v180, %v436
    %vm460 = vcmp.ge.s32.totalorder %v181, %v436
    %vm461 = vcmp.ge.s32.totalorder %v182, %v436
    %vm462 = vcmp.ge.s32.totalorder %v183, %v436
    %vm463 = vcmp.ge.s32.totalorder %v184, %v436
    %vm464 = vcmp.ge.s32.totalorder %v185, %v436
    %vm465 = vcmp.ge.s32.totalorder %v186, %v436
    %vm466 = vcmp.ge.s32.totalorder %v187, %v436
    %vm467 = vcmp.ge.s32.totalorder %v188, %v436
    %vm468 = vcmp.ge.s32.totalorder %v189, %v436
    %v469 = vmul.u32 %v253, 16
    %vm470 = vcmp.lt.s32.totalorder %v156, %v469
    %vm471 = vcmp.lt.s32.totalorder %v157, %v469
    %vm472 = vcmp.lt.s32.totalorder %v160, %v469
    %vm473 = vcmp.lt.s32.totalorder %v161, %v469
    %vm474 = vcmp.lt.s32.totalorder %v162, %v469
    %vm475 = vcmp.lt.s32.totalorder %v163, %v469
    %vm476 = vcmp.lt.s32.totalorder %v164, %v469
    %vm477 = vcmp.lt.s32.totalorder %v165, %v469
    %vm478 = vcmp.lt.s32.totalorder %v166, %v469
    %vm479 = vcmp.lt.s32.totalorder %v167, %v469
    %vm480 = vcmp.lt.s32.totalorder %v168, %v469
    %vm481 = vcmp.lt.s32.totalorder %v169, %v469
    %vm482 = vcmp.lt.s32.totalorder %v170, %v469
    %vm483 = vcmp.lt.s32.totalorder %v171, %v469
    %vm484 = vcmp.lt.s32.totalorder %v172, %v469
    %vm485 = vcmp.lt.s32.totalorder %v173, %v469
    %vm486 = vcmp.lt.s32.totalorder %v174, %v469
    %vm487 = vcmp.lt.s32.totalorder %v175, %v469
    %vm488 = vcmp.lt.s32.totalorder %v176, %v469
    %vm489 = vcmp.lt.s32.totalorder %v177, %v469
    %vm490 = vcmp.lt.s32.totalorder %v178, %v469
    %vm491 = vcmp.lt.s32.totalorder %v179, %v469
    %vm492 = vcmp.lt.s32.totalorder %v180, %v469
    %vm493 = vcmp.lt.s32.totalorder %v181, %v469
    %vm494 = vcmp.lt.s32.totalorder %v182, %v469
    %vm495 = vcmp.lt.s32.totalorder %v183, %v469
    %vm496 = vcmp.lt.s32.totalorder %v184, %v469
    %vm497 = vcmp.lt.s32.totalorder %v185, %v469
    %vm498 = vcmp.lt.s32.totalorder %v186, %v469
    %vm499 = vcmp.lt.s32.totalorder %v187, %v469
    %vm500 = vcmp.lt.s32.totalorder %v188, %v469
    %vm501 = vcmp.lt.s32.totalorder %v189, %v469
    %vm502 = vmand %vm437, %vm470
    %vm503 = vmand %vm438, %vm471
    %vm504 = vmand %vm439, %vm472
    %vm505 = vmand %vm440, %vm473
    %vm506 = vmand %vm441, %vm474
    %vm507 = vmand %vm442, %vm475
    %vm508 = vmand %vm443, %vm476
    %vm509 = vmand %vm444, %vm477
    %vm510 = vmand %vm445, %vm478
    %vm511 = vmand %vm446, %vm479
    %vm512 = vmand %vm447, %vm480
    %vm513 = vmand %vm448, %vm481
    %vm514 = vmand %vm449, %vm482
    %vm515 = vmand %vm450, %vm483
    %vm516 = vmand %vm451, %vm484
    %vm517 = vmand %vm452, %vm485
    %vm518 = vmand %vm453, %vm486
    %vm519 = vmand %vm454, %vm487
    %vm520 = vmand %vm455, %vm488
    %vm521 = vmand %vm456, %vm489
    %vm522 = vmand %vm457, %vm490
    %vm523 = vmand %vm458, %vm491
    %vm524 = vmand %vm459, %vm492
    %vm525 = vmand %vm460, %vm493
    %vm526 = vmand %vm461, %vm494
    %vm527 = vmand %vm462, %vm495
    %vm528 = vmand %vm463, %vm496
    %vm529 = vmand %vm464, %vm497
    %vm530 = vmand %vm465, %vm498
    %vm531 = vmand %vm466, %vm499
    %vm532 = vmand %vm467, %vm500
    %vm533 = vmand %vm468, %vm501
    %v534 = vsel %vm502, 1, 0
    %v535 = vsel %vm503, 1, 0
    %v536 = vsel %vm504, 1, 0
    %v537 = vsel %vm505, 1, 0
    %v538 = vsel %vm506, 1, 0
    %v539 = vsel %vm507, 1, 0
    %v540 = vsel %vm508, 1, 0
    %v541 = vsel %vm509, 1, 0
    %v542 = vsel %vm510, 1, 0
    %v543 = vsel %vm511, 1, 0
    %v544 = vsel %vm512, 1, 0
    %v545 = vsel %vm513, 1, 0
    %v546 = vsel %vm514, 1, 0
    %v547 = vsel %vm515, 1, 0
    %v548 = vsel %vm516, 1, 0
    %v549 = vsel %vm517, 1, 0
    %v550 = vsel %vm518, 1, 0
    %v551 = vsel %vm519, 1, 0
    %v552 = vsel %vm520, 1, 0
    %v553 = vsel %vm521, 1, 0
    %v554 = vsel %vm522, 1, 0
    %v555 = vsel %vm523, 1, 0
    %v556 = vsel %vm524, 1, 0
    %v557 = vsel %vm525, 1, 0
    %v558 = vsel %vm526, 1, 0
    %v559 = vsel %vm527, 1, 0
    %v560 = vsel %vm528, 1, 0
    %v561 = vsel %vm529, 1, 0
    %v562 = vsel %vm530, 1, 0
    %v563 = vsel %vm531, 1, 0
    %v564 = vsel %vm532, 1, 0
    %v565 = vsel %vm533, 1, 0
    %v566 = vcvt.s32.f32 %v534
    %v567 = vcvt.s32.f32 %v535
    %v568 = vcvt.s32.f32 %v536
    %v569 = vcvt.s32.f32 %v537
    %v570 = vcvt.s32.f32 %v538
    %v571 = vcvt.s32.f32 %v539
    %v572 = vcvt.s32.f32 %v540
    %v573 = vcvt.s32.f32 %v541
    %v574 = vcvt.s32.f32 %v542
    %v575 = vcvt.s32.f32 %v543
    %v576 = vcvt.s32.f32 %v544
    %v577 = vcvt.s32.f32 %v545
    %v578 = vcvt.s32.f32 %v546
    %v579 = vcvt.s32.f32 %v547
    %v580 = vcvt.s32.f32 %v548
    %v581 = vcvt.s32.f32 %v549
    %v582 = vcvt.s32.f32 %v550
    %v583 = vcvt.s32.f32 %v551
    %v584 = vcvt.s32.f32 %v552
    %v585 = vcvt.s32.f32 %v553
    %v586 = vcvt.s32.f32 %v554
    %v587 = vcvt.s32.f32 %v555
    %v588 = vcvt.s32.f32 %v556
    %v589 = vcvt.s32.f32 %v557
    %v590 = vcvt.s32.f32 %v558
    %v591 = vcvt.s32.f32 %v559
    %v592 = vcvt.s32.f32 %v560
    %v593 = vcvt.s32.f32 %v561
    %v594 = vcvt.s32.f32 %v562
    %v595 = vcvt.s32.f32 %v563
    %v596 = vcvt.s32.f32 %v564
    %v597 = vcvt.s32.f32 %v565
    %v598 = vmul.u32 %v156, 2
    %v599 = vmul.u32 %v157, 2
    %vm600 = vcmp.ge.s32.totalorder %v153, %v598
    %vm601 = vcmp.ge.s32.totalorder %v153, %v599
    %v602 = vmul.u32 %v396, 2
    %v603 = vmul.u32 %v397, 2
    %vm604 = vcmp.lt.s32.totalorder %v153, %v602
    %vm605 = vcmp.lt.s32.totalorder %v153, %v603
    %vm606 = vmand %vm600, %vm604
    %vm607 = vmand %vm601, %vm605
    %v608 = vsel %vm606, 1, 0
    %v609 = vsel %vm607, 1, 0
    %v610 = vcvt.s32.f32 %v608
    %v611 = vcvt.s32.f32 %v609
    %v612 = vmul.u32 %v153, 2
    %vm613 = vcmp.ge.s32.totalorder %v156, %v612
    %vm614 = vcmp.ge.s32.totalorder %v157, %v612
    %vm615 = vcmp.ge.s32.totalorder %v160, %v612
    %vm616 = vcmp.ge.s32.totalorder %v161, %v612
    %v617 = vmul.u32 %v253, 2
    %vm618 = vcmp.lt.s32.totalorder %v156, %v617
    %vm619 = vcmp.lt.s32.totalorder %v157, %v617
    %vm620 = vcmp.lt.s32.totalorder %v160, %v617
    %vm621 = vcmp.lt.s32.totalorder %v161, %v617
    %vm622 = vmand %vm613, %vm618
    %vm623 = vmand %vm614, %vm619
    %vm624 = vmand %vm615, %vm620
    %vm625 = vmand %vm616, %vm621
    %v626 = vsel %vm622, 1, 0
    %v627 = vsel %vm623, 1, 0
    %v628 = vsel %vm624, 1, 0
    %v629 = vsel %vm625, 1, 0
    %v630 = vcvt.s32.f32 %v626
    %v631 = vcvt.s32.f32 %v627
    %v632 = vcvt.s32.f32 %v628
    %v633 = vcvt.s32.f32 %v629
    %v634 = vmul.f32 %v351, %v154
    %v635 = vmul.f32 %v352, %v154
    %v636 = vmul.f32 %v353, %v154
    %v637 = vmul.f32 %v354, %v154
    %v638 = vmul.f32 %v355, %v154
    %v639 = vmul.f32 %v356, %v154
    %v640 = vmul.f32 %v357, %v154
    %v641 = vmul.f32 %v358, %v154
    %v642 = vmul.f32 %v359, %v154
    %v643 = vmul.f32 %v360, %v154
    %v644 = vmul.f32 %v361, %v154
    %v645 = vmul.f32 %v362, %v154
    %v646 = vmul.f32 %v363, %v154
    %v647 = vmul.f32 %v364, %v154
    %v648 = vmul.f32 %v365, %v154
    %v649 = vmul.f32 %v366, %v154
    %v650 = vmul.f32 %v367, %v154
    %v651 = vmul.f32 %v368, %v154
    %v652 = vmul.f32 %v369, %v154
    %v653 = vmul.f32 %v370, %v154
    %v654 = vmul.f32 %v371, %v154
    %v655 = vmul.f32 %v372, %v154
    %v656 = vmul.f32 %v373, %v154
    %v657 = vmul.f32 %v374, %v154
    %v658 = vmul.f32 %v375, %v154
    %v659 = vmul.f32 %v376, %v154
    %v660 = vmul.f32 %v377, %v154
    %v661 = vmul.f32 %v378, %v154
    %v662 = vmul.f32 %v379, %v154
    %v663 = vmul.f32 %v380, %v154
    %v664 = vmul.f32 %v381, %v154
    %v665 = vmul.f32 %v382, %v154
    %v666 = vsel %vm64, %v634, 0.0
    %667 = vadd.xlane.f32.xlu0 %v666
    %v668 = vpop.xlane.xlu0 %667
    %v669 = vsel %vm64, %v635, 0.0
    %670 = vadd.xlane.f32.xlu0 %v669
    %v671 = vpop.xlane.xlu0 %670
    %v672 = vsel %vm64, %v636, 0.0
    %673 = vadd.xlane.f32.xlu0 %v672
    %v674 = vpop.xlane.xlu0 %673
    %v675 = vsel %vm64, %v637, 0.0
    %676 = vadd.xlane.f32.xlu0 %v675
    %v677 = vpop.xlane.xlu0 %676
    %v678 = vsel %vm64, %v638, 0.0
    %679 = vadd.xlane.f32.xlu0 %v678
    %v680 = vpop.xlane.xlu0 %679
    %v681 = vsel %vm64, %v639, 0.0
    %682 = vadd.xlane.f32.xlu0 %v681
    %v683 = vpop.xlane.xlu0 %682
    %v684 = vsel %vm64, %v640, 0.0
    %685 = vadd.xlane.f32.xlu0 %v684
    %v686 = vpop.xlane.xlu0 %685
    %v687 = vsel %vm64, %v641, 0.0
    %688 = vadd.xlane.f32.xlu0 %v687
    %v689 = vpop.xlane.xlu0 %688
    %v690 = vsel %vm64, %v642, 0.0
    %691 = vadd.xlane.f32.xlu0 %v690
    %v692 = vpop.xlane.xlu0 %691
    %v693 = vsel %vm64, %v643, 0.0
    %694 = vadd.xlane.f32.xlu0 %v693
    %v695 = vpop.xlane.xlu0 %694
    %v696 = vsel %vm64, %v644, 0.0
    %697 = vadd.xlane.f32.xlu0 %v696
    %v698 = vpop.xlane.xlu0 %697
    %v699 = vsel %vm64, %v645, 0.0
    %700 = vadd.xlane.f32.xlu0 %v699
    %v701 = vpop.xlane.xlu0 %700
    %v702 = vsel %vm64, %v646, 0.0
    %703 = vadd.xlane.f32.xlu0 %v702
    %v704 = vpop.xlane.xlu0 %703
    %v705 = vsel %vm64, %v647, 0.0
    %706 = vadd.xlane.f32.xlu0 %v705
    %v707 = vpop.xlane.xlu0 %706
    %v708 = vsel %vm64, %v648, 0.0
    %709 = vadd.xlane.f32.xlu0 %v708
    %v710 = vpop.xlane.xlu0 %709
    %v711 = vsel %vm64, %v649, 0.0
    %712 = vadd.xlane.f32.xlu0 %v711
    %v713 = vpop.xlane.xlu0 %712
    %v714 = vsel %vm64, %v650, 0.0
    %715 = vadd.xlane.f32.xlu0 %v714
    %v716 = vpop.xlane.xlu0 %715
    %v717 = vsel %vm64, %v651, 0.0
    %718 = vadd.xlane.f32.xlu0 %v717
    %v719 = vpop.xlane.xlu0 %718
    %v720 = vsel %vm64, %v652, 0.0
    %721 = vadd.xlane.f32.xlu0 %v720
    %v722 = vpop.xlane.xlu0 %721
    %v723 = vsel %vm64, %v653, 0.0
    %724 = vadd.xlane.f32.xlu0 %v723
    %v725 = vpop.xlane.xlu0 %724
    %v726 = vsel %vm64, %v654, 0.0
    %727 = vadd.xlane.f32.xlu0 %v726
    %v728 = vpop.xlane.xlu0 %727
    %v729 = vsel %vm64, %v655, 0.0
    %730 = vadd.xlane.f32.xlu0 %v729
    %v731 = vpop.xlane.xlu0 %730
    %v732 = vsel %vm64, %v656, 0.0
    %733 = vadd.xlane.f32.xlu0 %v732
    %v734 = vpop.xlane.xlu0 %733
    %v735 = vsel %vm64, %v657, 0.0
    %736 = vadd.xlane.f32.xlu0 %v735
    %v737 = vpop.xlane.xlu0 %736
    %v738 = vsel %vm64, %v658, 0.0
    %739 = vadd.xlane.f32.xlu0 %v738
    %v740 = vpop.xlane.xlu0 %739
    %v741 = vsel %vm64, %v659, 0.0
    %742 = vadd.xlane.f32.xlu0 %v741
    %v743 = vpop.xlane.xlu0 %742
    %v744 = vsel %vm64, %v660, 0.0
    %745 = vadd.xlane.f32.xlu0 %v744
    %v746 = vpop.xlane.xlu0 %745
    %v747 = vsel %vm64, %v661, 0.0
    %748 = vadd.xlane.f32.xlu0 %v747
    %v749 = vpop.xlane.xlu0 %748
    %v750 = vsel %vm64, %v662, 0.0
    %751 = vadd.xlane.f32.xlu0 %v750
    %v752 = vpop.xlane.xlu0 %751
    %v753 = vsel %vm64, %v663, 0.0
    %754 = vadd.xlane.f32.xlu0 %v753
    %v755 = vpop.xlane.xlu0 %754
    %v756 = vsel %vm64, %v664, 0.0
    %757 = vadd.xlane.f32.xlu0 %v756
    %v758 = vpop.xlane.xlu0 %757
    %v759 = vsel %vm64, %v665, 0.0
    %760 = vadd.xlane.f32.xlu0 %v759
    %v761 = vpop.xlane.xlu0 %760
    %v762 = vmul.f32 %v668, 8.0
    %v763 = vmul.f32 %v671, 8.0
    %v764 = vmul.f32 %v674, 8.0
    %v765 = vmul.f32 %v677, 8.0
    %v766 = vmul.f32 %v680, 8.0
    %v767 = vmul.f32 %v683, 8.0
    %v768 = vmul.f32 %v686, 8.0
    %v769 = vmul.f32 %v689, 8.0
    %v770 = vmul.f32 %v692, 8.0
    %v771 = vmul.f32 %v695, 8.0
    %v772 = vmul.f32 %v698, 8.0
    %v773 = vmul.f32 %v701, 8.0
    %v774 = vmul.f32 %v704, 8.0
    %v775 = vmul.f32 %v707, 8.0
    %v776 = vmul.f32 %v710, 8.0
    %v777 = vmul.f32 %v713, 8.0
    %v778 = vmul.f32 %v716, 8.0
    %v779 = vmul.f32 %v719, 8.0
    %v780 = vmul.f32 %v722, 8.0
    %v781 = vmul.f32 %v725, 8.0
    %v782 = vmul.f32 %v728, 8.0
    %v783 = vmul.f32 %v731, 8.0
    %v784 = vmul.f32 %v734, 8.0
    %v785 = vmul.f32 %v737, 8.0
    %v786 = vmul.f32 %v740, 8.0
    %v787 = vmul.f32 %v743, 8.0
    %v788 = vmul.f32 %v746, 8.0
    %v789 = vmul.f32 %v749, 8.0
    %v790 = vmul.f32 %v752, 8.0
    %v791 = vmul.f32 %v755, 8.0
    %v792 = vmul.f32 %v758, 8.0
    %v793 = vmul.f32 %v761, 8.0
    %v794 = vsub.f32 %v158, %v762
    %v795 = vsub.f32 %v159, %v763
    %v796 = vsub.f32 %v190, %v764
    %v797 = vsub.f32 %v191, %v765
    %v798 = vsub.f32 %v192, %v766
    %v799 = vsub.f32 %v193, %v767
    %v800 = vsub.f32 %v194, %v768
    %v801 = vsub.f32 %v195, %v769
    %v802 = vsub.f32 %v196, %v770
    %v803 = vsub.f32 %v197, %v771
    %v804 = vsub.f32 %v198, %v772
    %v805 = vsub.f32 %v199, %v773
    %v806 = vsub.f32 %v200, %v774
    %v807 = vsub.f32 %v201, %v775
    %v808 = vsub.f32 %v202, %v776
    %v809 = vsub.f32 %v203, %v777
    %v810 = vsub.f32 %v204, %v778
    %v811 = vsub.f32 %v205, %v779
    %v812 = vsub.f32 %v206, %v780
    %v813 = vsub.f32 %v207, %v781
    %v814 = vsub.f32 %v208, %v782
    %v815 = vsub.f32 %v209, %v783
    %v816 = vsub.f32 %v210, %v784
    %v817 = vsub.f32 %v211, %v785
    %v818 = vsub.f32 %v212, %v786
    %v819 = vsub.f32 %v213, %v787
    %v820 = vsub.f32 %v214, %v788
    %v821 = vsub.f32 %v215, %v789
    %v822 = vsub.f32 %v216, %v790
    %v823 = vsub.f32 %v217, %v791
    %v824 = vsub.f32 %v218, %v792
    %v825 = vsub.f32 %v219, %v793
    %v826 = vmul.f32 %v566, %v154
    %v827 = vmul.f32 %v567, %v154
    %v828 = vmul.f32 %v568, %v154
    %v829 = vmul.f32 %v569, %v154
    %v830 = vmul.f32 %v570, %v154
    %v831 = vmul.f32 %v571, %v154
    %v832 = vmul.f32 %v572, %v154
    %v833 = vmul.f32 %v573, %v154
    %v834 = vmul.f32 %v574, %v154
    %v835 = vmul.f32 %v575, %v154
    %v836 = vmul.f32 %v576, %v154
    %v837 = vmul.f32 %v577, %v154
    %v838 = vmul.f32 %v578, %v154
    %v839 = vmul.f32 %v579, %v154
    %v840 = vmul.f32 %v580, %v154
    %v841 = vmul.f32 %v581, %v154
    %v842 = vmul.f32 %v582, %v154
    %v843 = vmul.f32 %v583, %v154
    %v844 = vmul.f32 %v584, %v154
    %v845 = vmul.f32 %v585, %v154
    %v846 = vmul.f32 %v586, %v154
    %v847 = vmul.f32 %v587, %v154
    %v848 = vmul.f32 %v588, %v154
    %v849 = vmul.f32 %v589, %v154
    %v850 = vmul.f32 %v590, %v154
    %v851 = vmul.f32 %v591, %v154
    %v852 = vmul.f32 %v592, %v154
    %v853 = vmul.f32 %v593, %v154
    %v854 = vmul.f32 %v594, %v154
    %v855 = vmul.f32 %v595, %v154
    %v856 = vmul.f32 %v596, %v154
    %v857 = vmul.f32 %v597, %v154
    %vm858 = vcmask 130048
    %v859 = vsel %vm858, %v826, 0.0
    %860 = vadd.xlane.f32.xlu0 %v859
    %v861 = vpop.xlane.xlu0 %860
    %v862 = vsel %vm858, %v827, 0.0
    %863 = vadd.xlane.f32.xlu0 %v862
    %v864 = vpop.xlane.xlu0 %863
    %v865 = vsel %vm858, %v828, 0.0
    %866 = vadd.xlane.f32.xlu0 %v865
    %v867 = vpop.xlane.xlu0 %866
    %v868 = vsel %vm858, %v829, 0.0
    %869 = vadd.xlane.f32.xlu0 %v868
    %v870 = vpop.xlane.xlu0 %869
    %v871 = vsel %vm858, %v830, 0.0
    %872 = vadd.xlane.f32.xlu0 %v871
    %v873 = vpop.xlane.xlu0 %872
    %v874 = vsel %vm858, %v831, 0.0
    %875 = vadd.xlane.f32.xlu0 %v874
    %v876 = vpop.xlane.xlu0 %875
    %v877 = vsel %vm858, %v832, 0.0
    %878 = vadd.xlane.f32.xlu0 %v877
    %v879 = vpop.xlane.xlu0 %878
    %v880 = vsel %vm858, %v833, 0.0
    %881 = vadd.xlane.f32.xlu0 %v880
    %v882 = vpop.xlane.xlu0 %881
    %v883 = vsel %vm858, %v834, 0.0
    %884 = vadd.xlane.f32.xlu0 %v883
    %v885 = vpop.xlane.xlu0 %884
    %v886 = vsel %vm858, %v835, 0.0
    %887 = vadd.xlane.f32.xlu0 %v886
    %v888 = vpop.xlane.xlu0 %887
    %v889 = vsel %vm858, %v836, 0.0
    %890 = vadd.xlane.f32.xlu0 %v889
    %v891 = vpop.xlane.xlu0 %890
    %v892 = vsel %vm858, %v837, 0.0
    %893 = vadd.xlane.f32.xlu0 %v892
    %v894 = vpop.xlane.xlu0 %893
    %v895 = vsel %vm858, %v838, 0.0
    %896 = vadd.xlane.f32.xlu0 %v895
    %v897 = vpop.xlane.xlu0 %896
    %v898 = vsel %vm858, %v839, 0.0
    %899 = vadd.xlane.f32.xlu0 %v898
    %v900 = vpop.xlane.xlu0 %899
    %v901 = vsel %vm858, %v840, 0.0
    %902 = vadd.xlane.f32.xlu0 %v901
    %v903 = vpop.xlane.xlu0 %902
    %v904 = vsel %vm858, %v841, 0.0
    %905 = vadd.xlane.f32.xlu0 %v904
    %v906 = vpop.xlane.xlu0 %905
    %v907 = vsel %vm858, %v842, 0.0
    %908 = vadd.xlane.f32.xlu0 %v907
    %v909 = vpop.xlane.xlu0 %908
    %v910 = vsel %vm858, %v843, 0.0
    %911 = vadd.xlane.f32.xlu0 %v910
    %v912 = vpop.xlane.xlu0 %911
    %v913 = vsel %vm858, %v844, 0.0
    %914 = vadd.xlane.f32.xlu0 %v913
    %v915 = vpop.xlane.xlu0 %914
    %v916 = vsel %vm858, %v845, 0.0
    %917 = vadd.xlane.f32.xlu0 %v916
    %v918 = vpop.xlane.xlu0 %917
    %v919 = vsel %vm858, %v846, 0.0
    %920 = vadd.xlane.f32.xlu0 %v919
    %v921 = vpop.xlane.xlu0 %920
    %v922 = vsel %vm858, %v847, 0.0
    %923 = vadd.xlane.f32.xlu0 %v922
    %v924 = vpop.xlane.xlu0 %923
    %v925 = vsel %vm858, %v848, 0.0
    %926 = vadd.xlane.f32.xlu0 %v925
    %v927 = vpop.xlane.xlu0 %926
    %v928 = vsel %vm858, %v849, 0.0
    %929 = vadd.xlane.f32.xlu0 %v928
    %v930 = vpop.xlane.xlu0 %929
    %v931 = vsel %vm858, %v850, 0.0
    %932 = vadd.xlane.f32.xlu0 %v931
    %v933 = vpop.xlane.xlu0 %932
    %v934 = vsel %vm858, %v851, 0.0
    %935 = vadd.xlane.f32.xlu0 %v934
    %v936 = vpop.xlane.xlu0 %935
    %v937 = vsel %vm858, %v852, 0.0
    %938 = vadd.xlane.f32.xlu0 %v937
    %v939 = vpop.xlane.xlu0 %938
    %v940 = vsel %vm858, %v853, 0.0
    %941 = vadd.xlane.f32.xlu0 %v940
    %v942 = vpop.xlane.xlu0 %941
    %v943 = vsel %vm858, %v854, 0.0
    %944 = vadd.xlane.f32.xlu0 %v943
    %v945 = vpop.xlane.xlu0 %944
    %v946 = vsel %vm858, %v855, 0.0
    %947 = vadd.xlane.f32.xlu0 %v946
    %v948 = vpop.xlane.xlu0 %947
    %v949 = vsel %vm858, %v856, 0.0
    %950 = vadd.xlane.f32.xlu0 %v949
    %v951 = vpop.xlane.xlu0 %950
    %v952 = vsel %vm858, %v857, 0.0
    %953 = vadd.xlane.f32.xlu0 %v952
    %v954 = vpop.xlane.xlu0 %953
    %v955 = vmul.f32 %v610, %v158
    %v956 = vmul.f32 %v611, %v159
    %v957 = vsel %vm64, %v955, 0.0
    %v958 = vsel %vm64, %v956, 0.0
    %v959 = vadd.f32 %v957, %v958
    %v960 = vrot.slane %v959, 4
    %v961 = vadd.f32 %v959, %v960
    %v962 = vrot.slane %v961, 2
    %v963 = vadd.f32 %v961, %v962
    %v964 = vrot.slane %v963, 1
    %v965 = vadd.f32 %v963, %v964
    %v966 = vmul.f32 %v965, 2.0
    %v967 = vsub.f32 %v154, %v966
    %vm968 = vcmp.eq.f32.partialorder %v861, %v965
    %vm969 = vcmp.eq.f32.partialorder %v864, %v965
    %vm970 = vcmp.eq.f32.partialorder %v867, %v965
    %vm971 = vcmp.eq.f32.partialorder %v870, %v965
    %vm972 = vcmp.eq.f32.partialorder %v873, %v965
    %vm973 = vcmp.eq.f32.partialorder %v876, %v965
    %vm974 = vcmp.eq.f32.partialorder %v879, %v965
    %vm975 = vcmp.eq.f32.partialorder %v882, %v965
    %vm976 = vcmp.eq.f32.partialorder %v885, %v965
    %vm977 = vcmp.eq.f32.partialorder %v888, %v965
    %vm978 = vcmp.eq.f32.partialorder %v891, %v965
    %vm979 = vcmp.eq.f32.partialorder %v894, %v965
    %vm980 = vcmp.eq.f32.partialorder %v897, %v965
    %vm981 = vcmp.eq.f32.partialorder %v900, %v965
    %vm982 = vcmp.eq.f32.partialorder %v903, %v965
    %vm983 = vcmp.eq.f32.partialorder %v906, %v965
    %vm984 = vcmp.eq.f32.partialorder %v909, %v965
    %vm985 = vcmp.eq.f32.partialorder %v912, %v965
    %vm986 = vcmp.eq.f32.partialorder %v915, %v965
    %vm987 = vcmp.eq.f32.partialorder %v918, %v965
    %vm988 = vcmp.eq.f32.partialorder %v921, %v965
    %vm989 = vcmp.eq.f32.partialorder %v924, %v965
    %vm990 = vcmp.eq.f32.partialorder %v927, %v965
    %vm991 = vcmp.eq.f32.partialorder %v930, %v965
    %vm992 = vcmp.eq.f32.partialorder %v933, %v965
    %vm993 = vcmp.eq.f32.partialorder %v936, %v965
    %vm994 = vcmp.eq.f32.partialorder %v939, %v965
    %vm995 = vcmp.eq.f32.partialorder %v942, %v965
    %vm996 = vcmp.eq.f32.partialorder %v945, %v965
    %vm997 = vcmp.eq.f32.partialorder %v948, %v965
    %vm998 = vcmp.eq.f32.partialorder %v951, %v965
    %vm999 = vcmp.eq.f32.partialorder %v954, %v965
    %v1000 = vsel %vm968, 0.0, -1e+09
    %v1001 = vsel %vm969, 0.0, -1e+09
    %v1002 = vsel %vm970, 0.0, -1e+09
    %v1003 = vsel %vm971, 0.0, -1e+09
    %v1004 = vsel %vm972, 0.0, -1e+09
    %v1005 = vsel %vm973, 0.0, -1e+09
    %v1006 = vsel %vm974, 0.0, -1e+09
    %v1007 = vsel %vm975, 0.0, -1e+09
    %v1008 = vsel %vm976, 0.0, -1e+09
    %v1009 = vsel %vm977, 0.0, -1e+09
    %v1010 = vsel %vm978, 0.0, -1e+09
    %v1011 = vsel %vm979, 0.0, -1e+09
    %v1012 = vsel %vm980, 0.0, -1e+09
    %v1013 = vsel %vm981, 0.0, -1e+09
    %v1014 = vsel %vm982, 0.0, -1e+09
    %v1015 = vsel %vm983, 0.0, -1e+09
    %v1016 = vsel %vm984, 0.0, -1e+09
    %v1017 = vsel %vm985, 0.0, -1e+09
    %v1018 = vsel %vm986, 0.0, -1e+09
    %v1019 = vsel %vm987, 0.0, -1e+09
    %v1020 = vsel %vm988, 0.0, -1e+09
    %v1021 = vsel %vm989, 0.0, -1e+09
    %v1022 = vsel %vm990, 0.0, -1e+09
    %v1023 = vsel %vm991, 0.0, -1e+09
    %v1024 = vsel %vm992, 0.0, -1e+09
    %v1025 = vsel %vm993, 0.0, -1e+09
    %v1026 = vsel %vm994, 0.0, -1e+09
    %v1027 = vsel %vm995, 0.0, -1e+09
    %v1028 = vsel %vm996, 0.0, -1e+09
    %v1029 = vsel %vm997, 0.0, -1e+09
    %v1030 = vsel %vm998, 0.0, -1e+09
    %v1031 = vsel %vm999, 0.0, -1e+09
    %v1032 = vmul.f32 %v794, 4.0
    %v1033 = vmul.f32 %v795, 4.0
    %v1034 = vmul.f32 %v796, 4.0
    %v1035 = vmul.f32 %v797, 4.0
    %v1036 = vmul.f32 %v798, 4.0
    %v1037 = vmul.f32 %v799, 4.0
    %v1038 = vmul.f32 %v800, 4.0
    %v1039 = vmul.f32 %v801, 4.0
    %v1040 = vmul.f32 %v802, 4.0
    %v1041 = vmul.f32 %v803, 4.0
    %v1042 = vmul.f32 %v804, 4.0
    %v1043 = vmul.f32 %v805, 4.0
    %v1044 = vmul.f32 %v806, 4.0
    %v1045 = vmul.f32 %v807, 4.0
    %v1046 = vmul.f32 %v808, 4.0
    %v1047 = vmul.f32 %v809, 4.0
    %v1048 = vmul.f32 %v810, 4.0
    %v1049 = vmul.f32 %v811, 4.0
    %v1050 = vmul.f32 %v812, 4.0
    %v1051 = vmul.f32 %v813, 4.0
    %v1052 = vmul.f32 %v814, 4.0
    %v1053 = vmul.f32 %v815, 4.0
    %v1054 = vmul.f32 %v816, 4.0
    %v1055 = vmul.f32 %v817, 4.0
    %v1056 = vmul.f32 %v818, 4.0
    %v1057 = vmul.f32 %v819, 4.0
    %v1058 = vmul.f32 %v820, 4.0
    %v1059 = vmul.f32 %v821, 4.0
    %v1060 = vmul.f32 %v822, 4.0
    %v1061 = vmul.f32 %v823, 4.0
    %v1062 = vmul.f32 %v824, 4.0
    %v1063 = vmul.f32 %v825, 4.0
    %vm1064 = vcmp.ge.f32.partialorder %v154, %v1032
    %vm1065 = vcmp.ge.f32.partialorder %v154, %v1033
    %vm1066 = vcmp.ge.f32.partialorder %v154, %v1034
    %vm1067 = vcmp.ge.f32.partialorder %v154, %v1035
    %vm1068 = vcmp.ge.f32.partialorder %v154, %v1036
    %vm1069 = vcmp.ge.f32.partialorder %v154, %v1037
    %vm1070 = vcmp.ge.f32.partialorder %v154, %v1038
    %vm1071 = vcmp.ge.f32.partialorder %v154, %v1039
    %vm1072 = vcmp.ge.f32.partialorder %v154, %v1040
    %vm1073 = vcmp.ge.f32.partialorder %v154, %v1041
    %vm1074 = vcmp.ge.f32.partialorder %v154, %v1042
    %vm1075 = vcmp.ge.f32.partialorder %v154, %v1043
    %vm1076 = vcmp.ge.f32.partialorder %v154, %v1044
    %vm1077 = vcmp.ge.f32.partialorder %v154, %v1045
    %vm1078 = vcmp.ge.f32.partialorder %v154, %v1046
    %vm1079 = vcmp.ge.f32.partialorder %v154, %v1047
    %vm1080 = vcmp.ge.f32.partialorder %v154, %v1048
    %vm1081 = vcmp.ge.f32.partialorder %v154, %v1049
    %vm1082 = vcmp.ge.f32.partialorder %v154, %v1050
    %vm1083 = vcmp.ge.f32.partialorder %v154, %v1051
    %vm1084 = vcmp.ge.f32.partialorder %v154, %v1052
    %vm1085 = vcmp.ge.f32.partialorder %v154, %v1053
    %vm1086 = vcmp.ge.f32.partialorder %v154, %v1054
    %vm1087 = vcmp.ge.f32.partialorder %v154, %v1055
    %vm1088 = vcmp.ge.f32.partialorder %v154, %v1056
    %vm1089 = vcmp.ge.f32.partialorder %v154, %v1057
    %vm1090 = vcmp.ge.f32.partialorder %v154, %v1058
    %vm1091 = vcmp.ge.f32.partialorder %v154, %v1059
    %vm1092 = vcmp.ge.f32.partialorder %v154, %v1060
    %vm1093 = vcmp.ge.f32.partialorder %v154, %v1061
    %vm1094 = vcmp.ge.f32.partialorder %v154, %v1062
    %vm1095 = vcmp.ge.f32.partialorder %v154, %v1063
    %v1096 = vadd.f32 %v794, 1.0
    %v1097 = vadd.f32 %v795, 1.0
    %v1098 = vadd.f32 %v796, 1.0
    %v1099 = vadd.f32 %v797, 1.0
    %v1100 = vadd.f32 %v798, 1.0
    %v1101 = vadd.f32 %v799, 1.0
    %v1102 = vadd.f32 %v800, 1.0
    %v1103 = vadd.f32 %v801, 1.0
    %v1104 = vadd.f32 %v802, 1.0
    %v1105 = vadd.f32 %v803, 1.0
    %v1106 = vadd.f32 %v804, 1.0
    %v1107 = vadd.f32 %v805, 1.0
    %v1108 = vadd.f32 %v806, 1.0
    %v1109 = vadd.f32 %v807, 1.0
    %v1110 = vadd.f32 %v808, 1.0
    %v1111 = vadd.f32 %v809, 1.0
    %v1112 = vadd.f32 %v810, 1.0
    %v1113 = vadd.f32 %v811, 1.0
    %v1114 = vadd.f32 %v812, 1.0
    %v1115 = vadd.f32 %v813, 1.0
    %v1116 = vadd.f32 %v814, 1.0
    %v1117 = vadd.f32 %v815, 1.0
    %v1118 = vadd.f32 %v816, 1.0
    %v1119 = vadd.f32 %v817, 1.0
    %v1120 = vadd.f32 %v818, 1.0
    %v1121 = vadd.f32 %v819, 1.0
    %v1122 = vadd.f32 %v820, 1.0
    %v1123 = vadd.f32 %v821, 1.0
    %v1124 = vadd.f32 %v822, 1.0
    %v1125 = vadd.f32 %v823, 1.0
    %v1126 = vadd.f32 %v824, 1.0
    %v1127 = vadd.f32 %v825, 1.0
    %v1128 = vmul.f32 %v1096, 4.0
    %v1129 = vmul.f32 %v1097, 4.0
    %v1130 = vmul.f32 %v1098, 4.0
    %v1131 = vmul.f32 %v1099, 4.0
    %v1132 = vmul.f32 %v1100, 4.0
    %v1133 = vmul.f32 %v1101, 4.0
    %v1134 = vmul.f32 %v1102, 4.0
    %v1135 = vmul.f32 %v1103, 4.0
    %v1136 = vmul.f32 %v1104, 4.0
    %v1137 = vmul.f32 %v1105, 4.0
    %v1138 = vmul.f32 %v1106, 4.0
    %v1139 = vmul.f32 %v1107, 4.0
    %v1140 = vmul.f32 %v1108, 4.0
    %v1141 = vmul.f32 %v1109, 4.0
    %v1142 = vmul.f32 %v1110, 4.0
    %v1143 = vmul.f32 %v1111, 4.0
    %v1144 = vmul.f32 %v1112, 4.0
    %v1145 = vmul.f32 %v1113, 4.0
    %v1146 = vmul.f32 %v1114, 4.0
    %v1147 = vmul.f32 %v1115, 4.0
    %v1148 = vmul.f32 %v1116, 4.0
    %v1149 = vmul.f32 %v1117, 4.0
    %v1150 = vmul.f32 %v1118, 4.0
    %v1151 = vmul.f32 %v1119, 4.0
    %v1152 = vmul.f32 %v1120, 4.0
    %v1153 = vmul.f32 %v1121, 4.0
    %v1154 = vmul.f32 %v1122, 4.0
    %v1155 = vmul.f32 %v1123, 4.0
    %v1156 = vmul.f32 %v1124, 4.0
    %v1157 = vmul.f32 %v1125, 4.0
    %v1158 = vmul.f32 %v1126, 4.0
    %v1159 = vmul.f32 %v1127, 4.0
    %vm1160 = vcmp.lt.f32.partialorder %v154, %v1128
    %vm1161 = vcmp.lt.f32.partialorder %v154, %v1129
    %vm1162 = vcmp.lt.f32.partialorder %v154, %v1130
    %vm1163 = vcmp.lt.f32.partialorder %v154, %v1131
    %vm1164 = vcmp.lt.f32.partialorder %v154, %v1132
    %vm1165 = vcmp.lt.f32.partialorder %v154, %v1133
    %vm1166 = vcmp.lt.f32.partialorder %v154, %v1134
    %vm1167 = vcmp.lt.f32.partialorder %v154, %v1135
    %vm1168 = vcmp.lt.f32.partialorder %v154, %v1136
    %vm1169 = vcmp.lt.f32.partialorder %v154, %v1137
    %vm1170 = vcmp.lt.f32.partialorder %v154, %v1138
    %vm1171 = vcmp.lt.f32.partialorder %v154, %v1139
    %vm1172 = vcmp.lt.f32.partialorder %v154, %v1140
    %vm1173 = vcmp.lt.f32.partialorder %v154, %v1141
    %vm1174 = vcmp.lt.f32.partialorder %v154, %v1142
    %vm1175 = vcmp.lt.f32.partialorder %v154, %v1143
    %vm1176 = vcmp.lt.f32.partialorder %v154, %v1144
    %vm1177 = vcmp.lt.f32.partialorder %v154, %v1145
    %vm1178 = vcmp.lt.f32.partialorder %v154, %v1146
    %vm1179 = vcmp.lt.f32.partialorder %v154, %v1147
    %vm1180 = vcmp.lt.f32.partialorder %v154, %v1148
    %vm1181 = vcmp.lt.f32.partialorder %v154, %v1149
    %vm1182 = vcmp.lt.f32.partialorder %v154, %v1150
    %vm1183 = vcmp.lt.f32.partialorder %v154, %v1151
    %vm1184 = vcmp.lt.f32.partialorder %v154, %v1152
    %vm1185 = vcmp.lt.f32.partialorder %v154, %v1153
    %vm1186 = vcmp.lt.f32.partialorder %v154, %v1154
    %vm1187 = vcmp.lt.f32.partialorder %v154, %v1155
    %vm1188 = vcmp.lt.f32.partialorder %v154, %v1156
    %vm1189 = vcmp.lt.f32.partialorder %v154, %v1157
    %vm1190 = vcmp.lt.f32.partialorder %v154, %v1158
    %vm1191 = vcmp.lt.f32.partialorder %v154, %v1159
    %vm1192 = vmand %vm1064, %vm1160
    %vm1193 = vmand %vm1065, %vm1161
    %vm1194 = vmand %vm1066, %vm1162
    %vm1195 = vmand %vm1067, %vm1163
    %vm1196 = vmand %vm1068, %vm1164
    %vm1197 = vmand %vm1069, %vm1165
    %vm1198 = vmand %vm1070, %vm1166
    %vm1199 = vmand %vm1071, %vm1167
    %vm1200 = vmand %vm1072, %vm1168
    %vm1201 = vmand %vm1073, %vm1169
    %vm1202 = vmand %vm1074, %vm1170
    %vm1203 = vmand %vm1075, %vm1171
    %vm1204 = vmand %vm1076, %vm1172
    %vm1205 = vmand %vm1077, %vm1173
    %vm1206 = vmand %vm1078, %vm1174
    %vm1207 = vmand %vm1079, %vm1175
    %vm1208 = vmand %vm1080, %vm1176
    %vm1209 = vmand %vm1081, %vm1177
    %vm1210 = vmand %vm1082, %vm1178
    %vm1211 = vmand %vm1083, %vm1179
    %vm1212 = vmand %vm1084, %vm1180
    %vm1213 = vmand %vm1085, %vm1181
    %vm1214 = vmand %vm1086, %vm1182
    %vm1215 = vmand %vm1087, %vm1183
    %vm1216 = vmand %vm1088, %vm1184
    %vm1217 = vmand %vm1089, %vm1185
    %vm1218 = vmand %vm1090, %vm1186
    %vm1219 = vmand %vm1091, %vm1187
    %vm1220 = vmand %vm1092, %vm1188
    %vm1221 = vmand %vm1093, %vm1189
    %vm1222 = vmand %vm1094, %vm1190
    %vm1223 = vmand %vm1095, %vm1191
    %v1224 = vsel %vm1192, 1, 0
    %v1225 = vsel %vm1193, 1, 0
    %v1226 = vsel %vm1194, 1, 0
    %v1227 = vsel %vm1195, 1, 0
    %v1228 = vsel %vm1196, 1, 0
    %v1229 = vsel %vm1197, 1, 0
    %v1230 = vsel %vm1198, 1, 0
    %v1231 = vsel %vm1199, 1, 0
    %v1232 = vsel %vm1200, 1, 0
    %v1233 = vsel %vm1201, 1, 0
    %v1234 = vsel %vm1202, 1, 0
    %v1235 = vsel %vm1203, 1, 0
    %v1236 = vsel %vm1204, 1, 0
    %v1237 = vsel %vm1205, 1, 0
    %v1238 = vsel %vm1206, 1, 0
    %v1239 = vsel %vm1207, 1, 0
    %v1240 = vsel %vm1208, 1, 0
    %v1241 = vsel %vm1209, 1, 0
    %v1242 = vsel %vm1210, 1, 0
    %v1243 = vsel %vm1211, 1, 0
    %v1244 = vsel %vm1212, 1, 0
    %v1245 = vsel %vm1213, 1, 0
    %v1246 = vsel %vm1214, 1, 0
    %v1247 = vsel %vm1215, 1, 0
    %v1248 = vsel %vm1216, 1, 0
    %v1249 = vsel %vm1217, 1, 0
    %v1250 = vsel %vm1218, 1, 0
    %v1251 = vsel %vm1219, 1, 0
    %v1252 = vsel %vm1220, 1, 0
    %v1253 = vsel %vm1221, 1, 0
    %v1254 = vsel %vm1222, 1, 0
    %v1255 = vsel %vm1223, 1, 0
    %v1256 = vcvt.s32.f32 %v1224
    %v1257 = vcvt.s32.f32 %v1225
    %v1258 = vcvt.s32.f32 %v1226
    %v1259 = vcvt.s32.f32 %v1227
    %v1260 = vcvt.s32.f32 %v1228
    %v1261 = vcvt.s32.f32 %v1229
    %v1262 = vcvt.s32.f32 %v1230
    %v1263 = vcvt.s32.f32 %v1231
    %v1264 = vcvt.s32.f32 %v1232
    %v1265 = vcvt.s32.f32 %v1233
    %v1266 = vcvt.s32.f32 %v1234
    %v1267 = vcvt.s32.f32 %v1235
    %v1268 = vcvt.s32.f32 %v1236
    %v1269 = vcvt.s32.f32 %v1237
    %v1270 = vcvt.s32.f32 %v1238
    %v1271 = vcvt.s32.f32 %v1239
    %v1272 = vcvt.s32.f32 %v1240
    %v1273 = vcvt.s32.f32 %v1241
    %v1274 = vcvt.s32.f32 %v1242
    %v1275 = vcvt.s32.f32 %v1243
    %v1276 = vcvt.s32.f32 %v1244
    %v1277 = vcvt.s32.f32 %v1245
    %v1278 = vcvt.s32.f32 %v1246
    %v1279 = vcvt.s32.f32 %v1247
    %v1280 = vcvt.s32.f32 %v1248
    %v1281 = vcvt.s32.f32 %v1249
    %v1282 = vcvt.s32.f32 %v1250
    %v1283 = vcvt.s32.f32 %v1251
    %v1284 = vcvt.s32.f32 %v1252
    %v1285 = vcvt.s32.f32 %v1253
    %v1286 = vcvt.s32.f32 %v1254
    %v1287 = vcvt.s32.f32 %v1255
    %vm1288 = vcmp.eq.f32.partialorder %v967, %v158
    %v1289 = vsel %vm1288, 1, 0
    %v1290 = vcvt.s32.f32 %v1289
    %v1292 = vsel %vm64, %v351, 0
    %v1295 = vsel %vm64, %v352, 0
    %v1298 = vsel %vm64, %v353, 0
    %v1301 = vsel %vm64, %v354, 0
    %v1304 = vsel %vm64, %v355, 0
    %v1307 = vsel %vm64, %v356, 0
    %v1310 = vsel %vm64, %v357, 0
    %v1313 = vsel %vm64, %v358, 0
    %v1316 = vsel %vm64, %v359, 0
    %v1319 = vsel %vm64, %v360, 0
    %v1322 = vsel %vm64, %v361, 0
    %v1325 = vsel %vm64, %v362, 0
    %v1328 = vsel %vm64, %v363, 0
    %v1331 = vsel %vm64, %v364, 0
    %v1334 = vsel %vm64, %v365, 0
    %v1337 = vsel %vm64, %v366, 0
    %v1340 = vsel %vm64, %v367, 0
    %v1343 = vsel %vm64, %v368, 0
    %v1346 = vsel %vm64, %v369, 0
    %v1349 = vsel %vm64, %v370, 0
    %v1352 = vsel %vm64, %v371, 0
    %v1355 = vsel %vm64, %v372, 0
    %v1358 = vsel %vm64, %v373, 0
    %v1361 = vsel %vm64, %v374, 0
    %v1364 = vsel %vm64, %v375, 0
    %v1367 = vsel %vm64, %v376, 0
    %v1370 = vsel %vm64, %v377, 0
    %v1373 = vsel %vm64, %v378, 0
    %v1376 = vsel %vm64, %v379, 0
    %v1379 = vsel %vm64, %v380, 0
    %v1382 = vsel %vm64, %v381, 0
    %v1385 = vsel %vm64, %v382, 0
    %1387 = vmatprep.subr.mxu0 0.0
    %1388 = vmatpush1.msra.mxu0 %v124
    %1389 = vmatprep.subr.mxu0 0.0
    %1390 = vmatpush1.msra.mxu0 %v125
    %1391 = vmatprep.subr.mxu0 0.0
    %1392 = vmatpush1.msra.mxu0 %v126
    %1393 = vmatprep.subr.mxu0 0.0
    %1394 = vmatpush1.msra.mxu0 %v127
    %1395 = vmatprep.subr.mxu0 0.0
    %1396 = vmatpush1.msra.mxu0 0.0
    %1397 = vmatprep.subr.mxu0 0.0
    %1398 = vmatpush1.msra.mxu0 0.0
    %1399 = vmatprep.subr.mxu0 0.0
    %1400 = vmatpush1.msra.mxu0 0.0
    %1401 = vmatprep.subr.mxu0 0.0
    %1402 = vmatpush1.msra.mxu0 0.0
    %1403 = vmatprep.subr.mxu0 0.0
    %1404 = vmatpush1.msra.mxu0 0.0
    %1405 = vmatprep.subr.mxu0 0.0
    %1406 = vmatpush1.msra.mxu0 0.0
    %1407 = vmatprep.subr.mxu0 0.0
    %1408 = vmatpush1.msra.mxu0 0.0
    %1409 = vmatprep.subr.mxu0 0.0
    %1410 = vmatpush1.msra.mxu0 0.0
    %1411 = vmatprep.subr.mxu0 0.0
    %1412 = vmatpush1.msra.mxu0 0.0
    %1413 = vmatprep.subr.mxu0 0.0
    %1414 = vmatpush1.msra.mxu0 0.0
    %1415 = vmatprep.subr.mxu0 0.0
    %1416 = vmatpush1.msra.mxu0 0.0
    %1417 = vmatprep.subr.mxu0 0.0
    %1418 = vmatpush1.msra.mxu0 0.0
    %1419 = vmatprep.subr.mxu0 0.0
    %1420 = vmatpush1.msra.mxu0 0.0
    %1421 = vmatprep.subr.mxu0 0.0
    %1422 = vmatpush1.msra.mxu0 0.0
    %1423 = vmatprep.subr.mxu0 0.0
    %1424 = vmatpush1.msra.mxu0 0.0
    %1425 = vmatprep.subr.mxu0 0.0
    %1426 = vmatpush1.msra.mxu0 0.0
    %1427 = vmatprep.subr.mxu0 0.0
    %1428 = vmatpush1.msra.mxu0 0.0
    %1429 = vmatprep.subr.mxu0 0.0
    %1430 = vmatpush1.msra.mxu0 0.0
    %1431 = vmatprep.subr.mxu0 0.0
    %1432 = vmatpush1.msra.mxu0 0.0
    %1433 = vmatprep.subr.mxu0 0.0
    %1434 = vmatpush1.msra.mxu0 0.0
    %1435 = vmatprep.subr.mxu0 0.0
    %1436 = vmatpush1.msra.mxu0 0.0
    %1437 = vmatprep.subr.mxu0 0.0
    %1438 = vmatpush1.msra.mxu0 0.0
    %1439 = vmatprep.subr.mxu0 0.0
    %1440 = vmatpush1.msra.mxu0 0.0
    %1441 = vmatprep.subr.mxu0 0.0
    %1442 = vmatpush1.msra.mxu0 0.0
    %1443 = vmatprep.subr.mxu0 0.0
    %1444 = vmatpush1.msra.mxu0 0.0
    %1445 = vmatprep.subr.mxu0 0.0
    %1446 = vmatpush1.msra.mxu0 0.0
    %1447 = vmatprep.subr.mxu0 0.0
    %1448 = vmatpush1.msra.mxu0 0.0
    %1449 = vmatprep.subr.mxu0 0.0
    %1450 = vmatpush1.msra.mxu0 0.0
    %1451 = vmatprep.mubr.f32.mxu0 0.0
    %1452 = vmatmul.mubr.f32.gmra.mrb[0].mxu0 %v1292
    %v1453 = vpop.f32.mrb[0].mxu0
    %v1454 = vadd.f32 0.0, %v1453
    %v1455 = vpop.f32.mrb[0].mxu0
    %1456 = vmatprep.mubr.f32.mxu0 0.0
    %1457 = vmatmul.mubr.f32.gmra.mrb[0].mxu0 %v1295
    %v1458 = vpop.f32.mrb[0].mxu0
    %v1459 = vadd.f32 0.0, %v1458
    %v1460 = vpop.f32.mrb[0].mxu0
    %1461 = vmatprep.mubr.f32.mxu0 0.0
    %1462 = vmatmul.mubr.f32.gmra.mrb[0].mxu0 %v1298
    %v1463 = vpop.f32.mrb[0].mxu0
    %v1464 = vadd.f32 0.0, %v1463
    %v1465 = vpop.f32.mrb[0].mxu0
    %1466 = vmatprep.mubr.f32.mxu0 0.0
    %1467 = vmatmul.mubr.f32.gmra.mrb[0].mxu0 %v1301
    %v1468 = vpop.f32.mrb[0].mxu0
    %v1469 = vadd.f32 0.0, %v1468
    %v1470 = vpop.f32.mrb[0].mxu0
    %1471 = vmatprep.mubr.f32.mxu0 0.0
    %1472 = vmatmul.mubr.f32.gmra.mrb[0].mxu0 %v1304
    %v1473 = vpop.f32.mrb[0].mxu0
    %v1474 = vadd.f32 0.0, %v1473
    %v1475 = vpop.f32.mrb[0].mxu0
    %1476 = vmatprep.mubr.f32.mxu0 0.0
    %1477 = vmatmul.mubr.f32.gmra.mrb[0].mxu0 %v1307
    %v1478 = vpop.f32.mrb[0].mxu0
    %v1479 = vadd.f32 0.0, %v1478
    %v1480 = vpop.f32.mrb[0].mxu0
    %1481 = vmatprep.mubr.f32.mxu0 0.0
    %1482 = vmatmul.mubr.f32.gmra.mrb[0].mxu0 %v1310
    %v1483 = vpop.f32.mrb[0].mxu0
    %v1484 = vadd.f32 0.0, %v1483
    %v1485 = vpop.f32.mrb[0].mxu0
    %1486 = vmatprep.mubr.f32.mxu0 0.0
    %1487 = vmatmul.mubr.f32.gmra.mrb[0].mxu0 %v1313
    %v1488 = vpop.f32.mrb[0].mxu0
    %v1489 = vadd.f32 0.0, %v1488
    %v1490 = vpop.f32.mrb[0].mxu0
    %1491 = vmatprep.mubr.f32.mxu0 0.0
    %1492 = vmatmul.mubr.f32.gmra.mrb[0].mxu0 %v1316
    %v1493 = vpop.f32.mrb[0].mxu0
    %v1494 = vadd.f32 0.0, %v1493
    %v1495 = vpop.f32.mrb[0].mxu0
    %1496 = vmatprep.mubr.f32.mxu0 0.0
    %1497 = vmatmul.mubr.f32.gmra.mrb[0].mxu0 %v1319
    %v1498 = vpop.f32.mrb[0].mxu0
    %v1499 = vadd.f32 0.0, %v1498
    %v1500 = vpop.f32.mrb[0].mxu0
    %1501 = vmatprep.mubr.f32.mxu0 0.0
    %1502 = vmatmul.mubr.f32.gmra.mrb[0].mxu0 %v1322
    %v1503 = vpop.f32.mrb[0].mxu0
    %v1504 = vadd.f32 0.0, %v1503
    %v1505 = vpop.f32.mrb[0].mxu0
    %1506 = vmatprep.mubr.f32.mxu0 0.0
    %1507 = vmatmul.mubr.f32.gmra.mrb[0].mxu0 %v1325
    %v1508 = vpop.f32.mrb[0].mxu0
    %v1509 = vadd.f32 0.0, %v1508
    %v1510 = vpop.f32.mrb[0].mxu0
    %1511 = vmatprep.mubr.f32.mxu0 0.0
    %1512 = vmatmul.mubr.f32.gmra.mrb[0].mxu0 %v1328
    %v1513 = vpop.f32.mrb[0].mxu0
    %v1514 = vadd.f32 0.0, %v1513
    %v1515 = vpop.f32.mrb[0].mxu0
    %1516 = vmatprep.mubr.f32.mxu0 0.0
    %1517 = vmatmul.mubr.f32.gmra.mrb[0].mxu0 %v1331
    %v1518 = vpop.f32.mrb[0].mxu0
    %v1519 = vadd.f32 0.0, %v1518
    %v1520 = vpop.f32.mrb[0].mxu0
    %1521 = vmatprep.mubr.f32.mxu0 0.0
    %1522 = vmatmul.mubr.f32.gmra.mrb[0].mxu0 %v1334
    %v1523 = vpop.f32.mrb[0].mxu0
    %v1524 = vadd.f32 0.0, %v1523
    %v1525 = vpop.f32.mrb[0].mxu0
    %1526 = vmatprep.mubr.f32.mxu0 0.0
    %1527 = vmatmul.mubr.f32.gmra.mrb[0].mxu0 %v1337
    %v1528 = vpop.f32.mrb[0].mxu0
    %v1529 = vadd.f32 0.0, %v1528
    %v1530 = vpop.f32.mrb[0].mxu0
    %1531 = vmatprep.mubr.f32.mxu0 0.0
    %1532 = vmatmul.mubr.f32.gmra.mrb[0].mxu0 %v1340
    %v1533 = vpop.f32.mrb[0].mxu0
    %v1534 = vadd.f32 0.0, %v1533
    %v1535 = vpop.f32.mrb[0].mxu0
    %1536 = vmatprep.mubr.f32.mxu0 0.0
    %1537 = vmatmul.mubr.f32.gmra.mrb[0].mxu0 %v1343
    %v1538 = vpop.f32.mrb[0].mxu0
    %v1539 = vadd.f32 0.0, %v1538
    %v1540 = vpop.f32.mrb[0].mxu0
    %1541 = vmatprep.mubr.f32.mxu0 0.0
    %1542 = vmatmul.mubr.f32.gmra.mrb[0].mxu0 %v1346
    %v1543 = vpop.f32.mrb[0].mxu0
    %v1544 = vadd.f32 0.0, %v1543
    %v1545 = vpop.f32.mrb[0].mxu0
    %1546 = vmatprep.mubr.f32.mxu0 0.0
    %1547 = vmatmul.mubr.f32.gmra.mrb[0].mxu0 %v1349
    %v1548 = vpop.f32.mrb[0].mxu0
    %v1549 = vadd.f32 0.0, %v1548
    %v1550 = vpop.f32.mrb[0].mxu0
    %1551 = vmatprep.mubr.f32.mxu0 0.0
    %1552 = vmatmul.mubr.f32.gmra.mrb[0].mxu0 %v1352
    %v1553 = vpop.f32.mrb[0].mxu0
    %v1554 = vadd.f32 0.0, %v1553
    %v1555 = vpop.f32.mrb[0].mxu0
    %1556 = vmatprep.mubr.f32.mxu0 0.0
    %1557 = vmatmul.mubr.f32.gmra.mrb[0].mxu0 %v1355
    %v1558 = vpop.f32.mrb[0].mxu0
    %v1559 = vadd.f32 0.0, %v1558
    %v1560 = vpop.f32.mrb[0].mxu0
    %1561 = vmatprep.mubr.f32.mxu0 0.0
    %1562 = vmatmul.mubr.f32.gmra.mrb[0].mxu0 %v1358
    %v1563 = vpop.f32.mrb[0].mxu0
    %v1564 = vadd.f32 0.0, %v1563
    %v1565 = vpop.f32.mrb[0].mxu0
    %1566 = vmatprep.mubr.f32.mxu0 0.0
    %1567 = vmatmul.mubr.f32.gmra.mrb[0].mxu0 %v1361
    %v1568 = vpop.f32.mrb[0].mxu0
    %v1569 = vadd.f32 0.0, %v1568
    %v1570 = vpop.f32.mrb[0].mxu0
    %1571 = vmatprep.mubr.f32.mxu0 0.0
    %1572 = vmatmul.mubr.f32.gmra.mrb[0].mxu0 %v1364
    %v1573 = vpop.f32.mrb[0].mxu0
    %v1574 = vadd.f32 0.0, %v1573
    %v1575 = vpop.f32.mrb[0].mxu0
    %1576 = vmatprep.mubr.f32.mxu0 0.0
    %1577 = vmatmul.mubr.f32.gmra.mrb[0].mxu0 %v1367
    %v1578 = vpop.f32.mrb[0].mxu0
    %v1579 = vadd.f32 0.0, %v1578
    %v1580 = vpop.f32.mrb[0].mxu0
    %1581 = vmatprep.mubr.f32.mxu0 0.0
    %1582 = vmatmul.mubr.f32.gmra.mrb[0].mxu0 %v1370
    %v1583 = vpop.f32.mrb[0].mxu0
    %v1584 = vadd.f32 0.0, %v1583
    %v1585 = vpop.f32.mrb[0].mxu0
    %1586 = vmatprep.mubr.f32.mxu0 0.0
    %1587 = vmatmul.mubr.f32.gmra.mrb[0].mxu0 %v1373
    %v1588 = vpop.f32.mrb[0].mxu0
    %v1589 = vadd.f32 0.0, %v1588
    %v1590 = vpop.f32.mrb[0].mxu0
    %1591 = vmatprep.mubr.f32.mxu0 0.0
    %1592 = vmatmul.mubr.f32.gmra.mrb[0].mxu0 %v1376
    %v1593 = vpop.f32.mrb[0].mxu0
    %v1594 = vadd.f32 0.0, %v1593
    %v1595 = vpop.f32.mrb[0].mxu0
    %1596 = vmatprep.mubr.f32.mxu0 0.0
    %1597 = vmatmul.mubr.f32.gmra.mrb[0].mxu0 %v1379
    %v1598 = vpop.f32.mrb[0].mxu0
    %v1599 = vadd.f32 0.0, %v1598
    %v1600 = vpop.f32.mrb[0].mxu0
    %1601 = vmatprep.mubr.f32.mxu0 0.0
    %1602 = vmatmul.mubr.f32.gmra.mrb[0].mxu0 %v1382
    %v1603 = vpop.f32.mrb[0].mxu0
    %v1604 = vadd.f32 0.0, %v1603
    %v1605 = vpop.f32.mrb[0].mxu0
    %1606 = vmatprep.mubr.f32.mxu0 0.0
    %1607 = vmatmul.mubr.f32.gmra.mrb[0].mxu0 %v1385
    %v1608 = vpop.f32.mrb[0].mxu0
    %v1609 = vadd.f32 0.0, %v1608
    %v1610 = vpop.f32.mrb[0].mxu0
    %1611 = vdwg.mxu0
    %v1612 = vmul.f32 %v1454, %v1256
    %v1613 = vmul.f32 %v1459, %v1257
    %v1614 = vmul.f32 %v1464, %v1258
    %v1615 = vmul.f32 %v1469, %v1259
    %v1616 = vmul.f32 %v1474, %v1260
    %v1617 = vmul.f32 %v1479, %v1261
    %v1618 = vmul.f32 %v1484, %v1262
    %v1619 = vmul.f32 %v1489, %v1263
    %v1620 = vmul.f32 %v1494, %v1264
    %v1621 = vmul.f32 %v1499, %v1265
    %v1622 = vmul.f32 %v1504, %v1266
    %v1623 = vmul.f32 %v1509, %v1267
    %v1624 = vmul.f32 %v1514, %v1268
    %v1625 = vmul.f32 %v1519, %v1269
    %v1626 = vmul.f32 %v1524, %v1270
    %v1627 = vmul.f32 %v1529, %v1271
    %v1628 = vmul.f32 %v1534, %v1272
    %v1629 = vmul.f32 %v1539, %v1273
    %v1630 = vmul.f32 %v1544, %v1274
    %v1631 = vmul.f32 %v1549, %v1275
    %v1632 = vmul.f32 %v1554, %v1276
    %v1633 = vmul.f32 %v1559, %v1277
    %v1634 = vmul.f32 %v1564, %v1278
    %v1635 = vmul.f32 %v1569, %v1279
    %v1636 = vmul.f32 %v1574, %v1280
    %v1637 = vmul.f32 %v1579, %v1281
    %v1638 = vmul.f32 %v1584, %v1282
    %v1639 = vmul.f32 %v1589, %v1283
    %v1640 = vmul.f32 %v1594, %v1284
    %v1641 = vmul.f32 %v1599, %v1285
    %v1642 = vmul.f32 %v1604, %v1286
    %v1643 = vmul.f32 %v1609, %v1287
    %1648 = vrot.lane.b32.xlu0 %v136, 96
    %v1649 = vpop.permute.xlu0 %1648
    %1650 = vrot.lane.b32.xlu0 %v137, 96
    %v1651 = vpop.permute.xlu0 %1650
    %1652 = vrot.lane.b32.xlu0 %v138, 96
    %v1653 = vpop.permute.xlu0 %1652
    %1654 = vrot.lane.b32.xlu0 %v139, 96
    %v1655 = vpop.permute.xlu0 %1654
    %v1657 = vsel %vm64, %v1612, 0
    %v1660 = vsel %vm64, %v1613, 0
    %v1663 = vsel %vm64, %v1614, 0
    %v1666 = vsel %vm64, %v1615, 0
    %v1669 = vsel %vm64, %v1616, 0
    %v1672 = vsel %vm64, %v1617, 0
    %v1675 = vsel %vm64, %v1618, 0
    %v1678 = vsel %vm64, %v1619, 0
    %v1681 = vsel %vm64, %v1620, 0
    %v1684 = vsel %vm64, %v1621, 0
    %v1687 = vsel %vm64, %v1622, 0
    %v1690 = vsel %vm64, %v1623, 0
    %v1693 = vsel %vm64, %v1624, 0
    %v1696 = vsel %vm64, %v1625, 0
    %v1699 = vsel %vm64, %v1626, 0
    %v1702 = vsel %vm64, %v1627, 0
    %v1705 = vsel %vm64, %v1628, 0
    %v1708 = vsel %vm64, %v1629, 0
    %v1711 = vsel %vm64, %v1630, 0
    %v1714 = vsel %vm64, %v1631, 0
    %v1717 = vsel %vm64, %v1632, 0
    %v1720 = vsel %vm64, %v1633, 0
    %v1723 = vsel %vm64, %v1634, 0
    %v1726 = vsel %vm64, %v1635, 0
    %v1729 = vsel %vm64, %v1636, 0
    %v1732 = vsel %vm64, %v1637, 0
    %v1735 = vsel %vm64, %v1638, 0
    %v1738 = vsel %vm64, %v1639, 0
    %v1741 = vsel %vm64, %v1640, 0
    %v1744 = vsel %vm64, %v1641, 0
    %v1747 = vsel %vm64, %v1642, 0
    %v1750 = vsel %vm64, %v1643, 0
    %v1752 = vsel %vm64, %v1649, 0
    %v1754 = vsel %vm64, %v1651, 0
    %v1756 = vsel %vm64, %v1653, 0
    %v1758 = vsel %vm64, %v1655, 0
    %1760 = vmatprep.subr.mxu0 0.0
    %1761 = vmatpush1.xpose.msra.mxu0 %v1752
    %1762 = vmatprep.subr.mxu0 0.0
    %1763 = vmatpush1.xpose.msra.mxu0 %v1754
    %1764 = vmatprep.subr.mxu0 0.0
    %1765 = vmatpush1.xpose.msra.mxu0 %v1756
    %1766 = vmatprep.subr.mxu0 0.0
    %1767 = vmatpush1.xpose.msra.mxu0 %v1758
    %1768 = vmatprep.subr.mxu0 0.0
    %1769 = vmatpush1.xpose.msra.mxu0 0.0
    %1770 = vmatprep.subr.mxu0 0.0
    %1771 = vmatpush1.xpose.msra.mxu0 0.0
    %1772 = vmatprep.subr.mxu0 0.0
    %1773 = vmatpush1.xpose.msra.mxu0 0.0
    %1774 = vmatprep.subr.mxu0 0.0
    %1775 = vmatpush1.xpose.msra.mxu0 0.0
    %1776 = vmatprep.subr.mxu0 0.0
    %1777 = vmatpush1.xpose.msra.mxu0 0.0
    %1778 = vmatprep.subr.mxu0 0.0
    %1779 = vmatpush1.xpose.msra.mxu0 0.0
    %1780 = vmatprep.subr.mxu0 0.0
    %1781 = vmatpush1.xpose.msra.mxu0 0.0
    %1782 = vmatprep.subr.mxu0 0.0
    %1783 = vmatpush1.xpose.msra.mxu0 0.0
    %1784 = vmatprep.subr.mxu0 0.0
    %1785 = vmatpush1.xpose.msra.mxu0 0.0
    %1786 = vmatprep.subr.mxu0 0.0
    %1787 = vmatpush1.xpose.msra.mxu0 0.0
    %1788 = vmatprep.subr.mxu0 0.0
    %1789 = vmatpush1.xpose.msra.mxu0 0.0
    %1790 = vmatprep.subr.mxu0 0.0
    %1791 = vmatpush1.xpose.msra.mxu0 0.0
    %1792 = vmatprep.subr.mxu0 0.0
    %1793 = vmatpush1.xpose.msra.mxu0 0.0
    %1794 = vmatprep.subr.mxu0 0.0
    %1795 = vmatpush1.xpose.msra.mxu0 0.0
    %1796 = vmatprep.subr.mxu0 0.0
    %1797 = vmatpush1.xpose.msra.mxu0 0.0
    %1798 = vmatprep.subr.mxu0 0.0
    %1799 = vmatpush1.xpose.msra.mxu0 0.0
    %1800 = vmatprep.subr.mxu0 0.0
    %1801 = vmatpush1.xpose.msra.mxu0 0.0
    %1802 = vmatprep.subr.mxu0 0.0
    %1803 = vmatpush1.xpose.msra.mxu0 0.0
    %1804 = vmatprep.subr.mxu0 0.0
    %1805 = vmatpush1.xpose.msra.mxu0 0.0
    %1806 = vmatprep.subr.mxu0 0.0
    %1807 = vmatpush1.xpose.msra.mxu0 0.0
    %1808 = vmatprep.subr.mxu0 0.0
    %1809 = vmatpush1.xpose.msra.mxu0 0.0
    %1810 = vmatprep.subr.mxu0 0.0
    %1811 = vmatpush1.xpose.msra.mxu0 0.0
    %1812 = vmatprep.subr.mxu0 0.0
    %1813 = vmatpush1.xpose.msra.mxu0 0.0
    %1814 = vmatprep.subr.mxu0 0.0
    %1815 = vmatpush1.xpose.msra.mxu0 0.0
    %1816 = vmatprep.subr.mxu0 0.0
    %1817 = vmatpush1.xpose.msra.mxu0 0.0
    %1818 = vmatprep.subr.mxu0 0.0
    %1819 = vmatpush1.xpose.msra.mxu0 0.0
    %1820 = vmatprep.subr.mxu0 0.0
    %1821 = vmatpush1.xpose.msra.mxu0 0.0
    %1822 = vmatprep.subr.mxu0 0.0
    %1823 = vmatpush1.xpose.msra.mxu0 0.0
    %1824 = vmatprep.mubr.f32.mxu0 0.0
    %1825 = vmatmul.mubr.f32.gmra.mrb[0].mxu0 %v1657
    %v1826 = vpop.f32.mrb[0].mxu0
    %v1827 = vadd.f32 0.0, %v1826
    %v1828 = vpop.f32.mrb[0].mxu0
    %1829 = vmatprep.mubr.f32.mxu0 0.0
    %1830 = vmatmul.mubr.f32.gmra.mrb[0].mxu0 %v1660
    %v1831 = vpop.f32.mrb[0].mxu0
    %v1832 = vadd.f32 0.0, %v1831
    %v1833 = vpop.f32.mrb[0].mxu0
    %1834 = vmatprep.mubr.f32.mxu0 0.0
    %1835 = vmatmul.mubr.f32.gmra.mrb[0].mxu0 %v1663
    %v1836 = vpop.f32.mrb[0].mxu0
    %v1837 = vadd.f32 0.0, %v1836
    %v1838 = vpop.f32.mrb[0].mxu0
    %1839 = vmatprep.mubr.f32.mxu0 0.0
    %1840 = vmatmul.mubr.f32.gmra.mrb[0].mxu0 %v1666
    %v1841 = vpop.f32.mrb[0].mxu0
    %v1842 = vadd.f32 0.0, %v1841
    %v1843 = vpop.f32.mrb[0].mxu0
    %1844 = vmatprep.mubr.f32.mxu0 0.0
    %1845 = vmatmul.mubr.f32.gmra.mrb[0].mxu0 %v1669
    %v1846 = vpop.f32.mrb[0].mxu0
    %v1847 = vadd.f32 0.0, %v1846
    %v1848 = vpop.f32.mrb[0].mxu0
    %1849 = vmatprep.mubr.f32.mxu0 0.0
    %1850 = vmatmul.mubr.f32.gmra.mrb[0].mxu0 %v1672
    %v1851 = vpop.f32.mrb[0].mxu0
    %v1852 = vadd.f32 0.0, %v1851
    %v1853 = vpop.f32.mrb[0].mxu0
    %1854 = vmatprep.mubr.f32.mxu0 0.0
    %1855 = vmatmul.mubr.f32.gmra.mrb[0].mxu0 %v1675
    %v1856 = vpop.f32.mrb[0].mxu0
    %v1857 = vadd.f32 0.0, %v1856
    %v1858 = vpop.f32.mrb[0].mxu0
    %1859 = vmatprep.mubr.f32.mxu0 0.0
    %1860 = vmatmul.mubr.f32.gmra.mrb[0].mxu0 %v1678
    %v1861 = vpop.f32.mrb[0].mxu0
    %v1862 = vadd.f32 0.0, %v1861
    %v1863 = vpop.f32.mrb[0].mxu0
    %1864 = vmatprep.mubr.f32.mxu0 0.0
    %1865 = vmatmul.mubr.f32.gmra.mrb[0].mxu0 %v1681
    %v1866 = vpop.f32.mrb[0].mxu0
    %v1867 = vadd.f32 0.0, %v1866
    %v1868 = vpop.f32.mrb[0].mxu0
    %1869 = vmatprep.mubr.f32.mxu0 0.0
    %1870 = vmatmul.mubr.f32.gmra.mrb[0].mxu0 %v1684
    %v1871 = vpop.f32.mrb[0].mxu0
    %v1872 = vadd.f32 0.0, %v1871
    %v1873 = vpop.f32.mrb[0].mxu0
    %1874 = vmatprep.mubr.f32.mxu0 0.0
    %1875 = vmatmul.mubr.f32.gmra.mrb[0].mxu0 %v1687
    %v1876 = vpop.f32.mrb[0].mxu0
    %v1877 = vadd.f32 0.0, %v1876
    %v1878 = vpop.f32.mrb[0].mxu0
    %1879 = vmatprep.mubr.f32.mxu0 0.0
    %1880 = vmatmul.mubr.f32.gmra.mrb[0].mxu0 %v1690
    %v1881 = vpop.f32.mrb[0].mxu0
    %v1882 = vadd.f32 0.0, %v1881
    %v1883 = vpop.f32.mrb[0].mxu0
    %1884 = vmatprep.mubr.f32.mxu0 0.0
    %1885 = vmatmul.mubr.f32.gmra.mrb[0].mxu0 %v1693
    %v1886 = vpop.f32.mrb[0].mxu0
    %v1887 = vadd.f32 0.0, %v1886
    %v1888 = vpop.f32.mrb[0].mxu0
    %1889 = vmatprep.mubr.f32.mxu0 0.0
    %1890 = vmatmul.mubr.f32.gmra.mrb[0].mxu0 %v1696
    %v1891 = vpop.f32.mrb[0].mxu0
    %v1892 = vadd.f32 0.0, %v1891
    %v1893 = vpop.f32.mrb[0].mxu0
    %1894 = vmatprep.mubr.f32.mxu0 0.0
    %1895 = vmatmul.mubr.f32.gmra.mrb[0].mxu0 %v1699
    %v1896 = vpop.f32.mrb[0].mxu0
    %v1897 = vadd.f32 0.0, %v1896
    %v1898 = vpop.f32.mrb[0].mxu0
    %1899 = vmatprep.mubr.f32.mxu0 0.0
    %1900 = vmatmul.mubr.f32.gmra.mrb[0].mxu0 %v1702
    %v1901 = vpop.f32.mrb[0].mxu0
    %v1902 = vadd.f32 0.0, %v1901
    %v1903 = vpop.f32.mrb[0].mxu0
    %1904 = vmatprep.mubr.f32.mxu0 0.0
    %1905 = vmatmul.mubr.f32.gmra.mrb[0].mxu0 %v1705
    %v1906 = vpop.f32.mrb[0].mxu0
    %v1907 = vadd.f32 0.0, %v1906
    %v1908 = vpop.f32.mrb[0].mxu0
    %1909 = vmatprep.mubr.f32.mxu0 0.0
    %1910 = vmatmul.mubr.f32.gmra.mrb[0].mxu0 %v1708
    %v1911 = vpop.f32.mrb[0].mxu0
    %v1912 = vadd.f32 0.0, %v1911
    %v1913 = vpop.f32.mrb[0].mxu0
    %1914 = vmatprep.mubr.f32.mxu0 0.0
    %1915 = vmatmul.mubr.f32.gmra.mrb[0].mxu0 %v1711
    %v1916 = vpop.f32.mrb[0].mxu0
    %v1917 = vadd.f32 0.0, %v1916
    %v1918 = vpop.f32.mrb[0].mxu0
    %1919 = vmatprep.mubr.f32.mxu0 0.0
    %1920 = vmatmul.mubr.f32.gmra.mrb[0].mxu0 %v1714
    %v1921 = vpop.f32.mrb[0].mxu0
    %v1922 = vadd.f32 0.0, %v1921
    %v1923 = vpop.f32.mrb[0].mxu0
    %1924 = vmatprep.mubr.f32.mxu0 0.0
    %1925 = vmatmul.mubr.f32.gmra.mrb[0].mxu0 %v1717
    %v1926 = vpop.f32.mrb[0].mxu0
    %v1927 = vadd.f32 0.0, %v1926
    %v1928 = vpop.f32.mrb[0].mxu0
    %1929 = vmatprep.mubr.f32.mxu0 0.0
    %1930 = vmatmul.mubr.f32.gmra.mrb[0].mxu0 %v1720
    %v1931 = vpop.f32.mrb[0].mxu0
    %v1932 = vadd.f32 0.0, %v1931
    %v1933 = vpop.f32.mrb[0].mxu0
    %1934 = vmatprep.mubr.f32.mxu0 0.0
    %1935 = vmatmul.mubr.f32.gmra.mrb[0].mxu0 %v1723
    %v1936 = vpop.f32.mrb[0].mxu0
    %v1937 = vadd.f32 0.0, %v1936
    %v1938 = vpop.f32.mrb[0].mxu0
    %1939 = vmatprep.mubr.f32.mxu0 0.0
    %1940 = vmatmul.mubr.f32.gmra.mrb[0].mxu0 %v1726
    %v1941 = vpop.f32.mrb[0].mxu0
    %v1942 = vadd.f32 0.0, %v1941
    %v1943 = vpop.f32.mrb[0].mxu0
    %1944 = vmatprep.mubr.f32.mxu0 0.0
    %1945 = vmatmul.mubr.f32.gmra.mrb[0].mxu0 %v1729
    %v1946 = vpop.f32.mrb[0].mxu0
    %v1947 = vadd.f32 0.0, %v1946
    %v1948 = vpop.f32.mrb[0].mxu0
    %1949 = vmatprep.mubr.f32.mxu0 0.0
    %1950 = vmatmul.mubr.f32.gmra.mrb[0].mxu0 %v1732
    %v1951 = vpop.f32.mrb[0].mxu0
    %v1952 = vadd.f32 0.0, %v1951
    %v1953 = vpop.f32.mrb[0].mxu0
    %1954 = vmatprep.mubr.f32.mxu0 0.0
    %1955 = vmatmul.mubr.f32.gmra.mrb[0].mxu0 %v1735
    %v1956 = vpop.f32.mrb[0].mxu0
    %v1957 = vadd.f32 0.0, %v1956
    %v1958 = vpop.f32.mrb[0].mxu0
    %1959 = vmatprep.mubr.f32.mxu0 0.0
    %1960 = vmatmul.mubr.f32.gmra.mrb[0].mxu0 %v1738
    %v1961 = vpop.f32.mrb[0].mxu0
    %v1962 = vadd.f32 0.0, %v1961
    %v1963 = vpop.f32.mrb[0].mxu0
    %1964 = vmatprep.mubr.f32.mxu0 0.0
    %1965 = vmatmul.mubr.f32.gmra.mrb[0].mxu0 %v1741
    %v1966 = vpop.f32.mrb[0].mxu0
    %v1967 = vadd.f32 0.0, %v1966
    %v1968 = vpop.f32.mrb[0].mxu0
    %1969 = vmatprep.mubr.f32.mxu0 0.0
    %1970 = vmatmul.mubr.f32.gmra.mrb[0].mxu0 %v1744
    %v1971 = vpop.f32.mrb[0].mxu0
    %v1972 = vadd.f32 0.0, %v1971
    %v1973 = vpop.f32.mrb[0].mxu0
    %1974 = vmatprep.mubr.f32.mxu0 0.0
    %1975 = vmatmul.mubr.f32.gmra.mrb[0].mxu0 %v1747
    %v1976 = vpop.f32.mrb[0].mxu0
    %v1977 = vadd.f32 0.0, %v1976
    %v1978 = vpop.f32.mrb[0].mxu0
    %1979 = vmatprep.mubr.f32.mxu0 0.0
    %1980 = vmatmul.mubr.f32.gmra.mrb[0].mxu0 %v1750
    %v1981 = vpop.f32.mrb[0].mxu0
    %v1982 = vadd.f32 0.0, %v1981
    %v1983 = vpop.f32.mrb[0].mxu0
    %1984 = vdwg.mxu0
    %v1985 = vmul.f32 %v1827, 0.5
    %v1986 = vmul.f32 %v1832, 0.5
    %v1987 = vmul.f32 %v1837, 0.5
    %v1988 = vmul.f32 %v1842, 0.5
    %v1989 = vmul.f32 %v1847, 0.5
    %v1990 = vmul.f32 %v1852, 0.5
    %v1991 = vmul.f32 %v1857, 0.5
    %v1992 = vmul.f32 %v1862, 0.5
    %v1993 = vmul.f32 %v1867, 0.5
    %v1994 = vmul.f32 %v1872, 0.5
    %v1995 = vmul.f32 %v1877, 0.5
    %v1996 = vmul.f32 %v1882, 0.5
    %v1997 = vmul.f32 %v1887, 0.5
    %v1998 = vmul.f32 %v1892, 0.5
    %v1999 = vmul.f32 %v1897, 0.5
    %v2000 = vmul.f32 %v1902, 0.5
    %v2001 = vmul.f32 %v1907, 0.5
    %v2002 = vmul.f32 %v1912, 0.5
    %v2003 = vmul.f32 %v1917, 0.5
    %v2004 = vmul.f32 %v1922, 0.5
    %v2005 = vmul.f32 %v1927, 0.5
    %v2006 = vmul.f32 %v1932, 0.5
    %v2007 = vmul.f32 %v1937, 0.5
    %v2008 = vmul.f32 %v1942, 0.5
    %v2009 = vmul.f32 %v1947, 0.5
    %v2010 = vmul.f32 %v1952, 0.5
    %v2011 = vmul.f32 %v1957, 0.5
    %v2012 = vmul.f32 %v1962, 0.5
    %v2013 = vmul.f32 %v1967, 0.5
    %v2014 = vmul.f32 %v1972, 0.5
    %v2015 = vmul.f32 %v1977, 0.5
    %v2016 = vmul.f32 %v1982, 0.5
    %v2017 = vadd.f32 %v1985, %v1000
    %v2018 = vadd.f32 %v1986, %v1001
    %v2019 = vadd.f32 %v1987, %v1002
    %v2020 = vadd.f32 %v1988, %v1003
    %v2021 = vadd.f32 %v1989, %v1004
    %v2022 = vadd.f32 %v1990, %v1005
    %v2023 = vadd.f32 %v1991, %v1006
    %v2024 = vadd.f32 %v1992, %v1007
    %v2025 = vadd.f32 %v1993, %v1008
    %v2026 = vadd.f32 %v1994, %v1009
    %v2027 = vadd.f32 %v1995, %v1010
    %v2028 = vadd.f32 %v1996, %v1011
    %v2029 = vadd.f32 %v1997, %v1012
    %v2030 = vadd.f32 %v1998, %v1013
    %v2031 = vadd.f32 %v1999, %v1014
    %v2032 = vadd.f32 %v2000, %v1015
    %v2033 = vadd.f32 %v2001, %v1016
    %v2034 = vadd.f32 %v2002, %v1017
    %v2035 = vadd.f32 %v2003, %v1018
    %v2036 = vadd.f32 %v2004, %v1019
    %v2037 = vadd.f32 %v2005, %v1020
    %v2038 = vadd.f32 %v2006, %v1021
    %v2039 = vadd.f32 %v2007, %v1022
    %v2040 = vadd.f32 %v2008, %v1023
    %v2041 = vadd.f32 %v2009, %v1024
    %v2042 = vadd.f32 %v2010, %v1025
    %v2043 = vadd.f32 %v2011, %v1026
    %v2044 = vadd.f32 %v2012, %v1027
    %v2045 = vadd.f32 %v2013, %v1028
    %v2046 = vadd.f32 %v2014, %v1029
    %v2047 = vadd.f32 %v2015, %v1030
    %v2048 = vadd.f32 %v2016, %v1031
    %v2049 = vsel %vm64, %v2017, -inf
    %2050 = vmax.xlane.f32.xlu0 %v2049
    %v2051 = vpop.xlane.xlu0 %2050
    %v2052 = vsel %vm64, %v2018, -inf
    %2053 = vmax.xlane.f32.xlu0 %v2052
    %v2054 = vpop.xlane.xlu0 %2053
    %v2055 = vsel %vm64, %v2019, -inf
    %2056 = vmax.xlane.f32.xlu0 %v2055
    %v2057 = vpop.xlane.xlu0 %2056
    %v2058 = vsel %vm64, %v2020, -inf
    %2059 = vmax.xlane.f32.xlu0 %v2058
    %v2060 = vpop.xlane.xlu0 %2059
    %v2061 = vsel %vm64, %v2021, -inf
    %2062 = vmax.xlane.f32.xlu0 %v2061
    %v2063 = vpop.xlane.xlu0 %2062
    %v2064 = vsel %vm64, %v2022, -inf
    %2065 = vmax.xlane.f32.xlu0 %v2064
    %v2066 = vpop.xlane.xlu0 %2065
    %v2067 = vsel %vm64, %v2023, -inf
    %2068 = vmax.xlane.f32.xlu0 %v2067
    %v2069 = vpop.xlane.xlu0 %2068
    %v2070 = vsel %vm64, %v2024, -inf
    %2071 = vmax.xlane.f32.xlu0 %v2070
    %v2072 = vpop.xlane.xlu0 %2071
    %v2073 = vsel %vm64, %v2025, -inf
    %2074 = vmax.xlane.f32.xlu0 %v2073
    %v2075 = vpop.xlane.xlu0 %2074
    %v2076 = vsel %vm64, %v2026, -inf
    %2077 = vmax.xlane.f32.xlu0 %v2076
    %v2078 = vpop.xlane.xlu0 %2077
    %v2079 = vsel %vm64, %v2027, -inf
    %2080 = vmax.xlane.f32.xlu0 %v2079
    %v2081 = vpop.xlane.xlu0 %2080
    %v2082 = vsel %vm64, %v2028, -inf
    %2083 = vmax.xlane.f32.xlu0 %v2082
    %v2084 = vpop.xlane.xlu0 %2083
    %v2085 = vsel %vm64, %v2029, -inf
    %2086 = vmax.xlane.f32.xlu0 %v2085
    %v2087 = vpop.xlane.xlu0 %2086
    %v2088 = vsel %vm64, %v2030, -inf
    %2089 = vmax.xlane.f32.xlu0 %v2088
    %v2090 = vpop.xlane.xlu0 %2089
    %v2091 = vsel %vm64, %v2031, -inf
    %2092 = vmax.xlane.f32.xlu0 %v2091
    %v2093 = vpop.xlane.xlu0 %2092
    %v2094 = vsel %vm64, %v2032, -inf
    %2095 = vmax.xlane.f32.xlu0 %v2094
    %v2096 = vpop.xlane.xlu0 %2095
    %v2097 = vsel %vm64, %v2033, -inf
    %2098 = vmax.xlane.f32.xlu0 %v2097
    %v2099 = vpop.xlane.xlu0 %2098
    %v2100 = vsel %vm64, %v2034, -inf
    %2101 = vmax.xlane.f32.xlu0 %v2100
    %v2102 = vpop.xlane.xlu0 %2101
    %v2103 = vsel %vm64, %v2035, -inf
    %2104 = vmax.xlane.f32.xlu0 %v2103
    %v2105 = vpop.xlane.xlu0 %2104
    %v2106 = vsel %vm64, %v2036, -inf
    %2107 = vmax.xlane.f32.xlu0 %v2106
    %v2108 = vpop.xlane.xlu0 %2107
    %v2109 = vsel %vm64, %v2037, -inf
    %2110 = vmax.xlane.f32.xlu0 %v2109
    %v2111 = vpop.xlane.xlu0 %2110
    %v2112 = vsel %vm64, %v2038, -inf
    %2113 = vmax.xlane.f32.xlu0 %v2112
    %v2114 = vpop.xlane.xlu0 %2113
    %v2115 = vsel %vm64, %v2039, -inf
    %2116 = vmax.xlane.f32.xlu0 %v2115
    %v2117 = vpop.xlane.xlu0 %2116
    %v2118 = vsel %vm64, %v2040, -inf
    %2119 = vmax.xlane.f32.xlu0 %v2118
    %v2120 = vpop.xlane.xlu0 %2119
    %v2121 = vsel %vm64, %v2041, -inf
    %2122 = vmax.xlane.f32.xlu0 %v2121
    %v2123 = vpop.xlane.xlu0 %2122
    %v2124 = vsel %vm64, %v2042, -inf
    %2125 = vmax.xlane.f32.xlu0 %v2124
    %v2126 = vpop.xlane.xlu0 %2125
    %v2127 = vsel %vm64, %v2043, -inf
    %2128 = vmax.xlane.f32.xlu0 %v2127
    %v2129 = vpop.xlane.xlu0 %2128
    %v2130 = vsel %vm64, %v2044, -inf
    %2131 = vmax.xlane.f32.xlu0 %v2130
    %v2132 = vpop.xlane.xlu0 %2131
    %v2133 = vsel %vm64, %v2045, -inf
    %2134 = vmax.xlane.f32.xlu0 %v2133
    %v2135 = vpop.xlane.xlu0 %2134
    %v2136 = vsel %vm64, %v2046, -inf
    %2137 = vmax.xlane.f32.xlu0 %v2136
    %v2138 = vpop.xlane.xlu0 %2137
    %v2139 = vsel %vm64, %v2047, -inf
    %2140 = vmax.xlane.f32.xlu0 %v2139
    %v2141 = vpop.xlane.xlu0 %2140
    %v2142 = vsel %vm64, %v2048, -inf
    %2143 = vmax.xlane.f32.xlu0 %v2142
    %v2144 = vpop.xlane.xlu0 %2143
    %v2145 = vsub.f32 %v2017, %v2051
    %v2146 = vsub.f32 %v2018, %v2054
    %v2147 = vsub.f32 %v2019, %v2057
    %v2148 = vsub.f32 %v2020, %v2060
    %v2149 = vsub.f32 %v2021, %v2063
    %v2150 = vsub.f32 %v2022, %v2066
    %v2151 = vsub.f32 %v2023, %v2069
    %v2152 = vsub.f32 %v2024, %v2072
    %v2153 = vsub.f32 %v2025, %v2075
    %v2154 = vsub.f32 %v2026, %v2078
    %v2155 = vsub.f32 %v2027, %v2081
    %v2156 = vsub.f32 %v2028, %v2084
    %v2157 = vsub.f32 %v2029, %v2087
    %v2158 = vsub.f32 %v2030, %v2090
    %v2159 = vsub.f32 %v2031, %v2093
    %v2160 = vsub.f32 %v2032, %v2096
    %v2161 = vsub.f32 %v2033, %v2099
    %v2162 = vsub.f32 %v2034, %v2102
    %v2163 = vsub.f32 %v2035, %v2105
    %v2164 = vsub.f32 %v2036, %v2108
    %v2165 = vsub.f32 %v2037, %v2111
    %v2166 = vsub.f32 %v2038, %v2114
    %v2167 = vsub.f32 %v2039, %v2117
    %v2168 = vsub.f32 %v2040, %v2120
    %v2169 = vsub.f32 %v2041, %v2123
    %v2170 = vsub.f32 %v2042, %v2126
    %v2171 = vsub.f32 %v2043, %v2129
    %v2172 = vsub.f32 %v2044, %v2132
    %v2173 = vsub.f32 %v2045, %v2135
    %v2174 = vsub.f32 %v2046, %v2138
    %v2175 = vsub.f32 %v2047, %v2141
    %v2176 = vsub.f32 %v2048, %v2144
    %v2177 = vmul.f32 %v2145, 1.442695
    %v2178 = vpow.pop %v2177
    %v2179 = vmul.f32 %v2146, 1.442695
    %v2180 = vpow.pop %v2179
    %v2181 = vmul.f32 %v2147, 1.442695
    %v2182 = vpow.pop %v2181
    %v2183 = vmul.f32 %v2148, 1.442695
    %v2184 = vpow.pop %v2183
    %v2185 = vmul.f32 %v2149, 1.442695
    %v2186 = vpow.pop %v2185
    %v2187 = vmul.f32 %v2150, 1.442695
    %v2188 = vpow.pop %v2187
    %v2189 = vmul.f32 %v2151, 1.442695
    %v2190 = vpow.pop %v2189
    %v2191 = vmul.f32 %v2152, 1.442695
    %v2192 = vpow.pop %v2191
    %v2193 = vmul.f32 %v2153, 1.442695
    %v2194 = vpow.pop %v2193
    %v2195 = vmul.f32 %v2154, 1.442695
    %v2196 = vpow.pop %v2195
    %v2197 = vmul.f32 %v2155, 1.442695
    %v2198 = vpow.pop %v2197
    %v2199 = vmul.f32 %v2156, 1.442695
    %v2200 = vpow.pop %v2199
    %v2201 = vmul.f32 %v2157, 1.442695
    %v2202 = vpow.pop %v2201
    %v2203 = vmul.f32 %v2158, 1.442695
    %v2204 = vpow.pop %v2203
    %v2205 = vmul.f32 %v2159, 1.442695
    %v2206 = vpow.pop %v2205
    %v2207 = vmul.f32 %v2160, 1.442695
    %v2208 = vpow.pop %v2207
    %v2209 = vmul.f32 %v2161, 1.442695
    %v2210 = vpow.pop %v2209
    %v2211 = vmul.f32 %v2162, 1.442695
    %v2212 = vpow.pop %v2211
    %v2213 = vmul.f32 %v2163, 1.442695
    %v2214 = vpow.pop %v2213
    %v2215 = vmul.f32 %v2164, 1.442695
    %v2216 = vpow.pop %v2215
    %v2217 = vmul.f32 %v2165, 1.442695
    %v2218 = vpow.pop %v2217
    %v2219 = vmul.f32 %v2166, 1.442695
    %v2220 = vpow.pop %v2219
    %v2221 = vmul.f32 %v2167, 1.442695
    %v2222 = vpow.pop %v2221
    %v2223 = vmul.f32 %v2168, 1.442695
    %v2224 = vpow.pop %v2223
    %v2225 = vmul.f32 %v2169, 1.442695
    %v2226 = vpow.pop %v2225
    %v2227 = vmul.f32 %v2170, 1.442695
    %v2228 = vpow.pop %v2227
    %v2229 = vmul.f32 %v2171, 1.442695
    %v2230 = vpow.pop %v2229
    %v2231 = vmul.f32 %v2172, 1.442695
    %v2232 = vpow.pop %v2231
    %v2233 = vmul.f32 %v2173, 1.442695
    %v2234 = vpow.pop %v2233
    %v2235 = vmul.f32 %v2174, 1.442695
    %v2236 = vpow.pop %v2235
    %v2237 = vmul.f32 %v2175, 1.442695
    %v2238 = vpow.pop %v2237
    %v2239 = vmul.f32 %v2176, 1.442695
    %v2240 = vpow.pop %v2239
    %v2241 = vsel %vm64, %v2178, 0.0
    %2242 = vadd.xlane.f32.xlu0 %v2241
    %v2243 = vpop.xlane.xlu0 %2242
    %v2244 = vsel %vm64, %v2180, 0.0
    %2245 = vadd.xlane.f32.xlu0 %v2244
    %v2246 = vpop.xlane.xlu0 %2245
    %v2247 = vsel %vm64, %v2182, 0.0
    %2248 = vadd.xlane.f32.xlu0 %v2247
    %v2249 = vpop.xlane.xlu0 %2248
    %v2250 = vsel %vm64, %v2184, 0.0
    %2251 = vadd.xlane.f32.xlu0 %v2250
    %v2252 = vpop.xlane.xlu0 %2251
    %v2253 = vsel %vm64, %v2186, 0.0
    %2254 = vadd.xlane.f32.xlu0 %v2253
    %v2255 = vpop.xlane.xlu0 %2254
    %v2256 = vsel %vm64, %v2188, 0.0
    %2257 = vadd.xlane.f32.xlu0 %v2256
    %v2258 = vpop.xlane.xlu0 %2257
    %v2259 = vsel %vm64, %v2190, 0.0
    %2260 = vadd.xlane.f32.xlu0 %v2259
    %v2261 = vpop.xlane.xlu0 %2260
    %v2262 = vsel %vm64, %v2192, 0.0
    %2263 = vadd.xlane.f32.xlu0 %v2262
    %v2264 = vpop.xlane.xlu0 %2263
    %v2265 = vsel %vm64, %v2194, 0.0
    %2266 = vadd.xlane.f32.xlu0 %v2265
    %v2267 = vpop.xlane.xlu0 %2266
    %v2268 = vsel %vm64, %v2196, 0.0
    %2269 = vadd.xlane.f32.xlu0 %v2268
    %v2270 = vpop.xlane.xlu0 %2269
    %v2271 = vsel %vm64, %v2198, 0.0
    %2272 = vadd.xlane.f32.xlu0 %v2271
    %v2273 = vpop.xlane.xlu0 %2272
    %v2274 = vsel %vm64, %v2200, 0.0
    %2275 = vadd.xlane.f32.xlu0 %v2274
    %v2276 = vpop.xlane.xlu0 %2275
    %v2277 = vsel %vm64, %v2202, 0.0
    %2278 = vadd.xlane.f32.xlu0 %v2277
    %v2279 = vpop.xlane.xlu0 %2278
    %v2280 = vsel %vm64, %v2204, 0.0
    %2281 = vadd.xlane.f32.xlu0 %v2280
    %v2282 = vpop.xlane.xlu0 %2281
    %v2283 = vsel %vm64, %v2206, 0.0
    %2284 = vadd.xlane.f32.xlu0 %v2283
    %v2285 = vpop.xlane.xlu0 %2284
    %v2286 = vsel %vm64, %v2208, 0.0
    %2287 = vadd.xlane.f32.xlu0 %v2286
    %v2288 = vpop.xlane.xlu0 %2287
    %v2289 = vsel %vm64, %v2210, 0.0
    %2290 = vadd.xlane.f32.xlu0 %v2289
    %v2291 = vpop.xlane.xlu0 %2290
    %v2292 = vsel %vm64, %v2212, 0.0
    %2293 = vadd.xlane.f32.xlu0 %v2292
    %v2294 = vpop.xlane.xlu0 %2293
    %v2295 = vsel %vm64, %v2214, 0.0
    %2296 = vadd.xlane.f32.xlu0 %v2295
    %v2297 = vpop.xlane.xlu0 %2296
    %v2298 = vsel %vm64, %v2216, 0.0
    %2299 = vadd.xlane.f32.xlu0 %v2298
    %v2300 = vpop.xlane.xlu0 %2299
    %v2301 = vsel %vm64, %v2218, 0.0
    %2302 = vadd.xlane.f32.xlu0 %v2301
    %v2303 = vpop.xlane.xlu0 %2302
    %v2304 = vsel %vm64, %v2220, 0.0
    %2305 = vadd.xlane.f32.xlu0 %v2304
    %v2306 = vpop.xlane.xlu0 %2305
    %v2307 = vsel %vm64, %v2222, 0.0
    %2308 = vadd.xlane.f32.xlu0 %v2307
    %v2309 = vpop.xlane.xlu0 %2308
    %v2310 = vsel %vm64, %v2224, 0.0
    %2311 = vadd.xlane.f32.xlu0 %v2310
    %v2312 = vpop.xlane.xlu0 %2311
    %v2313 = vsel %vm64, %v2226, 0.0
    %2314 = vadd.xlane.f32.xlu0 %v2313
    %v2315 = vpop.xlane.xlu0 %2314
    %v2316 = vsel %vm64, %v2228, 0.0
    %2317 = vadd.xlane.f32.xlu0 %v2316
    %v2318 = vpop.xlane.xlu0 %2317
    %v2319 = vsel %vm64, %v2230, 0.0
    %2320 = vadd.xlane.f32.xlu0 %v2319
    %v2321 = vpop.xlane.xlu0 %2320
    %v2322 = vsel %vm64, %v2232, 0.0
    %2323 = vadd.xlane.f32.xlu0 %v2322
    %v2324 = vpop.xlane.xlu0 %2323
    %v2325 = vsel %vm64, %v2234, 0.0
    %2326 = vadd.xlane.f32.xlu0 %v2325
    %v2327 = vpop.xlane.xlu0 %2326
    %v2328 = vsel %vm64, %v2236, 0.0
    %2329 = vadd.xlane.f32.xlu0 %v2328
    %v2330 = vpop.xlane.xlu0 %2329
    %v2331 = vsel %vm64, %v2238, 0.0
    %2332 = vadd.xlane.f32.xlu0 %v2331
    %v2333 = vpop.xlane.xlu0 %2332
    %v2334 = vsel %vm64, %v2240, 0.0
    %2335 = vadd.xlane.f32.xlu0 %v2334
    %v2336 = vpop.xlane.xlu0 %2335
    %v2337 = vrcp.pop %v2243
    %v2338 = vrcp.pop %v2246
    %v2339 = vrcp.pop %v2249
    %v2340 = vrcp.pop %v2252
    %v2341 = vrcp.pop %v2255
    %v2342 = vrcp.pop %v2258
    %v2343 = vrcp.pop %v2261
    %v2344 = vrcp.pop %v2264
    %v2345 = vrcp.pop %v2267
    %v2346 = vrcp.pop %v2270
    %v2347 = vrcp.pop %v2273
    %v2348 = vrcp.pop %v2276
    %v2349 = vrcp.pop %v2279
    %v2350 = vrcp.pop %v2282
    %v2351 = vrcp.pop %v2285
    %v2352 = vrcp.pop %v2288
    %v2353 = vrcp.pop %v2291
    %v2354 = vrcp.pop %v2294
    %v2355 = vrcp.pop %v2297
    %v2356 = vrcp.pop %v2300
    %v2357 = vrcp.pop %v2303
    %v2358 = vrcp.pop %v2306
    %v2359 = vrcp.pop %v2309
    %v2360 = vrcp.pop %v2312
    %v2361 = vrcp.pop %v2315
    %v2362 = vrcp.pop %v2318
    %v2363 = vrcp.pop %v2321
    %v2364 = vrcp.pop %v2324
    %v2365 = vrcp.pop %v2327
    %v2366 = vrcp.pop %v2330
    %v2367 = vrcp.pop %v2333
    %v2368 = vrcp.pop %v2336
    %v2369 = vmul.f32 %v2178, %v2337
    %v2370 = vmul.f32 %v2180, %v2338
    %v2371 = vmul.f32 %v2182, %v2339
    %v2372 = vmul.f32 %v2184, %v2340
    %v2373 = vmul.f32 %v2186, %v2341
    %v2374 = vmul.f32 %v2188, %v2342
    %v2375 = vmul.f32 %v2190, %v2343
    %v2376 = vmul.f32 %v2192, %v2344
    %v2377 = vmul.f32 %v2194, %v2345
    %v2378 = vmul.f32 %v2196, %v2346
    %v2379 = vmul.f32 %v2198, %v2347
    %v2380 = vmul.f32 %v2200, %v2348
    %v2381 = vmul.f32 %v2202, %v2349
    %v2382 = vmul.f32 %v2204, %v2350
    %v2383 = vmul.f32 %v2206, %v2351
    %v2384 = vmul.f32 %v2208, %v2352
    %v2385 = vmul.f32 %v2210, %v2353
    %v2386 = vmul.f32 %v2212, %v2354
    %v2387 = vmul.f32 %v2214, %v2355
    %v2388 = vmul.f32 %v2216, %v2356
    %v2389 = vmul.f32 %v2218, %v2357
    %v2390 = vmul.f32 %v2220, %v2358
    %v2391 = vmul.f32 %v2222, %v2359
    %v2392 = vmul.f32 %v2224, %v2360
    %v2393 = vmul.f32 %v2226, %v2361
    %v2394 = vmul.f32 %v2228, %v2362
    %v2395 = vmul.f32 %v2230, %v2363
    %v2396 = vmul.f32 %v2232, %v2364
    %v2397 = vmul.f32 %v2234, %v2365
    %v2398 = vmul.f32 %v2236, %v2366
    %v2399 = vmul.f32 %v2238, %v2367
    %v2400 = vmul.f32 %v2240, %v2368
    %2405 = vrot.lane.b32.xlu0 %v148, 64
    %v2406 = vpop.permute.xlu0 %2405
    %2407 = vrot.lane.b32.xlu0 %v149, 64
    %v2408 = vpop.permute.xlu0 %2407
    %2409 = vrot.lane.b32.xlu0 %v150, 64
    %v2410 = vpop.permute.xlu0 %2409
    %2411 = vrot.lane.b32.xlu0 %v151, 64
    %v2412 = vpop.permute.xlu0 %2411
    %v2418 = vsel %vm64, %v2369, 0
    %v2421 = vsel %vm64, %v2370, 0
    %v2424 = vsel %vm64, %v2371, 0
    %v2427 = vsel %vm64, %v2372, 0
    %v2430 = vsel %vm64, %v2373, 0
    %v2433 = vsel %vm64, %v2374, 0
    %v2436 = vsel %vm64, %v2375, 0
    %v2439 = vsel %vm64, %v2376, 0
    %v2442 = vsel %vm64, %v2377, 0
    %v2445 = vsel %vm64, %v2378, 0
    %v2448 = vsel %vm64, %v2379, 0
    %v2451 = vsel %vm64, %v2380, 0
    %v2454 = vsel %vm64, %v2381, 0
    %v2457 = vsel %vm64, %v2382, 0
    %v2460 = vsel %vm64, %v2383, 0
    %v2463 = vsel %vm64, %v2384, 0
    %v2466 = vsel %vm64, %v2385, 0
    %v2469 = vsel %vm64, %v2386, 0
    %v2472 = vsel %vm64, %v2387, 0
    %v2475 = vsel %vm64, %v2388, 0
    %v2478 = vsel %vm64, %v2389, 0
    %v2481 = vsel %vm64, %v2390, 0
    %v2484 = vsel %vm64, %v2391, 0
    %v2487 = vsel %vm64, %v2392, 0
    %v2490 = vsel %vm64, %v2393, 0
    %v2493 = vsel %vm64, %v2394, 0
    %v2496 = vsel %vm64, %v2395, 0
    %v2499 = vsel %vm64, %v2396, 0
    %v2502 = vsel %vm64, %v2397, 0
    %v2505 = vsel %vm64, %v2398, 0
    %v2508 = vsel %vm64, %v2399, 0
    %v2511 = vsel %vm64, %v2400, 0
    %2513 = vmatprep.subr.mxu0 0.0
    %2514 = vmatpush1.msra.mxu0 %v2406
    %2515 = vmatprep.subr.mxu0 0.0
    %2516 = vmatpush1.msra.mxu0 %v2408
    %2517 = vmatprep.subr.mxu0 0.0
    %2518 = vmatpush1.msra.mxu0 %v2410
    %2519 = vmatprep.subr.mxu0 0.0
    %2520 = vmatpush1.msra.mxu0 %v2412
    %2521 = vmatprep.subr.mxu0 0.0
    %2522 = vmatpush1.msra.mxu0 0.0
    %2523 = vmatprep.subr.mxu0 0.0
    %2524 = vmatpush1.msra.mxu0 0.0
    %2525 = vmatprep.subr.mxu0 0.0
    %2526 = vmatpush1.msra.mxu0 0.0
    %2527 = vmatprep.subr.mxu0 0.0
    %2528 = vmatpush1.msra.mxu0 0.0
    %2529 = vmatprep.subr.mxu0 0.0
    %2530 = vmatpush1.msra.mxu0 0.0
    %2531 = vmatprep.subr.mxu0 0.0
    %2532 = vmatpush1.msra.mxu0 0.0
    %2533 = vmatprep.subr.mxu0 0.0
    %2534 = vmatpush1.msra.mxu0 0.0
    %2535 = vmatprep.subr.mxu0 0.0
    %2536 = vmatpush1.msra.mxu0 0.0
    %2537 = vmatprep.subr.mxu0 0.0
    %2538 = vmatpush1.msra.mxu0 0.0
    %2539 = vmatprep.subr.mxu0 0.0
    %2540 = vmatpush1.msra.mxu0 0.0
    %2541 = vmatprep.subr.mxu0 0.0
    %2542 = vmatpush1.msra.mxu0 0.0
    %2543 = vmatprep.subr.mxu0 0.0
    %2544 = vmatpush1.msra.mxu0 0.0
    %2545 = vmatprep.subr.mxu0 0.0
    %2546 = vmatpush1.msra.mxu0 0.0
    %2547 = vmatprep.subr.mxu0 0.0
    %2548 = vmatpush1.msra.mxu0 0.0
    %2549 = vmatprep.subr.mxu0 0.0
    %2550 = vmatpush1.msra.mxu0 0.0
    %2551 = vmatprep.subr.mxu0 0.0
    %2552 = vmatpush1.msra.mxu0 0.0
    %2553 = vmatprep.subr.mxu0 0.0
    %2554 = vmatpush1.msra.mxu0 0.0
    %2555 = vmatprep.subr.mxu0 0.0
    %2556 = vmatpush1.msra.mxu0 0.0
    %2557 = vmatprep.subr.mxu0 0.0
    %2558 = vmatpush1.msra.mxu0 0.0
    %2559 = vmatprep.subr.mxu0 0.0
    %2560 = vmatpush1.msra.mxu0 0.0
    %2561 = vmatprep.subr.mxu0 0.0
    %2562 = vmatpush1.msra.mxu0 0.0
    %2563 = vmatprep.subr.mxu0 0.0
    %2564 = vmatpush1.msra.mxu0 0.0
    %2565 = vmatprep.subr.mxu0 0.0
    %2566 = vmatpush1.msra.mxu0 0.0
    %2567 = vmatprep.subr.mxu0 0.0
    %2568 = vmatpush1.msra.mxu0 0.0
    %2569 = vmatprep.subr.mxu0 0.0
    %2570 = vmatpush1.msra.mxu0 0.0
    %2571 = vmatprep.subr.mxu0 0.0
    %2572 = vmatpush1.msra.mxu0 0.0
    %2573 = vmatprep.subr.mxu0 0.0
    %2574 = vmatpush1.msra.mxu0 0.0
    %2575 = vmatprep.subr.mxu0 0.0
    %2576 = vmatpush1.msra.mxu0 0.0
    %2577 = vmatprep.mubr.f32.mxu0 0.0
    %2578 = vmatmul.mubr.f32.gmra.mrb[0].mxu0 %v2418
    %v2579 = vpop.f32.mrb[0].mxu0
    %v2580 = vadd.f32 0.0, %v2579
    %v2581 = vpop.f32.mrb[0].mxu0
    %2582 = vmatprep.mubr.f32.mxu0 0.0
    %2583 = vmatmul.mubr.f32.gmra.mrb[0].mxu0 %v2421
    %v2584 = vpop.f32.mrb[0].mxu0
    %v2585 = vadd.f32 0.0, %v2584
    %v2586 = vpop.f32.mrb[0].mxu0
    %2587 = vmatprep.mubr.f32.mxu0 0.0
    %2588 = vmatmul.mubr.f32.gmra.mrb[0].mxu0 %v2424
    %v2589 = vpop.f32.mrb[0].mxu0
    %v2590 = vadd.f32 0.0, %v2589
    %v2591 = vpop.f32.mrb[0].mxu0
    %2592 = vmatprep.mubr.f32.mxu0 0.0
    %2593 = vmatmul.mubr.f32.gmra.mrb[0].mxu0 %v2427
    %v2594 = vpop.f32.mrb[0].mxu0
    %v2595 = vadd.f32 0.0, %v2594
    %v2596 = vpop.f32.mrb[0].mxu0
    %2597 = vmatprep.mubr.f32.mxu0 0.0
    %2598 = vmatmul.mubr.f32.gmra.mrb[0].mxu0 %v2430
    %v2599 = vpop.f32.mrb[0].mxu0
    %v2600 = vadd.f32 0.0, %v2599
    %v2601 = vpop.f32.mrb[0].mxu0
    %2602 = vmatprep.mubr.f32.mxu0 0.0
    %2603 = vmatmul.mubr.f32.gmra.mrb[0].mxu0 %v2433
    %v2604 = vpop.f32.mrb[0].mxu0
    %v2605 = vadd.f32 0.0, %v2604
    %v2606 = vpop.f32.mrb[0].mxu0
    %2607 = vmatprep.mubr.f32.mxu0 0.0
    %2608 = vmatmul.mubr.f32.gmra.mrb[0].mxu0 %v2436
    %v2609 = vpop.f32.mrb[0].mxu0
    %v2610 = vadd.f32 0.0, %v2609
    %v2611 = vpop.f32.mrb[0].mxu0
    %2612 = vmatprep.mubr.f32.mxu0 0.0
    %2613 = vmatmul.mubr.f32.gmra.mrb[0].mxu0 %v2439
    %v2614 = vpop.f32.mrb[0].mxu0
    %v2615 = vadd.f32 0.0, %v2614
    %v2616 = vpop.f32.mrb[0].mxu0
    %2617 = vmatprep.mubr.f32.mxu0 0.0
    %2618 = vmatmul.mubr.f32.gmra.mrb[0].mxu0 %v2442
    %v2619 = vpop.f32.mrb[0].mxu0
    %v2620 = vadd.f32 0.0, %v2619
    %v2621 = vpop.f32.mrb[0].mxu0
    %2622 = vmatprep.mubr.f32.mxu0 0.0
    %2623 = vmatmul.mubr.f32.gmra.mrb[0].mxu0 %v2445
    %v2624 = vpop.f32.mrb[0].mxu0
    %v2625 = vadd.f32 0.0, %v2624
    %v2626 = vpop.f32.mrb[0].mxu0
    %2627 = vmatprep.mubr.f32.mxu0 0.0
    %2628 = vmatmul.mubr.f32.gmra.mrb[0].mxu0 %v2448
    %v2629 = vpop.f32.mrb[0].mxu0
    %v2630 = vadd.f32 0.0, %v2629
    %v2631 = vpop.f32.mrb[0].mxu0
    %2632 = vmatprep.mubr.f32.mxu0 0.0
    %2633 = vmatmul.mubr.f32.gmra.mrb[0].mxu0 %v2451
    %v2634 = vpop.f32.mrb[0].mxu0
    %v2635 = vadd.f32 0.0, %v2634
    %v2636 = vpop.f32.mrb[0].mxu0
    %2637 = vmatprep.mubr.f32.mxu0 0.0
    %2638 = vmatmul.mubr.f32.gmra.mrb[0].mxu0 %v2454
    %v2639 = vpop.f32.mrb[0].mxu0
    %v2640 = vadd.f32 0.0, %v2639
    %v2641 = vpop.f32.mrb[0].mxu0
    %2642 = vmatprep.mubr.f32.mxu0 0.0
    %2643 = vmatmul.mubr.f32.gmra.mrb[0].mxu0 %v2457
    %v2644 = vpop.f32.mrb[0].mxu0
    %v2645 = vadd.f32 0.0, %v2644
    %v2646 = vpop.f32.mrb[0].mxu0
    %2647 = vmatprep.mubr.f32.mxu0 0.0
    %2648 = vmatmul.mubr.f32.gmra.mrb[0].mxu0 %v2460
    %v2649 = vpop.f32.mrb[0].mxu0
    %v2650 = vadd.f32 0.0, %v2649
    %v2651 = vpop.f32.mrb[0].mxu0
    %2652 = vmatprep.mubr.f32.mxu0 0.0
    %2653 = vmatmul.mubr.f32.gmra.mrb[0].mxu0 %v2463
    %v2654 = vpop.f32.mrb[0].mxu0
    %v2655 = vadd.f32 0.0, %v2654
    %v2656 = vpop.f32.mrb[0].mxu0
    %2657 = vmatprep.mubr.f32.mxu0 0.0
    %2658 = vmatmul.mubr.f32.gmra.mrb[0].mxu0 %v2466
    %v2659 = vpop.f32.mrb[0].mxu0
    %v2660 = vadd.f32 0.0, %v2659
    %v2661 = vpop.f32.mrb[0].mxu0
    %2662 = vmatprep.mubr.f32.mxu0 0.0
    %2663 = vmatmul.mubr.f32.gmra.mrb[0].mxu0 %v2469
    %v2664 = vpop.f32.mrb[0].mxu0
    %v2665 = vadd.f32 0.0, %v2664
    %v2666 = vpop.f32.mrb[0].mxu0
    %2667 = vmatprep.mubr.f32.mxu0 0.0
    %2668 = vmatmul.mubr.f32.gmra.mrb[0].mxu0 %v2472
    %v2669 = vpop.f32.mrb[0].mxu0
    %v2670 = vadd.f32 0.0, %v2669
    %v2671 = vpop.f32.mrb[0].mxu0
    %2672 = vmatprep.mubr.f32.mxu0 0.0
    %2673 = vmatmul.mubr.f32.gmra.mrb[0].mxu0 %v2475
    %v2674 = vpop.f32.mrb[0].mxu0
    %v2675 = vadd.f32 0.0, %v2674
    %v2676 = vpop.f32.mrb[0].mxu0
    %2677 = vmatprep.mubr.f32.mxu0 0.0
    %2678 = vmatmul.mubr.f32.gmra.mrb[0].mxu0 %v2478
    %v2679 = vpop.f32.mrb[0].mxu0
    %v2680 = vadd.f32 0.0, %v2679
    %v2681 = vpop.f32.mrb[0].mxu0
    %2682 = vmatprep.mubr.f32.mxu0 0.0
    %2683 = vmatmul.mubr.f32.gmra.mrb[0].mxu0 %v2481
    %v2684 = vpop.f32.mrb[0].mxu0
    %v2685 = vadd.f32 0.0, %v2684
    %v2686 = vpop.f32.mrb[0].mxu0
    %2687 = vmatprep.mubr.f32.mxu0 0.0
    %2688 = vmatmul.mubr.f32.gmra.mrb[0].mxu0 %v2484
    %v2689 = vpop.f32.mrb[0].mxu0
    %v2690 = vadd.f32 0.0, %v2689
    %v2691 = vpop.f32.mrb[0].mxu0
    %2692 = vmatprep.mubr.f32.mxu0 0.0
    %2693 = vmatmul.mubr.f32.gmra.mrb[0].mxu0 %v2487
    %v2694 = vpop.f32.mrb[0].mxu0
    %v2695 = vadd.f32 0.0, %v2694
    %v2696 = vpop.f32.mrb[0].mxu0
    %2697 = vmatprep.mubr.f32.mxu0 0.0
    %2698 = vmatmul.mubr.f32.gmra.mrb[0].mxu0 %v2490
    %v2699 = vpop.f32.mrb[0].mxu0
    %v2700 = vadd.f32 0.0, %v2699
    %v2701 = vpop.f32.mrb[0].mxu0
    %2702 = vmatprep.mubr.f32.mxu0 0.0
    %2703 = vmatmul.mubr.f32.gmra.mrb[0].mxu0 %v2493
    %v2704 = vpop.f32.mrb[0].mxu0
    %v2705 = vadd.f32 0.0, %v2704
    %v2706 = vpop.f32.mrb[0].mxu0
    %2707 = vmatprep.mubr.f32.mxu0 0.0
    %2708 = vmatmul.mubr.f32.gmra.mrb[0].mxu0 %v2496
    %v2709 = vpop.f32.mrb[0].mxu0
    %v2710 = vadd.f32 0.0, %v2709
    %v2711 = vpop.f32.mrb[0].mxu0
    %2712 = vmatprep.mubr.f32.mxu0 0.0
    %2713 = vmatmul.mubr.f32.gmra.mrb[0].mxu0 %v2499
    %v2714 = vpop.f32.mrb[0].mxu0
    %v2715 = vadd.f32 0.0, %v2714
    %v2716 = vpop.f32.mrb[0].mxu0
    %2717 = vmatprep.mubr.f32.mxu0 0.0
    %2718 = vmatmul.mubr.f32.gmra.mrb[0].mxu0 %v2502
    %v2719 = vpop.f32.mrb[0].mxu0
    %v2720 = vadd.f32 0.0, %v2719
    %v2721 = vpop.f32.mrb[0].mxu0
    %2722 = vmatprep.mubr.f32.mxu0 0.0
    %2723 = vmatmul.mubr.f32.gmra.mrb[0].mxu0 %v2505
    %v2724 = vpop.f32.mrb[0].mxu0
    %v2725 = vadd.f32 0.0, %v2724
    %v2726 = vpop.f32.mrb[0].mxu0
    %2727 = vmatprep.mubr.f32.mxu0 0.0
    %2728 = vmatmul.mubr.f32.gmra.mrb[0].mxu0 %v2508
    %v2729 = vpop.f32.mrb[0].mxu0
    %v2730 = vadd.f32 0.0, %v2729
    %v2731 = vpop.f32.mrb[0].mxu0
    %2732 = vmatprep.mubr.f32.mxu0 0.0
    %2733 = vmatmul.mubr.f32.gmra.mrb[0].mxu0 %v2511
    %v2734 = vpop.f32.mrb[0].mxu0
    %v2735 = vadd.f32 0.0, %v2734
    %v2736 = vpop.f32.mrb[0].mxu0
    %2737 = vdwg.mxu0
    %v2738 = vmul.f32 %v2580, %v1256
    %v2739 = vmul.f32 %v2585, %v1257
    %v2740 = vmul.f32 %v2590, %v1258
    %v2741 = vmul.f32 %v2595, %v1259
    %v2742 = vmul.f32 %v2600, %v1260
    %v2743 = vmul.f32 %v2605, %v1261
    %v2744 = vmul.f32 %v2610, %v1262
    %v2745 = vmul.f32 %v2615, %v1263
    %v2746 = vmul.f32 %v2620, %v1264
    %v2747 = vmul.f32 %v2625, %v1265
    %v2748 = vmul.f32 %v2630, %v1266
    %v2749 = vmul.f32 %v2635, %v1267
    %v2750 = vmul.f32 %v2640, %v1268
    %v2751 = vmul.f32 %v2645, %v1269
    %v2752 = vmul.f32 %v2650, %v1270
    %v2753 = vmul.f32 %v2655, %v1271
    %v2754 = vmul.f32 %v2660, %v1272
    %v2755 = vmul.f32 %v2665, %v1273
    %v2756 = vmul.f32 %v2670, %v1274
    %v2757 = vmul.f32 %v2675, %v1275
    %v2758 = vmul.f32 %v2680, %v1276
    %v2759 = vmul.f32 %v2685, %v1277
    %v2760 = vmul.f32 %v2690, %v1278
    %v2761 = vmul.f32 %v2695, %v1279
    %v2762 = vmul.f32 %v2700, %v1280
    %v2763 = vmul.f32 %v2705, %v1281
    %v2764 = vmul.f32 %v2710, %v1282
    %v2765 = vmul.f32 %v2715, %v1283
    %v2766 = vmul.f32 %v2720, %v1284
    %v2767 = vmul.f32 %v2725, %v1285
    %v2768 = vmul.f32 %v2730, %v1286
    %v2769 = vmul.f32 %v2735, %v1287
    %2770 = vmatprep.subr.mxu0 0.0
    %2771 = vmatpush1.msra.mxu0 %v2738
    %2772 = vmatprep.subr.mxu0 0.0
    %2773 = vmatpush1.msra.mxu0 %v2739
    %2774 = vmatprep.subr.mxu0 0.0
    %2775 = vmatpush1.msra.mxu0 %v2740
    %2776 = vmatprep.subr.mxu0 0.0
    %2777 = vmatpush1.msra.mxu0 %v2741
    %2778 = vmatprep.subr.mxu0 0.0
    %2779 = vmatpush1.msra.mxu0 %v2742
    %2780 = vmatprep.subr.mxu0 0.0
    %2781 = vmatpush1.msra.mxu0 %v2743
    %2782 = vmatprep.subr.mxu0 0.0
    %2783 = vmatpush1.msra.mxu0 %v2744
    %2784 = vmatprep.subr.mxu0 0.0
    %2785 = vmatpush1.msra.mxu0 %v2745
    %2786 = vmatprep.subr.mxu0 0.0
    %2787 = vmatpush1.msra.mxu0 %v2746
    %2788 = vmatprep.subr.mxu0 0.0
    %2789 = vmatpush1.msra.mxu0 %v2747
    %2790 = vmatprep.subr.mxu0 0.0
    %2791 = vmatpush1.msra.mxu0 %v2748
    %2792 = vmatprep.subr.mxu0 0.0
    %2793 = vmatpush1.msra.mxu0 %v2749
    %2794 = vmatprep.subr.mxu0 0.0
    %2795 = vmatpush1.msra.mxu0 %v2750
    %2796 = vmatprep.subr.mxu0 0.0
    %2797 = vmatpush1.msra.mxu0 %v2751
    %2798 = vmatprep.subr.mxu0 0.0
    %2799 = vmatpush1.msra.mxu0 %v2752
    %2800 = vmatprep.subr.mxu0 0.0
    %2801 = vmatpush1.msra.mxu0 %v2753
    %2802 = vmatprep.subr.mxu0 0.0
    %2803 = vmatpush1.msra.mxu0 %v2754
    %2804 = vmatprep.subr.mxu0 0.0
    %2805 = vmatpush1.msra.mxu0 %v2755
    %2806 = vmatprep.subr.mxu0 0.0
    %2807 = vmatpush1.msra.mxu0 %v2756
    %2808 = vmatprep.subr.mxu0 0.0
    %2809 = vmatpush1.msra.mxu0 %v2757
    %2810 = vmatprep.subr.mxu0 0.0
    %2811 = vmatpush1.msra.mxu0 %v2758
    %2812 = vmatprep.subr.mxu0 0.0
    %2813 = vmatpush1.msra.mxu0 %v2759
    %2814 = vmatprep.subr.mxu0 0.0
    %2815 = vmatpush1.msra.mxu0 %v2760
    %2816 = vmatprep.subr.mxu0 0.0
    %2817 = vmatpush1.msra.mxu0 %v2761
    %2818 = vmatprep.subr.mxu0 0.0
    %2819 = vmatpush1.msra.mxu0 %v2762
    %2820 = vmatprep.subr.mxu0 0.0
    %2821 = vmatpush1.msra.mxu0 %v2763
    %2822 = vmatprep.subr.mxu0 0.0
    %2823 = vmatpush1.msra.mxu0 %v2764
    %2824 = vmatprep.subr.mxu0 0.0
    %2825 = vmatpush1.msra.mxu0 %v2765
    %2826 = vmatprep.subr.mxu0 0.0
    %2827 = vmatpush1.msra.mxu0 %v2766
    %2828 = vmatprep.subr.mxu0 0.0
    %2829 = vmatpush1.msra.mxu0 %v2767
    %2830 = vmatprep.subr.mxu0 0.0
    %2831 = vmatpush1.msra.mxu0 %v2768
    %2832 = vmatprep.subr.mxu0 0.0
    %2833 = vmatpush1.msra.mxu0 %v2769
    %2834 = vmatprep.mubr.f32.mxu0 %v429
    %2835 = vmatmul.mubr.f32.gmra.mrb[0].mxu0 %v428
    %v2836 = vpop.f32.mrb[0].mxu0
    %v2837 = vadd.f32 0.0, %v2836
    %v2838 = vpop.f32.mrb[0].mxu0
    %2839 = vmatprep.mubr.f32.mxu0 %v431
    %2840 = vmatmul.mubr.f32.gmra.mrb[0].mxu0 %v430
    %v2841 = vpop.f32.mrb[0].mxu0
    %v2842 = vadd.f32 0.0, %v2841
    %v2843 = vpop.f32.mrb[0].mxu0
    %2844 = vmatprep.mubr.f32.mxu0 %v433
    %2845 = vmatmul.mubr.f32.gmra.mrb[0].mxu0 %v432
    %v2846 = vpop.f32.mrb[0].mxu0
    %v2847 = vadd.f32 0.0, %v2846
    %v2848 = vpop.f32.mrb[0].mxu0
    %2849 = vmatprep.mubr.f32.mxu0 %v435
    %2850 = vmatmul.mubr.f32.gmra.mrb[0].mxu0 %v434
    %v2851 = vpop.f32.mrb[0].mxu0
    %v2852 = vadd.f32 0.0, %v2851
    %v2853 = vpop.f32.mrb[0].mxu0
    %2854 = vdwg.mxu0
    %v2855 = vpack.c.bf16 %v2842, %v2837
    %v2856 = vpack.c.bf16 %v2852, %v2847
    %v2857 = vld [vmem:[%s2] sm:$0xf]
    %v2858 = vld [vmem:[%s2 + $0x4] sm:$0xf]
    %v2859 = vld [vmem:[%s2 + $0x8] sm:$0xf]
    %v2860 = vld [vmem:[%s2 + $0xc] sm:$0xf]
    %v2861 = vlaneseq
    %v2862 = vshrl.u32 %v2861, 7
    %v2863 = vsub.s32 0, %v2862
    %v2864 = vrot.slane %v38, %v2863
    %v2869 = vunpack.c.l.b16 %v2857
    %v2870 = vunpack.c.l.b16 %v2858
    %v2871 = vunpack.c.l.b16 %v2859
    %v2872 = vunpack.c.l.b16 %v2860
    %v2873 = vpack.c.b16 %v2870, %v2869
    %v2874 = vpack.c.b16 %v2872, %v2871
    %v2878 = vsel %vm64, %v2855, 0
    %v2881 = vsel %vm64, %v2856, 0
    %2883 = vmatprep.subr.bf16.mxu0 0
    %2884 = vmatpush1.bf16.msra.mxu0 %v2873
    %2885 = vmatprep.subr.bf16.mxu0 0
    %2886 = vmatpush1.bf16.msra.mxu0 %v2874
    %2887 = vmatprep.subr.bf16.mxu0 0
    %2888 = vmatpush1.bf16.msra.mxu0 0
    %2889 = vmatprep.subr.bf16.mxu0 0
    %2890 = vmatpush1.bf16.msra.mxu0 0
    %2891 = vmatprep.subr.bf16.mxu0 0
    %2892 = vmatpush1.bf16.msra.mxu0 0
    %2893 = vmatprep.subr.bf16.mxu0 0
    %2894 = vmatpush1.bf16.msra.mxu0 0
    %2895 = vmatprep.subr.bf16.mxu0 0
    %2896 = vmatpush1.bf16.msra.mxu0 0
    %2897 = vmatprep.subr.bf16.mxu0 0
    %2898 = vmatpush1.bf16.msra.mxu0 0
    %2899 = vmatprep.subr.bf16.mxu0 0
    %2900 = vmatpush1.bf16.msra.mxu0 0
    %2901 = vmatprep.subr.bf16.mxu0 0
    %2902 = vmatpush1.bf16.msra.mxu0 0
    %2903 = vmatprep.subr.bf16.mxu0 0
    %2904 = vmatpush1.bf16.msra.mxu0 0
    %2905 = vmatprep.subr.bf16.mxu0 0
    %2906 = vmatpush1.bf16.msra.mxu0 0
    %2907 = vmatprep.subr.bf16.mxu0 0
    %2908 = vmatpush1.bf16.msra.mxu0 0
    %2909 = vmatprep.subr.bf16.mxu0 0
    %2910 = vmatpush1.bf16.msra.mxu0 0
    %2911 = vmatprep.subr.bf16.mxu0 0
    %2912 = vmatpush1.bf16.msra.mxu0 0
    %2913 = vmatprep.subr.bf16.mxu0 0
    %2914 = vmatpush1.bf16.msra.mxu0 0
    %2915 = vmatprep.mubr.bf16.mxu0 0
    %2916 = vmatmul.mubr.bf16.gmra.mrb[0].mxu0 %v2878
    %v2917 = vpop.f32.mrb[0].mxu0
    %v2918 = vadd.f32 %v2864, %v2917
    %v2919 = vpop.f32.mrb[0].mxu0
    %v2920 = vpop.f32.mrb[0].mxu0
    %v2921 = vadd.f32 %v2864, %v2920
    %v2922 = vpop.f32.mrb[0].mxu0
    %2923 = vmatprep.mubr.bf16.mxu0 0
    %2924 = vmatmul.mubr.bf16.gmra.mrb[0].mxu0 %v2881
    %v2925 = vpop.f32.mrb[0].mxu0
    %v2926 = vadd.f32 %v2864, %v2925
    %v2927 = vpop.f32.mrb[0].mxu0
    %v2928 = vpop.f32.mrb[0].mxu0
    %v2929 = vadd.f32 %v2864, %v2928
    %v2930 = vpop.f32.mrb[0].mxu0
    %2931 = vdwg.mxu0
    %v2932 = vadd.f32 %v31, %v2918
    %v2933 = vadd.f32 %v32, %v2921
    %v2934 = vadd.f32 %v33, %v2926
    %v2935 = vadd.f32 %v34, %v2929
    %v2936 = vsel %vm64, %v2932, 0.0
    %2937 = vadd.xlane.f32.xlu0 %v2936
    %v2938 = vpop.xlane.xlu0 %2937
    %v2939 = vsel %vm64, %v2933, 0.0
    %2940 = vadd.xlane.f32.xlu0 %v2939
    %v2941 = vpop.xlane.xlu0 %2940
    %v2942 = vsel %vm64, %v2934, 0.0
    %2943 = vadd.xlane.f32.xlu0 %v2942
    %v2944 = vpop.xlane.xlu0 %2943
    %v2945 = vsel %vm64, %v2935, 0.0
    %2946 = vadd.xlane.f32.xlu0 %v2945
    %v2947 = vpop.xlane.xlu0 %2946
    %v2948 = vrcp.pop 32.0
    %v2949 = vmul.f32 %v2938, %v2948
    %v2950 = vmul.f32 %v2941, %v2948
    %v2951 = vmul.f32 %v2944, %v2948
    %v2952 = vmul.f32 %v2947, %v2948
    %v2953 = vsub.f32 %v2932, %v2949
    %v2954 = vsub.f32 %v2933, %v2950
    %v2955 = vsub.f32 %v2934, %v2951
    %v2956 = vsub.f32 %v2935, %v2952
    %v2957 = vmul.f32 %v2953, %v2953
    %v2958 = vmul.f32 %v2954, %v2954
    %v2959 = vmul.f32 %v2955, %v2955
    %v2960 = vmul.f32 %v2956, %v2956
    %v2961 = vsel %vm64, %v2957, 0.0
    %2962 = vadd.xlane.f32.xlu0 %v2961
    %v2963 = vpop.xlane.xlu0 %2962
    %v2964 = vsel %vm64, %v2958, 0.0
    %2965 = vadd.xlane.f32.xlu0 %v2964
    %v2966 = vpop.xlane.xlu0 %2965
    %v2967 = vsel %vm64, %v2959, 0.0
    %2968 = vadd.xlane.f32.xlu0 %v2967
    %v2969 = vpop.xlane.xlu0 %2968
    %v2970 = vsel %vm64, %v2960, 0.0
    %2971 = vadd.xlane.f32.xlu0 %v2970
    %v2972 = vpop.xlane.xlu0 %2971
    %v2973 = vmul.f32 %v2963, %v2948
    %v2974 = vmul.f32 %v2966, %v2948
    %v2975 = vmul.f32 %v2969, %v2948
    %v2976 = vmul.f32 %v2972, %v2948
    %v2977 = vadd.f32 %v2973, 1e-05
    %v2978 = vadd.f32 %v2974, 1e-05
    %v2979 = vadd.f32 %v2975, 1e-05
    %v2980 = vadd.f32 %v2976, 1e-05
    %v2981 = vrsqrt.pop %v2977
    %v2982 = vrsqrt.pop %v2978
    %v2983 = vrsqrt.pop %v2979
    %v2984 = vrsqrt.pop %v2980
    %v2985 = vmul.f32 %v2953, %v2981
    %v2986 = vmul.f32 %v2954, %v2982
    %v2987 = vmul.f32 %v2955, %v2983
    %v2988 = vmul.f32 %v2956, %v2984
    %v2989 = vlaneseq
    %v2990 = vshrl.u32 %v2989, 7
    %v2991 = vsub.s32 0, %v2990
    %v2992 = vrot.slane %v39, %v2991
    %v2993 = vmul.f32 %v2985, %v2992
    %v2994 = vmul.f32 %v2986, %v2992
    %v2995 = vmul.f32 %v2987, %v2992
    %v2996 = vmul.f32 %v2988, %v2992
    %v2997 = vlaneseq
    %v2998 = vshrl.u32 %v2997, 7
    %v2999 = vsub.s32 0, %v2998
    %v3000 = vrot.slane %v40, %v2999
    %v3001 = vadd.f32 %v2993, %v3000
    %v3002 = vadd.f32 %v2994, %v3000
    %v3003 = vadd.f32 %v2995, %v3000
    %v3004 = vadd.f32 %v2996, %v3000
    %v3005 = vpack.c.bf16 %v3002, %v3001
    %v3006 = vpack.c.bf16 %v3004, %v3003
    %v3007 = vld [vmem:[%s3] sm:$0xff]
    %v3008 = vld [vmem:[%s3 + $0x8] sm:$0xff]
    %v3009 = vld [vmem:[%s3 + $0x40] sm:$0xff]
    %v3010 = vld [vmem:[%s3 + $0x48] sm:$0xff]
    %v3011 = vld [vmem:[%s3 + $0x80] sm:$0xff]
    %v3012 = vld [vmem:[%s3 + $0x88] sm:$0xff]
    %v3013 = vld [vmem:[%s3 + $0xc0] sm:$0xff]
    %v3014 = vld [vmem:[%s3 + $0xc8] sm:$0xff]
    %v3015 = vld [vmem:[%s4] sm:$0xf]
    %v3017 = vlaneseq
    %v3018 = vshrl.u32 %v3017, 7
    %v3019 = vsub.s32 0, %v3018
    %v3020 = vrot.slane %v3015, %v3019
    %v3021 = vlaneseq
    %v3022 = vshrl.u32 %v3021, 7
    %v3023 = vsub.s32 1, %v3022
    %v3024 = vrot.slane %v3015, %v3023
    %v3025 = vlaneseq
    %v3026 = vshrl.u32 %v3025, 7
    %v3027 = vsub.s32 2, %v3026
    %v3028 = vrot.slane %v3015, %v3027
    %v3029 = vlaneseq
    %v3030 = vshrl.u32 %v3029, 7
    %v3031 = vsub.s32 3, %v3030
    %v3032 = vrot.slane %v3015, %v3031
    %v3045 = vunpack.c.l.b16 %v3007
    %v3046 = vunpack.c.h.b16 %v3007
    %v3047 = vunpack.c.l.b16 %v3008
    %v3048 = vunpack.c.h.b16 %v3008
    %v3049 = vunpack.c.l.b16 %v3009
    %v3050 = vunpack.c.h.b16 %v3009
    %v3051 = vunpack.c.l.b16 %v3010
    %v3052 = vunpack.c.h.b16 %v3010
    %v3053 = vunpack.c.l.b16 %v3011
    %v3054 = vunpack.c.h.b16 %v3011
    %v3055 = vunpack.c.l.b16 %v3012
    %v3056 = vunpack.c.h.b16 %v3012
    %v3057 = vunpack.c.l.b16 %v3013
    %v3058 = vunpack.c.h.b16 %v3013
    %v3059 = vunpack.c.l.b16 %v3014
    %v3060 = vunpack.c.h.b16 %v3014
    %v3061 = vpack.c.b16 %v3049, %v3045
    %v3062 = vpack.c.b16 %v3050, %v3046
    %v3063 = vpack.c.b16 %v3051, %v3047
    %v3064 = vpack.c.b16 %v3052, %v3048
    %v3065 = vpack.c.b16 %v3057, %v3053
    %v3066 = vpack.c.b16 %v3058, %v3054
    %v3067 = vpack.c.b16 %v3059, %v3055
    %v3068 = vpack.c.b16 %v3060, %v3056
    %v3078 = vsel %vm64, %v3005, 0
    %v3081 = vsel %vm64, %v3006, 0
    %3083 = vmatprep.subr.bf16.mxu0 %v3062
    %3084 = vmatpush1.bf16.msra.mxu0 %v3061
    %3085 = vmatprep.subr.bf16.mxu0 %v3066
    %3086 = vmatpush1.bf16.msra.mxu0 %v3065
    %3087 = vmatprep.subr.bf16.mxu0 0
    %3088 = vmatpush1.bf16.msra.mxu0 0
    %3089 = vmatprep.subr.bf16.mxu0 0
    %3090 = vmatpush1.bf16.msra.mxu0 0
    %3091 = vmatprep.subr.bf16.mxu0 0
    %3092 = vmatpush1.bf16.msra.mxu0 0
    %3093 = vmatprep.subr.bf16.mxu0 0
    %3094 = vmatpush1.bf16.msra.mxu0 0
    %3095 = vmatprep.subr.bf16.mxu0 0
    %3096 = vmatpush1.bf16.msra.mxu0 0
    %3097 = vmatprep.subr.bf16.mxu0 0
    %3098 = vmatpush1.bf16.msra.mxu0 0
    %3099 = vmatprep.subr.bf16.mxu0 0
    %3100 = vmatpush1.bf16.msra.mxu0 0
    %3101 = vmatprep.subr.bf16.mxu0 0
    %3102 = vmatpush1.bf16.msra.mxu0 0
    %3103 = vmatprep.subr.bf16.mxu0 0
    %3104 = vmatpush1.bf16.msra.mxu0 0
    %3105 = vmatprep.subr.bf16.mxu0 0
    %3106 = vmatpush1.bf16.msra.mxu0 0
    %3107 = vmatprep.subr.bf16.mxu0 0
    %3108 = vmatpush1.bf16.msra.mxu0 0
    %3109 = vmatprep.subr.bf16.mxu0 0
    %3110 = vmatpush1.bf16.msra.mxu0 0
    %3111 = vmatprep.subr.bf16.mxu0 0
    %3112 = vmatpush1.bf16.msra.mxu0 0
    %3113 = vmatprep.subr.bf16.mxu0 0
    %3114 = vmatpush1.bf16.msra.mxu0 0
    %3115 = vmatprep.mubr.bf16.mxu0 0
    %3116 = vmatmul.mubr.bf16.gmra.mrb[0].mxu0 %v3078
    %v3117 = vpop.f32.mrb[0].mxu0
    %v3118 = vadd.f32 %v3020, %v3117
    %v3119 = vpop.f32.mrb[0].mxu0
    %v3120 = vadd.f32 %v3024, %v3119
    %v3121 = vpop.f32.mrb[0].mxu0
    %v3122 = vadd.f32 %v3020, %v3121
    %v3123 = vpop.f32.mrb[0].mxu0
    %v3124 = vadd.f32 %v3024, %v3123
    %3125 = vmatprep.mubr.bf16.mxu0 0
    %3126 = vmatmul.mubr.bf16.gmra.mrb[0].mxu0 %v3081
    %v3127 = vpop.f32.mrb[0].mxu0
    %v3128 = vadd.f32 %v3020, %v3127
    %v3129 = vpop.f32.mrb[0].mxu0
    %v3130 = vadd.f32 %v3024, %v3129
    %v3131 = vpop.f32.mrb[0].mxu0
    %v3132 = vadd.f32 %v3020, %v3131
    %v3133 = vpop.f32.mrb[0].mxu0
    %v3134 = vadd.f32 %v3024, %v3133
    %3135 = vdwg.mxu0
    %3136 = vmatprep.subr.bf16.mxu0 %v3064
    %3137 = vmatpush1.bf16.msra.mxu0 %v3063
    %3138 = vmatprep.subr.bf16.mxu0 %v3068
    %3139 = vmatpush1.bf16.msra.mxu0 %v3067
    %3140 = vmatprep.subr.bf16.mxu0 0
    %3141 = vmatpush1.bf16.msra.mxu0 0
    %3142 = vmatprep.subr.bf16.mxu0 0
    %3143 = vmatpush1.bf16.msra.mxu0 0
    %3144 = vmatprep.subr.bf16.mxu0 0
    %3145 = vmatpush1.bf16.msra.mxu0 0
    %3146 = vmatprep.subr.bf16.mxu0 0
    %3147 = vmatpush1.bf16.msra.mxu0 0
    %3148 = vmatprep.subr.bf16.mxu0 0
    %3149 = vmatpush1.bf16.msra.mxu0 0
    %3150 = vmatprep.subr.bf16.mxu0 0
    %3151 = vmatpush1.bf16.msra.mxu0 0
    %3152 = vmatprep.subr.bf16.mxu0 0
    %3153 = vmatpush1.bf16.msra.mxu0 0
    %3154 = vmatprep.subr.bf16.mxu0 0
    %3155 = vmatpush1.bf16.msra.mxu0 0
    %3156 = vmatprep.subr.bf16.mxu0 0
    %3157 = vmatpush1.bf16.msra.mxu0 0
    %3158 = vmatprep.subr.bf16.mxu0 0
    %3159 = vmatpush1.bf16.msra.mxu0 0
    %3160 = vmatprep.subr.bf16.mxu0 0
    %3161 = vmatpush1.bf16.msra.mxu0 0
    %3162 = vmatprep.subr.bf16.mxu0 0
    %3163 = vmatpush1.bf16.msra.mxu0 0
    %3164 = vmatprep.subr.bf16.mxu0 0
    %3165 = vmatpush1.bf16.msra.mxu0 0
    %3166 = vmatprep.subr.bf16.mxu0 0
    %3167 = vmatpush1.bf16.msra.mxu0 0
    %3168 = vmatprep.mubr.bf16.mxu0 0
    %3169 = vmatmul.mubr.bf16.gmra.mrb[0].mxu0 %v3078
    %v3170 = vpop.f32.mrb[0].mxu0
    %v3171 = vadd.f32 %v3028, %v3170
    %v3172 = vpop.f32.mrb[0].mxu0
    %v3173 = vadd.f32 %v3032, %v3172
    %v3174 = vpop.f32.mrb[0].mxu0
    %v3175 = vadd.f32 %v3028, %v3174
    %v3176 = vpop.f32.mrb[0].mxu0
    %v3177 = vadd.f32 %v3032, %v3176
    %3178 = vmatprep.mubr.bf16.mxu0 0
    %3179 = vmatmul.mubr.bf16.gmra.mrb[0].mxu0 %v3081
    %v3180 = vpop.f32.mrb[0].mxu0
    %v3181 = vadd.f32 %v3028, %v3180
    %v3182 = vpop.f32.mrb[0].mxu0
    %v3183 = vadd.f32 %v3032, %v3182
    %v3184 = vpop.f32.mrb[0].mxu0
    %v3185 = vadd.f32 %v3028, %v3184
    %v3186 = vpop.f32.mrb[0].mxu0
    %v3187 = vadd.f32 %v3032, %v3186
    %3188 = vdwg.mxu0
    %v3189 = vmax.f32 %v3118, 0.0
    %v3190 = vmax.f32 %v3120, 0.0
    %v3191 = vmax.f32 %v3171, 0.0
    %v3192 = vmax.f32 %v3173, 0.0
    %v3193 = vmax.f32 %v3122, 0.0
    %v3194 = vmax.f32 %v3124, 0.0
    %v3195 = vmax.f32 %v3175, 0.0
    %v3196 = vmax.f32 %v3177, 0.0
    %v3197 = vmax.f32 %v3128, 0.0
    %v3198 = vmax.f32 %v3130, 0.0
    %v3199 = vmax.f32 %v3181, 0.0
    %v3200 = vmax.f32 %v3183, 0.0
    %v3201 = vmax.f32 %v3132, 0.0
    %v3202 = vmax.f32 %v3134, 0.0
    %v3203 = vmax.f32 %v3185, 0.0
    %v3204 = vmax.f32 %v3187, 0.0
    %v3205 = vpack.c.bf16 %v3193, %v3189
    %v3206 = vpack.c.bf16 %v3194, %v3190
    %v3207 = vpack.c.bf16 %v3195, %v3191
    %v3208 = vpack.c.bf16 %v3196, %v3192
    %v3209 = vpack.c.bf16 %v3201, %v3197
    %v3210 = vpack.c.bf16 %v3202, %v3198
    %v3211 = vpack.c.bf16 %v3203, %v3199
    %v3212 = vpack.c.bf16 %v3204, %v3200
    %v3213 = vld [vmem:[%s5] sm:$0xf]
    %v3214 = vld [vmem:[%s5 + $0x4] sm:$0xf]
    %v3215 = vld [vmem:[%s5 + $0x8] sm:$0xf]
    %v3216 = vld [vmem:[%s5 + $0xc] sm:$0xf]
    %v3217 = vld [vmem:[%s5 + $0x10] sm:$0xf]
    %v3218 = vld [vmem:[%s5 + $0x14] sm:$0xf]
    %v3219 = vld [vmem:[%s5 + $0x18] sm:$0xf]
    %v3220 = vld [vmem:[%s5 + $0x1c] sm:$0xf]
    %v3221 = vld [vmem:[%s5 + $0x20] sm:$0xf]
    %v3222 = vld [vmem:[%s5 + $0x24] sm:$0xf]
    %v3223 = vld [vmem:[%s5 + $0x28] sm:$0xf]
    %v3224 = vld [vmem:[%s5 + $0x2c] sm:$0xf]
    %v3225 = vld [vmem:[%s5 + $0x30] sm:$0xf]
    %v3226 = vld [vmem:[%s5 + $0x34] sm:$0xf]
    %v3227 = vld [vmem:[%s5 + $0x38] sm:$0xf]
    %v3228 = vld [vmem:[%s5 + $0x3c] sm:$0xf]
    %v3229 = vld [vmem:[%s5 + $0x40] sm:$0xf]
    %v3230 = vld [vmem:[%s5 + $0x44] sm:$0xf]
    %v3231 = vld [vmem:[%s5 + $0x48] sm:$0xf]
    %v3232 = vld [vmem:[%s5 + $0x4c] sm:$0xf]
    %v3233 = vld [vmem:[%s5 + $0x50] sm:$0xf]
    %v3234 = vld [vmem:[%s5 + $0x54] sm:$0xf]
    %v3235 = vld [vmem:[%s5 + $0x58] sm:$0xf]
    %v3236 = vld [vmem:[%s5 + $0x5c] sm:$0xf]
    %v3237 = vld [vmem:[%s5 + $0x60] sm:$0xf]
    %v3238 = vld [vmem:[%s5 + $0x64] sm:$0xf]
    %v3239 = vld [vmem:[%s5 + $0x68] sm:$0xf]
    %v3240 = vld [vmem:[%s5 + $0x6c] sm:$0xf]
    %v3241 = vld [vmem:[%s5 + $0x70] sm:$0xf]
    %v3242 = vld [vmem:[%s5 + $0x74] sm:$0xf]
    %v3243 = vld [vmem:[%s5 + $0x78] sm:$0xf]
    %v3244 = vld [vmem:[%s5 + $0x7c] sm:$0xf]
    %v3245 = vld [vmem:[%s5 + $0x80] sm:$0xf]
    %v3246 = vld [vmem:[%s5 + $0x84] sm:$0xf]
    %v3247 = vld [vmem:[%s5 + $0x88] sm:$0xf]
    %v3248 = vld [vmem:[%s5 + $0x8c] sm:$0xf]
    %v3249 = vld [vmem:[%s5 + $0x90] sm:$0xf]
    %v3250 = vld [vmem:[%s5 + $0x94] sm:$0xf]
    %v3251 = vld [vmem:[%s5 + $0x98] sm:$0xf]
    %v3252 = vld [vmem:[%s5 + $0x9c] sm:$0xf]
    %v3253 = vld [vmem:[%s5 + $0xa0] sm:$0xf]
    %v3254 = vld [vmem:[%s5 + $0xa4] sm:$0xf]
    %v3255 = vld [vmem:[%s5 + $0xa8] sm:$0xf]
    %v3256 = vld [vmem:[%s5 + $0xac] sm:$0xf]
    %v3257 = vld [vmem:[%s5 + $0xb0] sm:$0xf]
    %v3258 = vld [vmem:[%s5 + $0xb4] sm:$0xf]
    %v3259 = vld [vmem:[%s5 + $0xb8] sm:$0xf]
    %v3260 = vld [vmem:[%s5 + $0xbc] sm:$0xf]
    %v3261 = vld [vmem:[%s5 + $0xc0] sm:$0xf]
    %v3262 = vld [vmem:[%s5 + $0xc4] sm:$0xf]
    %v3263 = vld [vmem:[%s5 + $0xc8] sm:$0xf]
    %v3264 = vld [vmem:[%s5 + $0xcc] sm:$0xf]
    %v3265 = vld [vmem:[%s5 + $0xd0] sm:$0xf]
    %v3266 = vld [vmem:[%s5 + $0xd4] sm:$0xf]
    %v3267 = vld [vmem:[%s5 + $0xd8] sm:$0xf]
    %v3268 = vld [vmem:[%s5 + $0xdc] sm:$0xf]
    %v3269 = vld [vmem:[%s5 + $0xe0] sm:$0xf]
    %v3270 = vld [vmem:[%s5 + $0xe4] sm:$0xf]
    %v3271 = vld [vmem:[%s5 + $0xe8] sm:$0xf]
    %v3272 = vld [vmem:[%s5 + $0xec] sm:$0xf]
    %v3273 = vld [vmem:[%s5 + $0xf0] sm:$0xf]
    %v3274 = vld [vmem:[%s5 + $0xf4] sm:$0xf]
    %v3275 = vld [vmem:[%s5 + $0xf8] sm:$0xf]
    %v3276 = vld [vmem:[%s5 + $0xfc] sm:$0xf]
    %v3277 = vld [vmem:[%s3 + $0x10] sm:$0xff]
    %v3278 = vld [vmem:[%s3 + $0x18] sm:$0xff]
    %v3279 = vld [vmem:[%s3 + $0x50] sm:$0xff]
    %v3280 = vld [vmem:[%s3 + $0x58] sm:$0xff]
    %v3281 = vld [vmem:[%s3 + $0x90] sm:$0xff]
    %v3282 = vld [vmem:[%s3 + $0x98] sm:$0xff]
    %v3283 = vld [vmem:[%s3 + $0xd0] sm:$0xff]
    %v3284 = vld [vmem:[%s3 + $0xd8] sm:$0xff]
    %v3285 = vld [vmem:[%s4 + $0x4] sm:$0xf]
    %v3287 = vlaneseq
    %v3288 = vshrl.u32 %v3287, 7
    %v3289 = vsub.s32 0, %v3288
    %v3290 = vrot.slane %v3285, %v3289
    %v3291 = vlaneseq
    %v3292 = vshrl.u32 %v3291, 7
    %v3293 = vsub.s32 1, %v3292
    %v3294 = vrot.slane %v3285, %v3293
    %v3295 = vlaneseq
    %v3296 = vshrl.u32 %v3295, 7
    %v3297 = vsub.s32 2, %v3296
    %v3298 = vrot.slane %v3285, %v3297
    %v3299 = vlaneseq
    %v3300 = vshrl.u32 %v3299, 7
    %v3301 = vsub.s32 3, %v3300
    %v3302 = vrot.slane %v3285, %v3301
    %v3315 = vunpack.c.l.b16 %v3277
    %v3316 = vunpack.c.h.b16 %v3277
    %v3317 = vunpack.c.l.b16 %v3278
    %v3318 = vunpack.c.h.b16 %v3278
    %v3319 = vunpack.c.l.b16 %v3279
    %v3320 = vunpack.c.h.b16 %v3279
    %v3321 = vunpack.c.l.b16 %v3280
    %v3322 = vunpack.c.h.b16 %v3280
    %v3323 = vunpack.c.l.b16 %v3281
    %v3324 = vunpack.c.h.b16 %v3281
    %v3325 = vunpack.c.l.b16 %v3282
    %v3326 = vunpack.c.h.b16 %v3282
    %v3327 = vunpack.c.l.b16 %v3283
    %v3328 = vunpack.c.h.b16 %v3283
    %v3329 = vunpack.c.l.b16 %v3284
    %v3330 = vunpack.c.h.b16 %v3284
    %v3331 = vpack.c.b16 %v3319, %v3315
    %v3332 = vpack.c.b16 %v3320, %v3316
    %v3333 = vpack.c.b16 %v3321, %v3317
    %v3334 = vpack.c.b16 %v3322, %v3318
    %v3335 = vpack.c.b16 %v3327, %v3323
    %v3336 = vpack.c.b16 %v3328, %v3324
    %v3337 = vpack.c.b16 %v3329, %v3325
    %v3338 = vpack.c.b16 %v3330, %v3326
    %3347 = vmatprep.subr.bf16.mxu0 %v3332
    %3348 = vmatpush1.bf16.msra.mxu0 %v3331
    %3349 = vmatprep.subr.bf16.mxu0 %v3336
    %3350 = vmatpush1.bf16.msra.mxu0 %v3335
    %3351 = vmatprep.subr.bf16.mxu0 0
    %3352 = vmatpush1.bf16.msra.mxu0 0
    %3353 = vmatprep.subr.bf16.mxu0 0
    %3354 = vmatpush1.bf16.msra.mxu0 0
    %3355 = vmatprep.subr.bf16.mxu0 0
    %3356 = vmatpush1.bf16.msra.mxu0 0
    %3357 = vmatprep.subr.bf16.mxu0 0
    %3358 = vmatpush1.bf16.msra.mxu0 0
    %3359 = vmatprep.subr.bf16.mxu0 0
    %3360 = vmatpush1.bf16.msra.mxu0 0
    %3361 = vmatprep.subr.bf16.mxu0 0
    %3362 = vmatpush1.bf16.msra.mxu0 0
    %3363 = vmatprep.subr.bf16.mxu0 0
    %3364 = vmatpush1.bf16.msra.mxu0 0
    %3365 = vmatprep.subr.bf16.mxu0 0
    %3366 = vmatpush1.bf16.msra.mxu0 0
    %3367 = vmatprep.subr.bf16.mxu0 0
    %3368 = vmatpush1.bf16.msra.mxu0 0
    %3369 = vmatprep.subr.bf16.mxu0 0
    %3370 = vmatpush1.bf16.msra.mxu0 0
    %3371 = vmatprep.subr.bf16.mxu0 0
    %3372 = vmatpush1.bf16.msra.mxu0 0
    %3373 = vmatprep.subr.bf16.mxu0 0
    %3374 = vmatpush1.bf16.msra.mxu0 0
    %3375 = vmatprep.subr.bf16.mxu0 0
    %3376 = vmatpush1.bf16.msra.mxu0 0
    %3377 = vmatprep.subr.bf16.mxu0 0
    %3378 = vmatpush1.bf16.msra.mxu0 0
    %3379 = vmatprep.mubr.bf16.mxu0 0
    %3380 = vmatmul.mubr.bf16.gmra.mrb[0].mxu0 %v3078
    %v3381 = vpop.f32.mrb[0].mxu0
    %v3382 = vadd.f32 %v3290, %v3381
    %v3383 = vpop.f32.mrb[0].mxu0
    %v3384 = vadd.f32 %v3294, %v3383
    %v3385 = vpop.f32.mrb[0].mxu0
    %v3386 = vadd.f32 %v3290, %v3385
    %v3387 = vpop.f32.mrb[0].mxu0
    %v3388 = vadd.f32 %v3294, %v3387
    %3389 = vmatprep.mubr.bf16.mxu0 0
    %3390 = vmatmul.mubr.bf16.gmra.mrb[0].mxu0 %v3081
    %v3391 = vpop.f32.mrb[0].mxu0
    %v3392 = vadd.f32 %v3290, %v3391
    %v3393 = vpop.f32.mrb[0].mxu0
    %v3394 = vadd.f32 %v3294, %v3393
    %v3395 = vpop.f32.mrb[0].mxu0
    %v3396 = vadd.f32 %v3290, %v3395
    %v3397 = vpop.f32.mrb[0].mxu0
    %v3398 = vadd.f32 %v3294, %v3397
    %3399 = vdwg.mxu0
    %3400 = vmatprep.subr.bf16.mxu0 %v3334
    %3401 = vmatpush1.bf16.msra.mxu0 %v3333
    %3402 = vmatprep.subr.bf16.mxu0 %v3338
    %3403 = vmatpush1.bf16.msra.mxu0 %v3337
    %3404 = vmatprep.subr.bf16.mxu0 0
    %3405 = vmatpush1.bf16.msra.mxu0 0
    %3406 = vmatprep.subr.bf16.mxu0 0
    %3407 = vmatpush1.bf16.msra.mxu0 0
    %3408 = vmatprep.subr.bf16.mxu0 0
    %3409 = vmatpush1.bf16.msra.mxu0 0
    %3410 = vmatprep.subr.bf16.mxu0 0
    %3411 = vmatpush1.bf16.msra.mxu0 0
    %3412 = vmatprep.subr.bf16.mxu0 0
    %3413 = vmatpush1.bf16.msra.mxu0 0
    %3414 = vmatprep.subr.bf16.mxu0 0
    %3415 = vmatpush1.bf16.msra.mxu0 0
    %3416 = vmatprep.subr.bf16.mxu0 0
    %3417 = vmatpush1.bf16.msra.mxu0 0
    %3418 = vmatprep.subr.bf16.mxu0 0
    %3419 = vmatpush1.bf16.msra.mxu0 0
    %3420 = vmatprep.subr.bf16.mxu0 0
    %3421 = vmatpush1.bf16.msra.mxu0 0
    %3422 = vmatprep.subr.bf16.mxu0 0
    %3423 = vmatpush1.bf16.msra.mxu0 0
    %3424 = vmatprep.subr.bf16.mxu0 0
    %3425 = vmatpush1.bf16.msra.mxu0 0
    %3426 = vmatprep.subr.bf16.mxu0 0
    %3427 = vmatpush1.bf16.msra.mxu0 0
    %3428 = vmatprep.subr.bf16.mxu0 0
    %3429 = vmatpush1.bf16.msra.mxu0 0
    %3430 = vmatprep.subr.bf16.mxu0 0
    %3431 = vmatpush1.bf16.msra.mxu0 0
    %3432 = vmatprep.mubr.bf16.mxu0 0
    %3433 = vmatmul.mubr.bf16.gmra.mrb[0].mxu0 %v3078
    %v3434 = vpop.f32.mrb[0].mxu0
    %v3435 = vadd.f32 %v3298, %v3434
    %v3436 = vpop.f32.mrb[0].mxu0
    %v3437 = vadd.f32 %v3302, %v3436
    %v3438 = vpop.f32.mrb[0].mxu0
    %v3439 = vadd.f32 %v3298, %v3438
    %v3440 = vpop.f32.mrb[0].mxu0
    %v3441 = vadd.f32 %v3302, %v3440
    %3442 = vmatprep.mubr.bf16.mxu0 0
    %3443 = vmatmul.mubr.bf16.gmra.mrb[0].mxu0 %v3081
    %v3444 = vpop.f32.mrb[0].mxu0
    %v3445 = vadd.f32 %v3298, %v3444
    %v3446 = vpop.f32.mrb[0].mxu0
    %v3447 = vadd.f32 %v3302, %v3446
    %v3448 = vpop.f32.mrb[0].mxu0
    %v3449 = vadd.f32 %v3298, %v3448
    %v3450 = vpop.f32.mrb[0].mxu0
    %v3451 = vadd.f32 %v3302, %v3450
    %3452 = vdwg.mxu0
    %v3453 = vmax.f32 %v3382, 0.0
    %v3454 = vmax.f32 %v3384, 0.0
    %v3455 = vmax.f32 %v3435, 0.0
    %v3456 = vmax.f32 %v3437, 0.0
    %v3457 = vmax.f32 %v3386, 0.0
    %v3458 = vmax.f32 %v3388, 0.0
    %v3459 = vmax.f32 %v3439, 0.0
    %v3460 = vmax.f32 %v3441, 0.0
    %v3461 = vmax.f32 %v3392, 0.0
    %v3462 = vmax.f32 %v3394, 0.0
    %v3463 = vmax.f32 %v3445, 0.0
    %v3464 = vmax.f32 %v3447, 0.0
    %v3465 = vmax.f32 %v3396, 0.0
    %v3466 = vmax.f32 %v3398, 0.0
    %v3467 = vmax.f32 %v3449, 0.0
    %v3468 = vmax.f32 %v3451, 0.0
    %v3469 = vpack.c.bf16 %v3457, %v3453
    %v3470 = vpack.c.bf16 %v3458, %v3454
    %v3471 = vpack.c.bf16 %v3459, %v3455
    %v3472 = vpack.c.bf16 %v3460, %v3456
    %v3473 = vpack.c.bf16 %v3465, %v3461
    %v3474 = vpack.c.bf16 %v3466, %v3462
    %v3475 = vpack.c.bf16 %v3467, %v3463
    %v3476 = vpack.c.bf16 %v3468, %v3464
    %v3477 = vld [vmem:[%s5 + $0x100] sm:$0xf]
    %v3478 = vld [vmem:[%s5 + $0x104] sm:$0xf]
    %v3479 = vld [vmem:[%s5 + $0x108] sm:$0xf]
    %v3480 = vld [vmem:[%s5 + $0x10c] sm:$0xf]
    %v3481 = vld [vmem:[%s5 + $0x110] sm:$0xf]
    %v3482 = vld [vmem:[%s5 + $0x114] sm:$0xf]
    %v3483 = vld [vmem:[%s5 + $0x118] sm:$0xf]
    %v3484 = vld [vmem:[%s5 + $0x11c] sm:$0xf]
    %v3485 = vld [vmem:[%s5 + $0x120] sm:$0xf]
    %v3486 = vld [vmem:[%s5 + $0x124] sm:$0xf]
    %v3487 = vld [vmem:[%s5 + $0x128] sm:$0xf]
    %v3488 = vld [vmem:[%s5 + $0x12c] sm:$0xf]
    %v3489 = vld [vmem:[%s5 + $0x130] sm:$0xf]
    %v3490 = vld [vmem:[%s5 + $0x134] sm:$0xf]
    %v3491 = vld [vmem:[%s5 + $0x138] sm:$0xf]
    %v3492 = vld [vmem:[%s5 + $0x13c] sm:$0xf]
    %v3493 = vld [vmem:[%s5 + $0x140] sm:$0xf]
    %v3494 = vld [vmem:[%s5 + $0x144] sm:$0xf]
    %v3495 = vld [vmem:[%s5 + $0x148] sm:$0xf]
    %v3496 = vld [vmem:[%s5 + $0x14c] sm:$0xf]
    %v3497 = vld [vmem:[%s5 + $0x150] sm:$0xf]
    %v3498 = vld [vmem:[%s5 + $0x154] sm:$0xf]
    %v3499 = vld [vmem:[%s5 + $0x158] sm:$0xf]
    %v3500 = vld [vmem:[%s5 + $0x15c] sm:$0xf]
    %v3501 = vld [vmem:[%s5 + $0x160] sm:$0xf]
    %v3502 = vld [vmem:[%s5 + $0x164] sm:$0xf]
    %v3503 = vld [vmem:[%s5 + $0x168] sm:$0xf]
    %v3504 = vld [vmem:[%s5 + $0x16c] sm:$0xf]
    %v3505 = vld [vmem:[%s5 + $0x170] sm:$0xf]
    %v3506 = vld [vmem:[%s5 + $0x174] sm:$0xf]
    %v3507 = vld [vmem:[%s5 + $0x178] sm:$0xf]
    %v3508 = vld [vmem:[%s5 + $0x17c] sm:$0xf]
    %v3509 = vld [vmem:[%s5 + $0x180] sm:$0xf]
    %v3510 = vld [vmem:[%s5 + $0x184] sm:$0xf]
    %v3511 = vld [vmem:[%s5 + $0x188] sm:$0xf]
    %v3512 = vld [vmem:[%s5 + $0x18c] sm:$0xf]
    %v3513 = vld [vmem:[%s5 + $0x190] sm:$0xf]
    %v3514 = vld [vmem:[%s5 + $0x194] sm:$0xf]
    %v3515 = vld [vmem:[%s5 + $0x198] sm:$0xf]
    %v3516 = vld [vmem:[%s5 + $0x19c] sm:$0xf]
    %v3517 = vld [vmem:[%s5 + $0x1a0] sm:$0xf]
    %v3518 = vld [vmem:[%s5 + $0x1a4] sm:$0xf]
    %v3519 = vld [vmem:[%s5 + $0x1a8] sm:$0xf]
    %v3520 = vld [vmem:[%s5 + $0x1ac] sm:$0xf]
    %v3521 = vld [vmem:[%s5 + $0x1b0] sm:$0xf]
    %v3522 = vld [vmem:[%s5 + $0x1b4] sm:$0xf]
    %v3523 = vld [vmem:[%s5 + $0x1b8] sm:$0xf]
    %v3524 = vld [vmem:[%s5 + $0x1bc] sm:$0xf]
    %v3525 = vld [vmem:[%s5 + $0x1c0] sm:$0xf]
    %v3526 = vld [vmem:[%s5 + $0x1c4] sm:$0xf]
    %v3527 = vld [vmem:[%s5 + $0x1c8] sm:$0xf]
    %v3528 = vld [vmem:[%s5 + $0x1cc] sm:$0xf]
    %v3529 = vld [vmem:[%s5 + $0x1d0] sm:$0xf]
    %v3530 = vld [vmem:[%s5 + $0x1d4] sm:$0xf]
    %v3531 = vld [vmem:[%s5 + $0x1d8] sm:$0xf]
    %v3532 = vld [vmem:[%s5 + $0x1dc] sm:$0xf]
    %v3533 = vld [vmem:[%s5 + $0x1e0] sm:$0xf]
    %v3534 = vld [vmem:[%s5 + $0x1e4] sm:$0xf]
    %v3535 = vld [vmem:[%s5 + $0x1e8] sm:$0xf]
    %v3536 = vld [vmem:[%s5 + $0x1ec] sm:$0xf]
    %v3537 = vld [vmem:[%s5 + $0x1f0] sm:$0xf]
    %v3538 = vld [vmem:[%s5 + $0x1f4] sm:$0xf]
    %v3539 = vld [vmem:[%s5 + $0x1f8] sm:$0xf]
    %v3540 = vld [vmem:[%s5 + $0x1fc] sm:$0xf]
    %v3605 = vunpack.c.l.b16 %v3477
    %v3606 = vunpack.c.l.b16 %v3478
    %v3607 = vunpack.c.l.b16 %v3479
    %v3608 = vunpack.c.l.b16 %v3480
    %v3609 = vunpack.c.l.b16 %v3481
    %v3610 = vunpack.c.l.b16 %v3482
    %v3611 = vunpack.c.l.b16 %v3483
    %v3612 = vunpack.c.l.b16 %v3484
    %v3613 = vunpack.c.l.b16 %v3485
    %v3614 = vunpack.c.l.b16 %v3486
    %v3615 = vunpack.c.l.b16 %v3487
    %v3616 = vunpack.c.l.b16 %v3488
    %v3617 = vunpack.c.l.b16 %v3489
    %v3618 = vunpack.c.l.b16 %v3490
    %v3619 = vunpack.c.l.b16 %v3491
    %v3620 = vunpack.c.l.b16 %v3492
    %v3621 = vunpack.c.l.b16 %v3493
    %v3622 = vunpack.c.l.b16 %v3494
    %v3623 = vunpack.c.l.b16 %v3495
    %v3624 = vunpack.c.l.b16 %v3496
    %v3625 = vunpack.c.l.b16 %v3497
    %v3626 = vunpack.c.l.b16 %v3498
    %v3627 = vunpack.c.l.b16 %v3499
    %v3628 = vunpack.c.l.b16 %v3500
    %v3629 = vunpack.c.l.b16 %v3501
    %v3630 = vunpack.c.l.b16 %v3502
    %v3631 = vunpack.c.l.b16 %v3503
    %v3632 = vunpack.c.l.b16 %v3504
    %v3633 = vunpack.c.l.b16 %v3505
    %v3634 = vunpack.c.l.b16 %v3506
    %v3635 = vunpack.c.l.b16 %v3507
    %v3636 = vunpack.c.l.b16 %v3508
    %v3637 = vunpack.c.l.b16 %v3509
    %v3638 = vunpack.c.l.b16 %v3510
    %v3639 = vunpack.c.l.b16 %v3511
    %v3640 = vunpack.c.l.b16 %v3512
    %v3641 = vunpack.c.l.b16 %v3513
    %v3642 = vunpack.c.l.b16 %v3514
    %v3643 = vunpack.c.l.b16 %v3515
    %v3644 = vunpack.c.l.b16 %v3516
    %v3645 = vunpack.c.l.b16 %v3517
    %v3646 = vunpack.c.l.b16 %v3518
    %v3647 = vunpack.c.l.b16 %v3519
    %v3648 = vunpack.c.l.b16 %v3520
    %v3649 = vunpack.c.l.b16 %v3521
    %v3650 = vunpack.c.l.b16 %v3522
    %v3651 = vunpack.c.l.b16 %v3523
    %v3652 = vunpack.c.l.b16 %v3524
    %v3653 = vunpack.c.l.b16 %v3525
    %v3654 = vunpack.c.l.b16 %v3526
    %v3655 = vunpack.c.l.b16 %v3527
    %v3656 = vunpack.c.l.b16 %v3528
    %v3657 = vunpack.c.l.b16 %v3529
    %v3658 = vunpack.c.l.b16 %v3530
    %v3659 = vunpack.c.l.b16 %v3531
    %v3660 = vunpack.c.l.b16 %v3532
    %v3661 = vunpack.c.l.b16 %v3533
    %v3662 = vunpack.c.l.b16 %v3534
    %v3663 = vunpack.c.l.b16 %v3535
    %v3664 = vunpack.c.l.b16 %v3536
    %v3665 = vunpack.c.l.b16 %v3537
    %v3666 = vunpack.c.l.b16 %v3538
    %v3667 = vunpack.c.l.b16 %v3539
    %v3668 = vunpack.c.l.b16 %v3540
    %v3669 = vpack.c.b16 %v3606, %v3605
    %v3670 = vpack.c.b16 %v3608, %v3607
    %v3671 = vpack.c.b16 %v3610, %v3609
    %v3672 = vpack.c.b16 %v3612, %v3611
    %v3673 = vpack.c.b16 %v3614, %v3613
    %v3674 = vpack.c.b16 %v3616, %v3615
    %v3675 = vpack.c.b16 %v3618, %v3617
    %v3676 = vpack.c.b16 %v3620, %v3619
    %v3677 = vpack.c.b16 %v3622, %v3621
    %v3678 = vpack.c.b16 %v3624, %v3623
    %v3679 = vpack.c.b16 %v3626, %v3625
    %v3680 = vpack.c.b16 %v3628, %v3627
    %v3681 = vpack.c.b16 %v3630, %v3629
    %v3682 = vpack.c.b16 %v3632, %v3631
    %v3683 = vpack.c.b16 %v3634, %v3633
    %v3684 = vpack.c.b16 %v3636, %v3635
    %v3685 = vpack.c.b16 %v3638, %v3637
    %v3686 = vpack.c.b16 %v3640, %v3639
    %v3687 = vpack.c.b16 %v3642, %v3641
    %v3688 = vpack.c.b16 %v3644, %v3643
    %v3689 = vpack.c.b16 %v3646, %v3645
    %v3690 = vpack.c.b16 %v3648, %v3647
    %v3691 = vpack.c.b16 %v3650, %v3649
    %v3692 = vpack.c.b16 %v3652, %v3651
    %v3693 = vpack.c.b16 %v3654, %v3653
    %v3694 = vpack.c.b16 %v3656, %v3655
    %v3695 = vpack.c.b16 %v3658, %v3657
    %v3696 = vpack.c.b16 %v3660, %v3659
    %v3697 = vpack.c.b16 %v3662, %v3661
    %v3698 = vpack.c.b16 %v3664, %v3663
    %v3699 = vpack.c.b16 %v3666, %v3665
    %v3700 = vpack.c.b16 %v3668, %v3667
    %3733 = vmatprep.subr.bf16.mxu0 0
    %3734 = vmatpush1.bf16.msra.mxu0 %v3669
    %3735 = vmatprep.subr.bf16.mxu0 0
    %3736 = vmatpush1.bf16.msra.mxu0 %v3670
    %3737 = vmatprep.subr.bf16.mxu0 0
    %3738 = vmatpush1.bf16.msra.mxu0 %v3671
    %3739 = vmatprep.subr.bf16.mxu0 0
    %3740 = vmatpush1.bf16.msra.mxu0 %v3672
    %3741 = vmatprep.subr.bf16.mxu0 0
    %3742 = vmatpush1.bf16.msra.mxu0 %v3673
    %3743 = vmatprep.subr.bf16.mxu0 0
    %3744 = vmatpush1.bf16.msra.mxu0 %v3674
    %3745 = vmatprep.subr.bf16.mxu0 0
    %3746 = vmatpush1.bf16.msra.mxu0 %v3675
    %3747 = vmatprep.subr.bf16.mxu0 0
    %3748 = vmatpush1.bf16.msra.mxu0 %v3676
    %3749 = vmatprep.subr.bf16.mxu0 0
    %3750 = vmatpush1.bf16.msra.mxu0 %v3677
    %3751 = vmatprep.subr.bf16.mxu0 0
    %3752 = vmatpush1.bf16.msra.mxu0 %v3678
    %3753 = vmatprep.subr.bf16.mxu0 0
    %3754 = vmatpush1.bf16.msra.mxu0 %v3679
    %3755 = vmatprep.subr.bf16.mxu0 0
    %3756 = vmatpush1.bf16.msra.mxu0 %v3680
    %3757 = vmatprep.subr.bf16.mxu0 0
    %3758 = vmatpush1.bf16.msra.mxu0 %v3681
    %3759 = vmatprep.subr.bf16.mxu0 0
    %3760 = vmatpush1.bf16.msra.mxu0 %v3682
    %3761 = vmatprep.subr.bf16.mxu0 0
    %3762 = vmatpush1.bf16.msra.mxu0 %v3683
    %3763 = vmatprep.subr.bf16.mxu0 0
    %3764 = vmatpush1.bf16.msra.mxu0 %v3684
    %3765 = vmatprep.mubr.bf16.mxu0 %v3470
    %3766 = vmatmul.mubr.bf16.gmra.mrb[0].mxu0 %v3469
    %v3767 = vpop.f32.mrb[0].mxu0
    %v3768 = vadd.f32 0.0, %v3767
    %v3769 = vpop.f32.mrb[0].mxu0
    %v3770 = vpop.f32.mrb[0].mxu0
    %v3771 = vadd.f32 0.0, %v3770
    %v3772 = vpop.f32.mrb[0].mxu0
    %3773 = vmatprep.mubr.bf16.mxu0 %v3474
    %3774 = vmatmul.mubr.bf16.gmra.mrb[0].mxu0 %v3473
    %v3775 = vpop.f32.mrb[0].mxu0
    %v3776 = vadd.f32 0.0, %v3775
    %v3777 = vpop.f32.mrb[0].mxu0
    %v3778 = vpop.f32.mrb[0].mxu0
    %v3779 = vadd.f32 0.0, %v3778
    %v3780 = vpop.f32.mrb[0].mxu0
    %3781 = vdwg.mxu0
    %3782 = vmatprep.subr.bf16.mxu0 0
    %3783 = vmatpush1.bf16.msra.mxu0 %v3685
    %3784 = vmatprep.subr.bf16.mxu0 0
    %3785 = vmatpush1.bf16.msra.mxu0 %v3686
    %3786 = vmatprep.subr.bf16.mxu0 0
    %3787 = vmatpush1.bf16.msra.mxu0 %v3687
    %3788 = vmatprep.subr.bf16.mxu0 0
    %3789 = vmatpush1.bf16.msra.mxu0 %v3688
    %3790 = vmatprep.subr.bf16.mxu0 0
    %3791 = vmatpush1.bf16.msra.mxu0 %v3689
    %3792 = vmatprep.subr.bf16.mxu0 0
    %3793 = vmatpush1.bf16.msra.mxu0 %v3690
    %3794 = vmatprep.subr.bf16.mxu0 0
    %3795 = vmatpush1.bf16.msra.mxu0 %v3691
    %3796 = vmatprep.subr.bf16.mxu0 0
    %3797 = vmatpush1.bf16.msra.mxu0 %v3692
    %3798 = vmatprep.subr.bf16.mxu0 0
    %3799 = vmatpush1.bf16.msra.mxu0 %v3693
    %3800 = vmatprep.subr.bf16.mxu0 0
    %3801 = vmatpush1.bf16.msra.mxu0 %v3694
    %3802 = vmatprep.subr.bf16.mxu0 0
    %3803 = vmatpush1.bf16.msra.mxu0 %v3695
    %3804 = vmatprep.subr.bf16.mxu0 0
    %3805 = vmatpush1.bf16.msra.mxu0 %v3696
    %3806 = vmatprep.subr.bf16.mxu0 0
    %3807 = vmatpush1.bf16.msra.mxu0 %v3697
    %3808 = vmatprep.subr.bf16.mxu0 0
    %3809 = vmatpush1.bf16.msra.mxu0 %v3698
    %3810 = vmatprep.subr.bf16.mxu0 0
    %3811 = vmatpush1.bf16.msra.mxu0 %v3699
    %3812 = vmatprep.subr.bf16.mxu0 0
    %3813 = vmatpush1.bf16.msra.mxu0 %v3700
    %3814 = vmatprep.mubr.bf16.mxu0 %v3472
    %3815 = vmatmul.mubr.bf16.gmra.mrb[0].mxu0 %v3471
    %v3816 = vpop.f32.mrb[0].mxu0
    %v3817 = vadd.f32 %v3768, %v3816
    %v3818 = vpop.f32.mrb[0].mxu0
    %v3819 = vpop.f32.mrb[0].mxu0
    %v3820 = vadd.f32 %v3771, %v3819
    %v3821 = vpop.f32.mrb[0].mxu0
    %3822 = vmatprep.mubr.bf16.mxu0 %v3476
    %3823 = vmatmul.mubr.bf16.gmra.mrb[0].mxu0 %v3475
    %v3824 = vpop.f32.mrb[0].mxu0
    %v3825 = vadd.f32 %v3776, %v3824
    %v3826 = vpop.f32.mrb[0].mxu0
    %v3827 = vpop.f32.mrb[0].mxu0
    %v3828 = vadd.f32 %v3779, %v3827
    %v3829 = vpop.f32.mrb[0].mxu0
    %3830 = vdwg.mxu0
    %v3895 = vunpack.c.l.b16 %v3213
    %v3896 = vunpack.c.l.b16 %v3214
    %v3897 = vunpack.c.l.b16 %v3215
    %v3898 = vunpack.c.l.b16 %v3216
    %v3899 = vunpack.c.l.b16 %v3217
    %v3900 = vunpack.c.l.b16 %v3218
    %v3901 = vunpack.c.l.b16 %v3219
    %v3902 = vunpack.c.l.b16 %v3220
    %v3903 = vunpack.c.l.b16 %v3221
    %v3904 = vunpack.c.l.b16 %v3222
    %v3905 = vunpack.c.l.b16 %v3223
    %v3906 = vunpack.c.l.b16 %v3224
    %v3907 = vunpack.c.l.b16 %v3225
    %v3908 = vunpack.c.l.b16 %v3226
    %v3909 = vunpack.c.l.b16 %v3227
    %v3910 = vunpack.c.l.b16 %v3228
    %v3911 = vunpack.c.l.b16 %v3229
    %v3912 = vunpack.c.l.b16 %v3230
    %v3913 = vunpack.c.l.b16 %v3231
    %v3914 = vunpack.c.l.b16 %v3232
    %v3915 = vunpack.c.l.b16 %v3233
    %v3916 = vunpack.c.l.b16 %v3234
    %v3917 = vunpack.c.l.b16 %v3235
    %v3918 = vunpack.c.l.b16 %v3236
    %v3919 = vunpack.c.l.b16 %v3237
    %v3920 = vunpack.c.l.b16 %v3238
    %v3921 = vunpack.c.l.b16 %v3239
    %v3922 = vunpack.c.l.b16 %v3240
    %v3923 = vunpack.c.l.b16 %v3241
    %v3924 = vunpack.c.l.b16 %v3242
    %v3925 = vunpack.c.l.b16 %v3243
    %v3926 = vunpack.c.l.b16 %v3244
    %v3927 = vunpack.c.l.b16 %v3245
    %v3928 = vunpack.c.l.b16 %v3246
    %v3929 = vunpack.c.l.b16 %v3247
    %v3930 = vunpack.c.l.b16 %v3248
    %v3931 = vunpack.c.l.b16 %v3249
    %v3932 = vunpack.c.l.b16 %v3250
    %v3933 = vunpack.c.l.b16 %v3251
    %v3934 = vunpack.c.l.b16 %v3252
    %v3935 = vunpack.c.l.b16 %v3253
    %v3936 = vunpack.c.l.b16 %v3254
    %v3937 = vunpack.c.l.b16 %v3255
    %v3938 = vunpack.c.l.b16 %v3256
    %v3939 = vunpack.c.l.b16 %v3257
    %v3940 = vunpack.c.l.b16 %v3258
    %v3941 = vunpack.c.l.b16 %v3259
    %v3942 = vunpack.c.l.b16 %v3260
    %v3943 = vunpack.c.l.b16 %v3261
    %v3944 = vunpack.c.l.b16 %v3262
    %v3945 = vunpack.c.l.b16 %v3263
    %v3946 = vunpack.c.l.b16 %v3264
    %v3947 = vunpack.c.l.b16 %v3265
    %v3948 = vunpack.c.l.b16 %v3266
    %v3949 = vunpack.c.l.b16 %v3267
    %v3950 = vunpack.c.l.b16 %v3268
    %v3951 = vunpack.c.l.b16 %v3269
    %v3952 = vunpack.c.l.b16 %v3270
    %v3953 = vunpack.c.l.b16 %v3271
    %v3954 = vunpack.c.l.b16 %v3272
    %v3955 = vunpack.c.l.b16 %v3273
    %v3956 = vunpack.c.l.b16 %v3274
    %v3957 = vunpack.c.l.b16 %v3275
    %v3958 = vunpack.c.l.b16 %v3276
    %v3959 = vpack.c.b16 %v3896, %v3895
    %v3960 = vpack.c.b16 %v3898, %v3897
    %v3961 = vpack.c.b16 %v3900, %v3899
    %v3962 = vpack.c.b16 %v3902, %v3901
    %v3963 = vpack.c.b16 %v3904, %v3903
    %v3964 = vpack.c.b16 %v3906, %v3905
    %v3965 = vpack.c.b16 %v3908, %v3907
    %v3966 = vpack.c.b16 %v3910, %v3909
    %v3967 = vpack.c.b16 %v3912, %v3911
    %v3968 = vpack.c.b16 %v3914, %v3913
    %v3969 = vpack.c.b16 %v3916, %v3915
    %v3970 = vpack.c.b16 %v3918, %v3917
    %v3971 = vpack.c.b16 %v3920, %v3919
    %v3972 = vpack.c.b16 %v3922, %v3921
    %v3973 = vpack.c.b16 %v3924, %v3923
    %v3974 = vpack.c.b16 %v3926, %v3925
    %v3975 = vpack.c.b16 %v3928, %v3927
    %v3976 = vpack.c.b16 %v3930, %v3929
    %v3977 = vpack.c.b16 %v3932, %v3931
    %v3978 = vpack.c.b16 %v3934, %v3933
    %v3979 = vpack.c.b16 %v3936, %v3935
    %v3980 = vpack.c.b16 %v3938, %v3937
    %v3981 = vpack.c.b16 %v3940, %v3939
    %v3982 = vpack.c.b16 %v3942, %v3941
    %v3983 = vpack.c.b16 %v3944, %v3943
    %v3984 = vpack.c.b16 %v3946, %v3945
    %v3985 = vpack.c.b16 %v3948, %v3947
    %v3986 = vpack.c.b16 %v3950, %v3949
    %v3987 = vpack.c.b16 %v3952, %v3951
    %v3988 = vpack.c.b16 %v3954, %v3953
    %v3989 = vpack.c.b16 %v3956, %v3955
    %v3990 = vpack.c.b16 %v3958, %v3957
    %4023 = vmatprep.subr.bf16.mxu0 0
    %4024 = vmatpush1.bf16.msra.mxu0 %v3959
    %4025 = vmatprep.subr.bf16.mxu0 0
    %4026 = vmatpush1.bf16.msra.mxu0 %v3960
    %4027 = vmatprep.subr.bf16.mxu0 0
    %4028 = vmatpush1.bf16.msra.mxu0 %v3961
    %4029 = vmatprep.subr.bf16.mxu0 0
    %4030 = vmatpush1.bf16.msra.mxu0 %v3962
    %4031 = vmatprep.subr.bf16.mxu0 0
    %4032 = vmatpush1.bf16.msra.mxu0 %v3963
    %4033 = vmatprep.subr.bf16.mxu0 0
    %4034 = vmatpush1.bf16.msra.mxu0 %v3964
    %4035 = vmatprep.subr.bf16.mxu0 0
    %4036 = vmatpush1.bf16.msra.mxu0 %v3965
    %4037 = vmatprep.subr.bf16.mxu0 0
    %4038 = vmatpush1.bf16.msra.mxu0 %v3966
    %4039 = vmatprep.subr.bf16.mxu0 0
    %4040 = vmatpush1.bf16.msra.mxu0 %v3967
    %4041 = vmatprep.subr.bf16.mxu0 0
    %4042 = vmatpush1.bf16.msra.mxu0 %v3968
    %4043 = vmatprep.subr.bf16.mxu0 0
    %4044 = vmatpush1.bf16.msra.mxu0 %v3969
    %4045 = vmatprep.subr.bf16.mxu0 0
    %4046 = vmatpush1.bf16.msra.mxu0 %v3970
    %4047 = vmatprep.subr.bf16.mxu0 0
    %4048 = vmatpush1.bf16.msra.mxu0 %v3971
    %4049 = vmatprep.subr.bf16.mxu0 0
    %4050 = vmatpush1.bf16.msra.mxu0 %v3972
    %4051 = vmatprep.subr.bf16.mxu0 0
    %4052 = vmatpush1.bf16.msra.mxu0 %v3973
    %4053 = vmatprep.subr.bf16.mxu0 0
    %4054 = vmatpush1.bf16.msra.mxu0 %v3974
    %4055 = vmatprep.mubr.bf16.mxu0 %v3206
    %4056 = vmatmul.mubr.bf16.gmra.mrb[0].mxu0 %v3205
    %v4057 = vpop.f32.mrb[0].mxu0
    %v4058 = vadd.f32 %v3817, %v4057
    %v4059 = vpop.f32.mrb[0].mxu0
    %v4060 = vpop.f32.mrb[0].mxu0
    %v4061 = vadd.f32 %v3820, %v4060
    %v4062 = vpop.f32.mrb[0].mxu0
    %4063 = vmatprep.mubr.bf16.mxu0 %v3210
    %4064 = vmatmul.mubr.bf16.gmra.mrb[0].mxu0 %v3209
    %v4065 = vpop.f32.mrb[0].mxu0
    %v4066 = vadd.f32 %v3825, %v4065
    %v4067 = vpop.f32.mrb[0].mxu0
    %v4068 = vpop.f32.mrb[0].mxu0
    %v4069 = vadd.f32 %v3828, %v4068
    %v4070 = vpop.f32.mrb[0].mxu0
    %4071 = vdwg.mxu0
    %4072 = vmatprep.subr.bf16.mxu0 0
    %4073 = vmatpush1.bf16.msra.mxu0 %v3975
    %4074 = vmatprep.subr.bf16.mxu0 0
    %4075 = vmatpush1.bf16.msra.mxu0 %v3976
    %4076 = vmatprep.subr.bf16.mxu0 0
    %4077 = vmatpush1.bf16.msra.mxu0 %v3977
    %4078 = vmatprep.subr.bf16.mxu0 0
    %4079 = vmatpush1.bf16.msra.mxu0 %v3978
    %4080 = vmatprep.subr.bf16.mxu0 0
    %4081 = vmatpush1.bf16.msra.mxu0 %v3979
    %4082 = vmatprep.subr.bf16.mxu0 0
    %4083 = vmatpush1.bf16.msra.mxu0 %v3980
    %4084 = vmatprep.subr.bf16.mxu0 0
    %4085 = vmatpush1.bf16.msra.mxu0 %v3981
    %4086 = vmatprep.subr.bf16.mxu0 0
    %4087 = vmatpush1.bf16.msra.mxu0 %v3982
    %4088 = vmatprep.subr.bf16.mxu0 0
    %4089 = vmatpush1.bf16.msra.mxu0 %v3983
    %4090 = vmatprep.subr.bf16.mxu0 0
    %4091 = vmatpush1.bf16.msra.mxu0 %v3984
    %4092 = vmatprep.subr.bf16.mxu0 0
    %4093 = vmatpush1.bf16.msra.mxu0 %v3985
    %4094 = vmatprep.subr.bf16.mxu0 0
    %4095 = vmatpush1.bf16.msra.mxu0 %v3986
    %4096 = vmatprep.subr.bf16.mxu0 0
    %4097 = vmatpush1.bf16.msra.mxu0 %v3987
    %4098 = vmatprep.subr.bf16.mxu0 0
    %4099 = vmatpush1.bf16.msra.mxu0 %v3988
    %4100 = vmatprep.subr.bf16.mxu0 0
    %4101 = vmatpush1.bf16.msra.mxu0 %v3989
    %4102 = vmatprep.subr.bf16.mxu0 0
    %4103 = vmatpush1.bf16.msra.mxu0 %v3990
    %4104 = vmatprep.mubr.bf16.mxu0 %v3208
    %4105 = vmatmul.mubr.bf16.gmra.mrb[0].mxu0 %v3207
    %v4106 = vpop.f32.mrb[0].mxu0
    %v4107 = vadd.f32 %v4058, %v4106
    %v4108 = vpop.f32.mrb[0].mxu0
    %v4109 = vpop.f32.mrb[0].mxu0
    %v4110 = vadd.f32 %v4061, %v4109
    %v4111 = vpop.f32.mrb[0].mxu0
    %4112 = vmatprep.mubr.bf16.mxu0 %v3212
    %4113 = vmatmul.mubr.bf16.gmra.mrb[0].mxu0 %v3211
    %v4114 = vpop.f32.mrb[0].mxu0
    %v4115 = vadd.f32 %v4066, %v4114
    %v4116 = vpop.f32.mrb[0].mxu0
    %v4117 = vpop.f32.mrb[0].mxu0
    %v4118 = vadd.f32 %v4069, %v4117
    %v4119 = vpop.f32.mrb[0].mxu0
    %4120 = vdwg.mxu0
    %v4121 = vld [vmem:[%s3 + $0x20] sm:$0xff]
    %v4122 = vld [vmem:[%s3 + $0x28] sm:$0xff]
    %v4123 = vld [vmem:[%s3 + $0x60] sm:$0xff]
    %v4124 = vld [vmem:[%s3 + $0x68] sm:$0xff]
    %v4125 = vld [vmem:[%s3 + $0xa0] sm:$0xff]
    %v4126 = vld [vmem:[%s3 + $0xa8] sm:$0xff]
    %v4127 = vld [vmem:[%s3 + $0xe0] sm:$0xff]
    %v4128 = vld [vmem:[%s3 + $0xe8] sm:$0xff]
    %v4129 = vld [vmem:[%s4 + $0x8] sm:$0xf]
    %v4131 = vlaneseq
    %v4132 = vshrl.u32 %v4131, 7
    %v4133 = vsub.s32 0, %v4132
    %v4134 = vrot.slane %v4129, %v4133
    %v4135 = vlaneseq
    %v4136 = vshrl.u32 %v4135, 7
    %v4137 = vsub.s32 1, %v4136
    %v4138 = vrot.slane %v4129, %v4137
    %v4139 = vlaneseq
    %v4140 = vshrl.u32 %v4139, 7
    %v4141 = vsub.s32 2, %v4140
    %v4142 = vrot.slane %v4129, %v4141
    %v4143 = vlaneseq
    %v4144 = vshrl.u32 %v4143, 7
    %v4145 = vsub.s32 3, %v4144
    %v4146 = vrot.slane %v4129, %v4145
    %v4159 = vunpack.c.l.b16 %v4121
    %v4160 = vunpack.c.h.b16 %v4121
    %v4161 = vunpack.c.l.b16 %v4122
    %v4162 = vunpack.c.h.b16 %v4122
    %v4163 = vunpack.c.l.b16 %v4123
    %v4164 = vunpack.c.h.b16 %v4123
    %v4165 = vunpack.c.l.b16 %v4124
    %v4166 = vunpack.c.h.b16 %v4124
    %v4167 = vunpack.c.l.b16 %v4125
    %v4168 = vunpack.c.h.b16 %v4125
    %v4169 = vunpack.c.l.b16 %v4126
    %v4170 = vunpack.c.h.b16 %v4126
    %v4171 = vunpack.c.l.b16 %v4127
    %v4172 = vunpack.c.h.b16 %v4127
    %v4173 = vunpack.c.l.b16 %v4128
    %v4174 = vunpack.c.h.b16 %v4128
    %v4175 = vpack.c.b16 %v4163, %v4159
    %v4176 = vpack.c.b16 %v4164, %v4160
    %v4177 = vpack.c.b16 %v4165, %v4161
    %v4178 = vpack.c.b16 %v4166, %v4162
    %v4179 = vpack.c.b16 %v4171, %v4167
    %v4180 = vpack.c.b16 %v4172, %v4168
    %v4181 = vpack.c.b16 %v4173, %v4169
    %v4182 = vpack.c.b16 %v4174, %v4170
    %4191 = vmatprep.subr.bf16.mxu0 %v4176
    %4192 = vmatpush1.bf16.msra.mxu0 %v4175
    %4193 = vmatprep.subr.bf16.mxu0 %v4180
    %4194 = vmatpush1.bf16.msra.mxu0 %v4179
    %4195 = vmatprep.subr.bf16.mxu0 0
    %4196 = vmatpush1.bf16.msra.mxu0 0
    %4197 = vmatprep.subr.bf16.mxu0 0
    %4198 = vmatpush1.bf16.msra.mxu0 0
    %4199 = vmatprep.subr.bf16.mxu0 0
    %4200 = vmatpush1.bf16.msra.mxu0 0
    %4201 = vmatprep.subr.bf16.mxu0 0
    %4202 = vmatpush1.bf16.msra.mxu0 0
    %4203 = vmatprep.subr.bf16.mxu0 0
    %4204 = vmatpush1.bf16.msra.mxu0 0
    %4205 = vmatprep.subr.bf16.mxu0 0
    %4206 = vmatpush1.bf16.msra.mxu0 0
    %4207 = vmatprep.subr.bf16.mxu0 0
    %4208 = vmatpush1.bf16.msra.mxu0 0
    %4209 = vmatprep.subr.bf16.mxu0 0
    %4210 = vmatpush1.bf16.msra.mxu0 0
    %4211 = vmatprep.subr.bf16.mxu0 0
    %4212 = vmatpush1.bf16.msra.mxu0 0
    %4213 = vmatprep.subr.bf16.mxu0 0
    %4214 = vmatpush1.bf16.msra.mxu0 0
    %4215 = vmatprep.subr.bf16.mxu0 0
    %4216 = vmatpush1.bf16.msra.mxu0 0
    %4217 = vmatprep.subr.bf16.mxu0 0
    %4218 = vmatpush1.bf16.msra.mxu0 0
    %4219 = vmatprep.subr.bf16.mxu0 0
    %4220 = vmatpush1.bf16.msra.mxu0 0
    %4221 = vmatprep.subr.bf16.mxu0 0
    %4222 = vmatpush1.bf16.msra.mxu0 0
    %4223 = vmatprep.mubr.bf16.mxu0 0
    %4224 = vmatmul.mubr.bf16.gmra.mrb[0].mxu0 %v3078
    %v4225 = vpop.f32.mrb[0].mxu0
    %v4226 = vadd.f32 %v4134, %v4225
    %v4227 = vpop.f32.mrb[0].mxu0
    %v4228 = vadd.f32 %v4138, %v4227
    %v4229 = vpop.f32.mrb[0].mxu0
    %v4230 = vadd.f32 %v4134, %v4229
    %v4231 = vpop.f32.mrb[0].mxu0
    %v4232 = vadd.f32 %v4138, %v4231
    %4233 = vmatprep.mubr.bf16.mxu0 0
    %4234 = vmatmul.mubr.bf16.gmra.mrb[0].mxu0 %v3081
    %v4235 = vpop.f32.mrb[0].mxu0
    %v4236 = vadd.f32 %v4134, %v4235
    %v4237 = vpop.f32.mrb[0].mxu0
    %v4238 = vadd.f32 %v4138, %v4237
    %v4239 = vpop.f32.mrb[0].mxu0
    %v4240 = vadd.f32 %v4134, %v4239
    %v4241 = vpop.f32.mrb[0].mxu0
    %v4242 = vadd.f32 %v4138, %v4241
    %4243 = vdwg.mxu0
    %4244 = vmatprep.subr.bf16.mxu0 %v4178
    %4245 = vmatpush1.bf16.msra.mxu0 %v4177
    %4246 = vmatprep.subr.bf16.mxu0 %v4182
    %4247 = vmatpush1.bf16.msra.mxu0 %v4181
    %4248 = vmatprep.subr.bf16.mxu0 0
    %4249 = vmatpush1.bf16.msra.mxu0 0
    %4250 = vmatprep.subr.bf16.mxu0 0
    %4251 = vmatpush1.bf16.msra.mxu0 0
    %4252 = vmatprep.subr.bf16.mxu0 0
    %4253 = vmatpush1.bf16.msra.mxu0 0
    %4254 = vmatprep.subr.bf16.mxu0 0
    %4255 = vmatpush1.bf16.msra.mxu0 0
    %4256 = vmatprep.subr.bf16.mxu0 0
    %4257 = vmatpush1.bf16.msra.mxu0 0
    %4258 = vmatprep.subr.bf16.mxu0 0
    %4259 = vmatpush1.bf16.msra.mxu0 0
    %4260 = vmatprep.subr.bf16.mxu0 0
    %4261 = vmatpush1.bf16.msra.mxu0 0
    %4262 = vmatprep.subr.bf16.mxu0 0
    %4263 = vmatpush1.bf16.msra.mxu0 0
    %4264 = vmatprep.subr.bf16.mxu0 0
    %4265 = vmatpush1.bf16.msra.mxu0 0
    %4266 = vmatprep.subr.bf16.mxu0 0
    %4267 = vmatpush1.bf16.msra.mxu0 0
    %4268 = vmatprep.subr.bf16.mxu0 0
    %4269 = vmatpush1.bf16.msra.mxu0 0
    %4270 = vmatprep.subr.bf16.mxu0 0
    %4271 = vmatpush1.bf16.msra.mxu0 0
    %4272 = vmatprep.subr.bf16.mxu0 0
    %4273 = vmatpush1.bf16.msra.mxu0 0
    %4274 = vmatprep.subr.bf16.mxu0 0
    %4275 = vmatpush1.bf16.msra.mxu0 0
    %4276 = vmatprep.mubr.bf16.mxu0 0
    %4277 = vmatmul.mubr.bf16.gmra.mrb[0].mxu0 %v3078
    %v4278 = vpop.f32.mrb[0].mxu0
    %v4279 = vadd.f32 %v4142, %v4278
    %v4280 = vpop.f32.mrb[0].mxu0
    %v4281 = vadd.f32 %v4146, %v4280
    %v4282 = vpop.f32.mrb[0].mxu0
    %v4283 = vadd.f32 %v4142, %v4282
    %v4284 = vpop.f32.mrb[0].mxu0
    %v4285 = vadd.f32 %v4146, %v4284
    %4286 = vmatprep.mubr.bf16.mxu0 0
    %4287 = vmatmul.mubr.bf16.gmra.mrb[0].mxu0 %v3081
    %v4288 = vpop.f32.mrb[0].mxu0
    %v4289 = vadd.f32 %v4142, %v4288
    %v4290 = vpop.f32.mrb[0].mxu0
    %v4291 = vadd.f32 %v4146, %v4290
    %v4292 = vpop.f32.mrb[0].mxu0
    %v4293 = vadd.f32 %v4142, %v4292
    %v4294 = vpop.f32.mrb[0].mxu0
    %v4295 = vadd.f32 %v4146, %v4294
    %4296 = vdwg.mxu0
    %v4297 = vmax.f32 %v4226, 0.0
    %v4298 = vmax.f32 %v4228, 0.0
    %v4299 = vmax.f32 %v4279, 0.0
    %v4300 = vmax.f32 %v4281, 0.0
    %v4301 = vmax.f32 %v4230, 0.0
    %v4302 = vmax.f32 %v4232, 0.0
    %v4303 = vmax.f32 %v4283, 0.0
    %v4304 = vmax.f32 %v4285, 0.0
    %v4305 = vmax.f32 %v4236, 0.0
    %v4306 = vmax.f32 %v4238, 0.0
    %v4307 = vmax.f32 %v4289, 0.0
    %v4308 = vmax.f32 %v4291, 0.0
    %v4309 = vmax.f32 %v4240, 0.0
    %v4310 = vmax.f32 %v4242, 0.0
    %v4311 = vmax.f32 %v4293, 0.0
    %v4312 = vmax.f32 %v4295, 0.0
    %v4313 = vpack.c.bf16 %v4301, %v4297
    %v4314 = vpack.c.bf16 %v4302, %v4298
    %v4315 = vpack.c.bf16 %v4303, %v4299
    %v4316 = vpack.c.bf16 %v4304, %v4300
    %v4317 = vpack.c.bf16 %v4309, %v4305
    %v4318 = vpack.c.bf16 %v4310, %v4306
    %v4319 = vpack.c.bf16 %v4311, %v4307
    %v4320 = vpack.c.bf16 %v4312, %v4308
    %v4321 = vld [vmem:[%s5 + $0x200] sm:$0xf]
    %v4322 = vld [vmem:[%s5 + $0x204] sm:$0xf]
    %v4323 = vld [vmem:[%s5 + $0x208] sm:$0xf]
    %v4324 = vld [vmem:[%s5 + $0x20c] sm:$0xf]
    %v4325 = vld [vmem:[%s5 + $0x210] sm:$0xf]
    %v4326 = vld [vmem:[%s5 + $0x214] sm:$0xf]
    %v4327 = vld [vmem:[%s5 + $0x218] sm:$0xf]
    %v4328 = vld [vmem:[%s5 + $0x21c] sm:$0xf]
    %v4329 = vld [vmem:[%s5 + $0x220] sm:$0xf]
    %v4330 = vld [vmem:[%s5 + $0x224] sm:$0xf]
    %v4331 = vld [vmem:[%s5 + $0x228] sm:$0xf]
    %v4332 = vld [vmem:[%s5 + $0x22c] sm:$0xf]
    %v4333 = vld [vmem:[%s5 + $0x230] sm:$0xf]
    %v4334 = vld [vmem:[%s5 + $0x234] sm:$0xf]
    %v4335 = vld [vmem:[%s5 + $0x238] sm:$0xf]
    %v4336 = vld [vmem:[%s5 + $0x23c] sm:$0xf]
    %v4337 = vld [vmem:[%s5 + $0x240] sm:$0xf]
    %v4338 = vld [vmem:[%s5 + $0x244] sm:$0xf]
    %v4339 = vld [vmem:[%s5 + $0x248] sm:$0xf]
    %v4340 = vld [vmem:[%s5 + $0x24c] sm:$0xf]
    %v4341 = vld [vmem:[%s5 + $0x250] sm:$0xf]
    %v4342 = vld [vmem:[%s5 + $0x254] sm:$0xf]
    %v4343 = vld [vmem:[%s5 + $0x258] sm:$0xf]
    %v4344 = vld [vmem:[%s5 + $0x25c] sm:$0xf]
    %v4345 = vld [vmem:[%s5 + $0x260] sm:$0xf]
    %v4346 = vld [vmem:[%s5 + $0x264] sm:$0xf]
    %v4347 = vld [vmem:[%s5 + $0x268] sm:$0xf]
    %v4348 = vld [vmem:[%s5 + $0x26c] sm:$0xf]
    %v4349 = vld [vmem:[%s5 + $0x270] sm:$0xf]
    %v4350 = vld [vmem:[%s5 + $0x274] sm:$0xf]
    %v4351 = vld [vmem:[%s5 + $0x278] sm:$0xf]
    %v4352 = vld [vmem:[%s5 + $0x27c] sm:$0xf]
    %v4353 = vld [vmem:[%s5 + $0x280] sm:$0xf]
    %v4354 = vld [vmem:[%s5 + $0x284] sm:$0xf]
    %v4355 = vld [vmem:[%s5 + $0x288] sm:$0xf]
    %v4356 = vld [vmem:[%s5 + $0x28c] sm:$0xf]
    %v4357 = vld [vmem:[%s5 + $0x290] sm:$0xf]
    %v4358 = vld [vmem:[%s5 + $0x294] sm:$0xf]
    %v4359 = vld [vmem:[%s5 + $0x298] sm:$0xf]
    %v4360 = vld [vmem:[%s5 + $0x29c] sm:$0xf]
    %v4361 = vld [vmem:[%s5 + $0x2a0] sm:$0xf]
    %v4362 = vld [vmem:[%s5 + $0x2a4] sm:$0xf]
    %v4363 = vld [vmem:[%s5 + $0x2a8] sm:$0xf]
    %v4364 = vld [vmem:[%s5 + $0x2ac] sm:$0xf]
    %v4365 = vld [vmem:[%s5 + $0x2b0] sm:$0xf]
    %v4366 = vld [vmem:[%s5 + $0x2b4] sm:$0xf]
    %v4367 = vld [vmem:[%s5 + $0x2b8] sm:$0xf]
    %v4368 = vld [vmem:[%s5 + $0x2bc] sm:$0xf]
    %v4369 = vld [vmem:[%s5 + $0x2c0] sm:$0xf]
    %v4370 = vld [vmem:[%s5 + $0x2c4] sm:$0xf]
    %v4371 = vld [vmem:[%s5 + $0x2c8] sm:$0xf]
    %v4372 = vld [vmem:[%s5 + $0x2cc] sm:$0xf]
    %v4373 = vld [vmem:[%s5 + $0x2d0] sm:$0xf]
    %v4374 = vld [vmem:[%s5 + $0x2d4] sm:$0xf]
    %v4375 = vld [vmem:[%s5 + $0x2d8] sm:$0xf]
    %v4376 = vld [vmem:[%s5 + $0x2dc] sm:$0xf]
    %v4377 = vld [vmem:[%s5 + $0x2e0] sm:$0xf]
    %v4378 = vld [vmem:[%s5 + $0x2e4] sm:$0xf]
    %v4379 = vld [vmem:[%s5 + $0x2e8] sm:$0xf]
    %v4380 = vld [vmem:[%s5 + $0x2ec] sm:$0xf]
    %v4381 = vld [vmem:[%s5 + $0x2f0] sm:$0xf]
    %v4382 = vld [vmem:[%s5 + $0x2f4] sm:$0xf]
    %v4383 = vld [vmem:[%s5 + $0x2f8] sm:$0xf]
    %v4384 = vld [vmem:[%s5 + $0x2fc] sm:$0xf]
    %v4449 = vunpack.c.l.b16 %v4321
    %v4450 = vunpack.c.l.b16 %v4322
    %v4451 = vunpack.c.l.b16 %v4323
    %v4452 = vunpack.c.l.b16 %v4324
    %v4453 = vunpack.c.l.b16 %v4325
    %v4454 = vunpack.c.l.b16 %v4326
    %v4455 = vunpack.c.l.b16 %v4327
    %v4456 = vunpack.c.l.b16 %v4328
    %v4457 = vunpack.c.l.b16 %v4329
    %v4458 = vunpack.c.l.b16 %v4330
    %v4459 = vunpack.c.l.b16 %v4331
    %v4460 = vunpack.c.l.b16 %v4332
    %v4461 = vunpack.c.l.b16 %v4333
    %v4462 = vunpack.c.l.b16 %v4334
    %v4463 = vunpack.c.l.b16 %v4335
    %v4464 = vunpack.c.l.b16 %v4336
    %v4465 = vunpack.c.l.b16 %v4337
    %v4466 = vunpack.c.l.b16 %v4338
    %v4467 = vunpack.c.l.b16 %v4339
    %v4468 = vunpack.c.l.b16 %v4340
    %v4469 = vunpack.c.l.b16 %v4341
    %v4470 = vunpack.c.l.b16 %v4342
    %v4471 = vunpack.c.l.b16 %v4343
    %v4472 = vunpack.c.l.b16 %v4344
    %v4473 = vunpack.c.l.b16 %v4345
    %v4474 = vunpack.c.l.b16 %v4346
    %v4475 = vunpack.c.l.b16 %v4347
    %v4476 = vunpack.c.l.b16 %v4348
    %v4477 = vunpack.c.l.b16 %v4349
    %v4478 = vunpack.c.l.b16 %v4350
    %v4479 = vunpack.c.l.b16 %v4351
    %v4480 = vunpack.c.l.b16 %v4352
    %v4481 = vunpack.c.l.b16 %v4353
    %v4482 = vunpack.c.l.b16 %v4354
    %v4483 = vunpack.c.l.b16 %v4355
    %v4484 = vunpack.c.l.b16 %v4356
    %v4485 = vunpack.c.l.b16 %v4357
    %v4486 = vunpack.c.l.b16 %v4358
    %v4487 = vunpack.c.l.b16 %v4359
    %v4488 = vunpack.c.l.b16 %v4360
    %v4489 = vunpack.c.l.b16 %v4361
    %v4490 = vunpack.c.l.b16 %v4362
    %v4491 = vunpack.c.l.b16 %v4363
    %v4492 = vunpack.c.l.b16 %v4364
    %v4493 = vunpack.c.l.b16 %v4365
    %v4494 = vunpack.c.l.b16 %v4366
    %v4495 = vunpack.c.l.b16 %v4367
    %v4496 = vunpack.c.l.b16 %v4368
    %v4497 = vunpack.c.l.b16 %v4369
    %v4498 = vunpack.c.l.b16 %v4370
    %v4499 = vunpack.c.l.b16 %v4371
    %v4500 = vunpack.c.l.b16 %v4372
    %v4501 = vunpack.c.l.b16 %v4373
    %v4502 = vunpack.c.l.b16 %v4374
    %v4503 = vunpack.c.l.b16 %v4375
    %v4504 = vunpack.c.l.b16 %v4376
    %v4505 = vunpack.c.l.b16 %v4377
    %v4506 = vunpack.c.l.b16 %v4378
    %v4507 = vunpack.c.l.b16 %v4379
    %v4508 = vunpack.c.l.b16 %v4380
    %v4509 = vunpack.c.l.b16 %v4381
    %v4510 = vunpack.c.l.b16 %v4382
    %v4511 = vunpack.c.l.b16 %v4383
    %v4512 = vunpack.c.l.b16 %v4384
    %v4513 = vpack.c.b16 %v4450, %v4449
    %v4514 = vpack.c.b16 %v4452, %v4451
    %v4515 = vpack.c.b16 %v4454, %v4453
    %v4516 = vpack.c.b16 %v4456, %v4455
    %v4517 = vpack.c.b16 %v4458, %v4457
    %v4518 = vpack.c.b16 %v4460, %v4459
    %v4519 = vpack.c.b16 %v4462, %v4461
    %v4520 = vpack.c.b16 %v4464, %v4463
    %v4521 = vpack.c.b16 %v4466, %v4465
    %v4522 = vpack.c.b16 %v4468, %v4467
    %v4523 = vpack.c.b16 %v4470, %v4469
    %v4524 = vpack.c.b16 %v4472, %v4471
    %v4525 = vpack.c.b16 %v4474, %v4473
    %v4526 = vpack.c.b16 %v4476, %v4475
    %v4527 = vpack.c.b16 %v4478, %v4477
    %v4528 = vpack.c.b16 %v4480, %v4479
    %v4529 = vpack.c.b16 %v4482, %v4481
    %v4530 = vpack.c.b16 %v4484, %v4483
    %v4531 = vpack.c.b16 %v4486, %v4485
    %v4532 = vpack.c.b16 %v4488, %v4487
    %v4533 = vpack.c.b16 %v4490, %v4489
    %v4534 = vpack.c.b16 %v4492, %v4491
    %v4535 = vpack.c.b16 %v4494, %v4493
    %v4536 = vpack.c.b16 %v4496, %v4495
    %v4537 = vpack.c.b16 %v4498, %v4497
    %v4538 = vpack.c.b16 %v4500, %v4499
    %v4539 = vpack.c.b16 %v4502, %v4501
    %v4540 = vpack.c.b16 %v4504, %v4503
    %v4541 = vpack.c.b16 %v4506, %v4505
    %v4542 = vpack.c.b16 %v4508, %v4507
    %v4543 = vpack.c.b16 %v4510, %v4509
    %v4544 = vpack.c.b16 %v4512, %v4511
    %4577 = vmatprep.subr.bf16.mxu0 0
    %4578 = vmatpush1.bf16.msra.mxu0 %v4513
    %4579 = vmatprep.subr.bf16.mxu0 0
    %4580 = vmatpush1.bf16.msra.mxu0 %v4514
    %4581 = vmatprep.subr.bf16.mxu0 0
    %4582 = vmatpush1.bf16.msra.mxu0 %v4515
    %4583 = vmatprep.subr.bf16.mxu0 0
    %4584 = vmatpush1.bf16.msra.mxu0 %v4516
    %4585 = vmatprep.subr.bf16.mxu0 0
    %4586 = vmatpush1.bf16.msra.mxu0 %v4517
    %4587 = vmatprep.subr.bf16.mxu0 0
    %4588 = vmatpush1.bf16.msra.mxu0 %v4518
    %4589 = vmatprep.subr.bf16.mxu0 0
    %4590 = vmatpush1.bf16.msra.mxu0 %v4519
    %4591 = vmatprep.subr.bf16.mxu0 0
    %4592 = vmatpush1.bf16.msra.mxu0 %v4520
    %4593 = vmatprep.subr.bf16.mxu0 0
    %4594 = vmatpush1.bf16.msra.mxu0 %v4521
    %4595 = vmatprep.subr.bf16.mxu0 0
    %4596 = vmatpush1.bf16.msra.mxu0 %v4522
    %4597 = vmatprep.subr.bf16.mxu0 0
    %4598 = vmatpush1.bf16.msra.mxu0 %v4523
    %4599 = vmatprep.subr.bf16.mxu0 0
    %4600 = vmatpush1.bf16.msra.mxu0 %v4524
    %4601 = vmatprep.subr.bf16.mxu0 0
    %4602 = vmatpush1.bf16.msra.mxu0 %v4525
    %4603 = vmatprep.subr.bf16.mxu0 0
    %4604 = vmatpush1.bf16.msra.mxu0 %v4526
    %4605 = vmatprep.subr.bf16.mxu0 0
    %4606 = vmatpush1.bf16.msra.mxu0 %v4527
    %4607 = vmatprep.subr.bf16.mxu0 0
    %4608 = vmatpush1.bf16.msra.mxu0 %v4528
    %4609 = vmatprep.mubr.bf16.mxu0 %v4314
    %4610 = vmatmul.mubr.bf16.gmra.mrb[0].mxu0 %v4313
    %v4611 = vpop.f32.mrb[0].mxu0
    %v4612 = vadd.f32 0.0, %v4611
    %v4613 = vpop.f32.mrb[0].mxu0
    %v4614 = vpop.f32.mrb[0].mxu0
    %v4615 = vadd.f32 0.0, %v4614
    %v4616 = vpop.f32.mrb[0].mxu0
    %4617 = vmatprep.mubr.bf16.mxu0 %v4318
    %4618 = vmatmul.mubr.bf16.gmra.mrb[0].mxu0 %v4317
    %v4619 = vpop.f32.mrb[0].mxu0
    %v4620 = vadd.f32 0.0, %v4619
    %v4621 = vpop.f32.mrb[0].mxu0
    %v4622 = vpop.f32.mrb[0].mxu0
    %v4623 = vadd.f32 0.0, %v4622
    %v4624 = vpop.f32.mrb[0].mxu0
    %4625 = vdwg.mxu0
    %4626 = vmatprep.subr.bf16.mxu0 0
    %4627 = vmatpush1.bf16.msra.mxu0 %v4529
    %4628 = vmatprep.subr.bf16.mxu0 0
    %4629 = vmatpush1.bf16.msra.mxu0 %v4530
    %4630 = vmatprep.subr.bf16.mxu0 0
    %4631 = vmatpush1.bf16.msra.mxu0 %v4531
    %4632 = vmatprep.subr.bf16.mxu0 0
    %4633 = vmatpush1.bf16.msra.mxu0 %v4532
    %4634 = vmatprep.subr.bf16.mxu0 0
    %4635 = vmatpush1.bf16.msra.mxu0 %v4533
    %4636 = vmatprep.subr.bf16.mxu0 0
    %4637 = vmatpush1.bf16.msra.mxu0 %v4534
    %4638 = vmatprep.subr.bf16.mxu0 0
    %4639 = vmatpush1.bf16.msra.mxu0 %v4535
    %4640 = vmatprep.subr.bf16.mxu0 0
    %4641 = vmatpush1.bf16.msra.mxu0 %v4536
    %4642 = vmatprep.subr.bf16.mxu0 0
    %4643 = vmatpush1.bf16.msra.mxu0 %v4537
    %4644 = vmatprep.subr.bf16.mxu0 0
    %4645 = vmatpush1.bf16.msra.mxu0 %v4538
    %4646 = vmatprep.subr.bf16.mxu0 0
    %4647 = vmatpush1.bf16.msra.mxu0 %v4539
    %4648 = vmatprep.subr.bf16.mxu0 0
    %4649 = vmatpush1.bf16.msra.mxu0 %v4540
    %4650 = vmatprep.subr.bf16.mxu0 0
    %4651 = vmatpush1.bf16.msra.mxu0 %v4541
    %4652 = vmatprep.subr.bf16.mxu0 0
    %4653 = vmatpush1.bf16.msra.mxu0 %v4542
    %4654 = vmatprep.subr.bf16.mxu0 0
    %4655 = vmatpush1.bf16.msra.mxu0 %v4543
    %4656 = vmatprep.subr.bf16.mxu0 0
    %4657 = vmatpush1.bf16.msra.mxu0 %v4544
    %4658 = vmatprep.mubr.bf16.mxu0 %v4316
    %4659 = vmatmul.mubr.bf16.gmra.mrb[0].mxu0 %v4315
    %v4660 = vpop.f32.mrb[0].mxu0
    %v4661 = vadd.f32 %v4612, %v4660
    %v4662 = vpop.f32.mrb[0].mxu0
    %v4663 = vpop.f32.mrb[0].mxu0
    %v4664 = vadd.f32 %v4615, %v4663
    %v4665 = vpop.f32.mrb[0].mxu0
    %4666 = vmatprep.mubr.bf16.mxu0 %v4320
    %4667 = vmatmul.mubr.bf16.gmra.mrb[0].mxu0 %v4319
    %v4668 = vpop.f32.mrb[0].mxu0
    %v4669 = vadd.f32 %v4620, %v4668
    %v4670 = vpop.f32.mrb[0].mxu0
    %v4671 = vpop.f32.mrb[0].mxu0
    %v4672 = vadd.f32 %v4623, %v4671
    %v4673 = vpop.f32.mrb[0].mxu0
    %4674 = vdwg.mxu0
    %v4675 = vadd.f32 %v4107, %v4661
    %v4676 = vadd.f32 %v4110, %v4664
    %v4677 = vadd.f32 %v4115, %v4669
    %v4678 = vadd.f32 %v4118, %v4672
    %v4679 = vld [vmem:[%s3 + $0x30] sm:$0xff]
    %v4680 = vld [vmem:[%s3 + $0x38] sm:$0xff]
    %v4681 = vld [vmem:[%s3 + $0x70] sm:$0xff]
    %v4682 = vld [vmem:[%s3 + $0x78] sm:$0xff]
    %v4683 = vld [vmem:[%s3 + $0xb0] sm:$0xff]
    %v4684 = vld [vmem:[%s3 + $0xb8] sm:$0xff]
    %v4685 = vld [vmem:[%s3 + $0xf0] sm:$0xff]
    %v4686 = vld [vmem:[%s3 + $0xf8] sm:$0xff]
    %v4687 = vld [vmem:[%s4 + $0xc] sm:$0xf]
    %v4689 = vlaneseq
    %v4690 = vshrl.u32 %v4689, 7
    %v4691 = vsub.s32 0, %v4690
    %v4692 = vrot.slane %v4687, %v4691
    %v4693 = vlaneseq
    %v4694 = vshrl.u32 %v4693, 7
    %v4695 = vsub.s32 1, %v4694
    %v4696 = vrot.slane %v4687, %v4695
    %v4697 = vlaneseq
    %v4698 = vshrl.u32 %v4697, 7
    %v4699 = vsub.s32 2, %v4698
    %v4700 = vrot.slane %v4687, %v4699
    %v4701 = vlaneseq
    %v4702 = vshrl.u32 %v4701, 7
    %v4703 = vsub.s32 3, %v4702
    %v4704 = vrot.slane %v4687, %v4703
    %v4717 = vunpack.c.l.b16 %v4679
    %v4718 = vunpack.c.h.b16 %v4679
    %v4719 = vunpack.c.l.b16 %v4680
    %v4720 = vunpack.c.h.b16 %v4680
    %v4721 = vunpack.c.l.b16 %v4681
    %v4722 = vunpack.c.h.b16 %v4681
    %v4723 = vunpack.c.l.b16 %v4682
    %v4724 = vunpack.c.h.b16 %v4682
    %v4725 = vunpack.c.l.b16 %v4683
    %v4726 = vunpack.c.h.b16 %v4683
    %v4727 = vunpack.c.l.b16 %v4684
    %v4728 = vunpack.c.h.b16 %v4684
    %v4729 = vunpack.c.l.b16 %v4685
    %v4730 = vunpack.c.h.b16 %v4685
    %v4731 = vunpack.c.l.b16 %v4686
    %v4732 = vunpack.c.h.b16 %v4686
    %v4733 = vpack.c.b16 %v4721, %v4717
    %v4734 = vpack.c.b16 %v4722, %v4718
    %v4735 = vpack.c.b16 %v4723, %v4719
    %v4736 = vpack.c.b16 %v4724, %v4720
    %v4737 = vpack.c.b16 %v4729, %v4725
    %v4738 = vpack.c.b16 %v4730, %v4726
    %v4739 = vpack.c.b16 %v4731, %v4727
    %v4740 = vpack.c.b16 %v4732, %v4728
    %4749 = vmatprep.subr.bf16.mxu0 %v4734
    %4750 = vmatpush1.bf16.msra.mxu0 %v4733
    %4751 = vmatprep.subr.bf16.mxu0 %v4738
    %4752 = vmatpush1.bf16.msra.mxu0 %v4737
    %4753 = vmatprep.subr.bf16.mxu0 0
    %4754 = vmatpush1.bf16.msra.mxu0 0
    %4755 = vmatprep.subr.bf16.mxu0 0
    %4756 = vmatpush1.bf16.msra.mxu0 0
    %4757 = vmatprep.subr.bf16.mxu0 0
    %4758 = vmatpush1.bf16.msra.mxu0 0
    %4759 = vmatprep.subr.bf16.mxu0 0
    %4760 = vmatpush1.bf16.msra.mxu0 0
    %4761 = vmatprep.subr.bf16.mxu0 0
    %4762 = vmatpush1.bf16.msra.mxu0 0
    %4763 = vmatprep.subr.bf16.mxu0 0
    %4764 = vmatpush1.bf16.msra.mxu0 0
    %4765 = vmatprep.subr.bf16.mxu0 0
    %4766 = vmatpush1.bf16.msra.mxu0 0
    %4767 = vmatprep.subr.bf16.mxu0 0
    %4768 = vmatpush1.bf16.msra.mxu0 0
    %4769 = vmatprep.subr.bf16.mxu0 0
    %4770 = vmatpush1.bf16.msra.mxu0 0
    %4771 = vmatprep.subr.bf16.mxu0 0
    %4772 = vmatpush1.bf16.msra.mxu0 0
    %4773 = vmatprep.subr.bf16.mxu0 0
    %4774 = vmatpush1.bf16.msra.mxu0 0
    %4775 = vmatprep.subr.bf16.mxu0 0
    %4776 = vmatpush1.bf16.msra.mxu0 0
    %4777 = vmatprep.subr.bf16.mxu0 0
    %4778 = vmatpush1.bf16.msra.mxu0 0
    %4779 = vmatprep.subr.bf16.mxu0 0
    %4780 = vmatpush1.bf16.msra.mxu0 0
    %4781 = vmatprep.mubr.bf16.mxu0 0
    %4782 = vmatmul.mubr.bf16.gmra.mrb[0].mxu0 %v3078
    %v4783 = vpop.f32.mrb[0].mxu0
    %v4784 = vadd.f32 %v4692, %v4783
    %v4785 = vpop.f32.mrb[0].mxu0
    %v4786 = vadd.f32 %v4696, %v4785
    %v4787 = vpop.f32.mrb[0].mxu0
    %v4788 = vadd.f32 %v4692, %v4787
    %v4789 = vpop.f32.mrb[0].mxu0
    %v4790 = vadd.f32 %v4696, %v4789
    %4791 = vmatprep.mubr.bf16.mxu0 0
    %4792 = vmatmul.mubr.bf16.gmra.mrb[0].mxu0 %v3081
    %v4793 = vpop.f32.mrb[0].mxu0
    %v4794 = vadd.f32 %v4692, %v4793
    %v4795 = vpop.f32.mrb[0].mxu0
    %v4796 = vadd.f32 %v4696, %v4795
    %v4797 = vpop.f32.mrb[0].mxu0
    %v4798 = vadd.f32 %v4692, %v4797
    %v4799 = vpop.f32.mrb[0].mxu0
    %v4800 = vadd.f32 %v4696, %v4799
    %4801 = vdwg.mxu0
    %4802 = vmatprep.subr.bf16.mxu0 %v4736
    %4803 = vmatpush1.bf16.msra.mxu0 %v4735
    %4804 = vmatprep.subr.bf16.mxu0 %v4740
    %4805 = vmatpush1.bf16.msra.mxu0 %v4739
    %4806 = vmatprep.subr.bf16.mxu0 0
    %4807 = vmatpush1.bf16.msra.mxu0 0
    %4808 = vmatprep.subr.bf16.mxu0 0
    %4809 = vmatpush1.bf16.msra.mxu0 0
    %4810 = vmatprep.subr.bf16.mxu0 0
    %4811 = vmatpush1.bf16.msra.mxu0 0
    %4812 = vmatprep.subr.bf16.mxu0 0
    %4813 = vmatpush1.bf16.msra.mxu0 0
    %4814 = vmatprep.subr.bf16.mxu0 0
    %4815 = vmatpush1.bf16.msra.mxu0 0
    %4816 = vmatprep.subr.bf16.mxu0 0
    %4817 = vmatpush1.bf16.msra.mxu0 0
    %4818 = vmatprep.subr.bf16.mxu0 0
    %4819 = vmatpush1.bf16.msra.mxu0 0
    %4820 = vmatprep.subr.bf16.mxu0 0
    %4821 = vmatpush1.bf16.msra.mxu0 0
    %4822 = vmatprep.subr.bf16.mxu0 0
    %4823 = vmatpush1.bf16.msra.mxu0 0
    %4824 = vmatprep.subr.bf16.mxu0 0
    %4825 = vmatpush1.bf16.msra.mxu0 0
    %4826 = vmatprep.subr.bf16.mxu0 0
    %4827 = vmatpush1.bf16.msra.mxu0 0
    %4828 = vmatprep.subr.bf16.mxu0 0
    %4829 = vmatpush1.bf16.msra.mxu0 0
    %4830 = vmatprep.subr.bf16.mxu0 0
    %4831 = vmatpush1.bf16.msra.mxu0 0
    %4832 = vmatprep.subr.bf16.mxu0 0
    %4833 = vmatpush1.bf16.msra.mxu0 0
    %4834 = vmatprep.mubr.bf16.mxu0 0
    %4835 = vmatmul.mubr.bf16.gmra.mrb[0].mxu0 %v3078
    %v4836 = vpop.f32.mrb[0].mxu0
    %v4837 = vadd.f32 %v4700, %v4836
    %v4838 = vpop.f32.mrb[0].mxu0
    %v4839 = vadd.f32 %v4704, %v4838
    %v4840 = vpop.f32.mrb[0].mxu0
    %v4841 = vadd.f32 %v4700, %v4840
    %v4842 = vpop.f32.mrb[0].mxu0
    %v4843 = vadd.f32 %v4704, %v4842
    %4844 = vmatprep.mubr.bf16.mxu0 0
    %4845 = vmatmul.mubr.bf16.gmra.mrb[0].mxu0 %v3081
    %v4846 = vpop.f32.mrb[0].mxu0
    %v4847 = vadd.f32 %v4700, %v4846
    %v4848 = vpop.f32.mrb[0].mxu0
    %v4849 = vadd.f32 %v4704, %v4848
    %v4850 = vpop.f32.mrb[0].mxu0
    %v4851 = vadd.f32 %v4700, %v4850
    %v4852 = vpop.f32.mrb[0].mxu0
    %v4853 = vadd.f32 %v4704, %v4852
    %4854 = vdwg.mxu0
    %v4855 = vmax.f32 %v4784, 0.0
    %v4856 = vmax.f32 %v4786, 0.0
    %v4857 = vmax.f32 %v4837, 0.0
    %v4858 = vmax.f32 %v4839, 0.0
    %v4859 = vmax.f32 %v4788, 0.0
    %v4860 = vmax.f32 %v4790, 0.0
    %v4861 = vmax.f32 %v4841, 0.0
    %v4862 = vmax.f32 %v4843, 0.0
    %v4863 = vmax.f32 %v4794, 0.0
    %v4864 = vmax.f32 %v4796, 0.0
    %v4865 = vmax.f32 %v4847, 0.0
    %v4866 = vmax.f32 %v4849, 0.0
    %v4867 = vmax.f32 %v4798, 0.0
    %v4868 = vmax.f32 %v4800, 0.0
    %v4869 = vmax.f32 %v4851, 0.0
    %v4870 = vmax.f32 %v4853, 0.0
    %v4871 = vpack.c.bf16 %v4859, %v4855
    %v4872 = vpack.c.bf16 %v4860, %v4856
    %v4873 = vpack.c.bf16 %v4861, %v4857
    %v4874 = vpack.c.bf16 %v4862, %v4858
    %v4875 = vpack.c.bf16 %v4867, %v4863
    %v4876 = vpack.c.bf16 %v4868, %v4864
    %v4877 = vpack.c.bf16 %v4869, %v4865
    %v4878 = vpack.c.bf16 %v4870, %v4866
    %v4879 = vld [vmem:[%s5 + $0x300] sm:$0xf]
    %v4880 = vld [vmem:[%s5 + $0x304] sm:$0xf]
    %v4881 = vld [vmem:[%s5 + $0x308] sm:$0xf]
    %v4882 = vld [vmem:[%s5 + $0x30c] sm:$0xf]
    %v4883 = vld [vmem:[%s5 + $0x310] sm:$0xf]
    %v4884 = vld [vmem:[%s5 + $0x314] sm:$0xf]
    %v4885 = vld [vmem:[%s5 + $0x318] sm:$0xf]
    %v4886 = vld [vmem:[%s5 + $0x31c] sm:$0xf]
    %v4887 = vld [vmem:[%s5 + $0x320] sm:$0xf]
    %v4888 = vld [vmem:[%s5 + $0x324] sm:$0xf]
    %v4889 = vld [vmem:[%s5 + $0x328] sm:$0xf]
    %v4890 = vld [vmem:[%s5 + $0x32c] sm:$0xf]
    %v4891 = vld [vmem:[%s5 + $0x330] sm:$0xf]
    %v4892 = vld [vmem:[%s5 + $0x334] sm:$0xf]
    %v4893 = vld [vmem:[%s5 + $0x338] sm:$0xf]
    %v4894 = vld [vmem:[%s5 + $0x33c] sm:$0xf]
    %v4895 = vld [vmem:[%s5 + $0x340] sm:$0xf]
    %v4896 = vld [vmem:[%s5 + $0x344] sm:$0xf]
    %v4897 = vld [vmem:[%s5 + $0x348] sm:$0xf]
    %v4898 = vld [vmem:[%s5 + $0x34c] sm:$0xf]
    %v4899 = vld [vmem:[%s5 + $0x350] sm:$0xf]
    %v4900 = vld [vmem:[%s5 + $0x354] sm:$0xf]
    %v4901 = vld [vmem:[%s5 + $0x358] sm:$0xf]
    %v4902 = vld [vmem:[%s5 + $0x35c] sm:$0xf]
    %v4903 = vld [vmem:[%s5 + $0x360] sm:$0xf]
    %v4904 = vld [vmem:[%s5 + $0x364] sm:$0xf]
    %v4905 = vld [vmem:[%s5 + $0x368] sm:$0xf]
    %v4906 = vld [vmem:[%s5 + $0x36c] sm:$0xf]
    %v4907 = vld [vmem:[%s5 + $0x370] sm:$0xf]
    %v4908 = vld [vmem:[%s5 + $0x374] sm:$0xf]
    %v4909 = vld [vmem:[%s5 + $0x378] sm:$0xf]
    %v4910 = vld [vmem:[%s5 + $0x37c] sm:$0xf]
    %v4911 = vld [vmem:[%s5 + $0x380] sm:$0xf]
    %v4912 = vld [vmem:[%s5 + $0x384] sm:$0xf]
    %v4913 = vld [vmem:[%s5 + $0x388] sm:$0xf]
    %v4914 = vld [vmem:[%s5 + $0x38c] sm:$0xf]
    %v4915 = vld [vmem:[%s5 + $0x390] sm:$0xf]
    %v4916 = vld [vmem:[%s5 + $0x394] sm:$0xf]
    %v4917 = vld [vmem:[%s5 + $0x398] sm:$0xf]
    %v4918 = vld [vmem:[%s5 + $0x39c] sm:$0xf]
    %v4919 = vld [vmem:[%s5 + $0x3a0] sm:$0xf]
    %v4920 = vld [vmem:[%s5 + $0x3a4] sm:$0xf]
    %v4921 = vld [vmem:[%s5 + $0x3a8] sm:$0xf]
    %v4922 = vld [vmem:[%s5 + $0x3ac] sm:$0xf]
    %v4923 = vld [vmem:[%s5 + $0x3b0] sm:$0xf]
    %v4924 = vld [vmem:[%s5 + $0x3b4] sm:$0xf]
    %v4925 = vld [vmem:[%s5 + $0x3b8] sm:$0xf]
    %v4926 = vld [vmem:[%s5 + $0x3bc] sm:$0xf]
    %v4927 = vld [vmem:[%s5 + $0x3c0] sm:$0xf]
    %v4928 = vld [vmem:[%s5 + $0x3c4] sm:$0xf]
    %v4929 = vld [vmem:[%s5 + $0x3c8] sm:$0xf]
    %v4930 = vld [vmem:[%s5 + $0x3cc] sm:$0xf]
    %v4931 = vld [vmem:[%s5 + $0x3d0] sm:$0xf]
    %v4932 = vld [vmem:[%s5 + $0x3d4] sm:$0xf]
    %v4933 = vld [vmem:[%s5 + $0x3d8] sm:$0xf]
    %v4934 = vld [vmem:[%s5 + $0x3dc] sm:$0xf]
    %v4935 = vld [vmem:[%s5 + $0x3e0] sm:$0xf]
    %v4936 = vld [vmem:[%s5 + $0x3e4] sm:$0xf]
    %v4937 = vld [vmem:[%s5 + $0x3e8] sm:$0xf]
    %v4938 = vld [vmem:[%s5 + $0x3ec] sm:$0xf]
    %v4939 = vld [vmem:[%s5 + $0x3f0] sm:$0xf]
    %v4940 = vld [vmem:[%s5 + $0x3f4] sm:$0xf]
    %v4941 = vld [vmem:[%s5 + $0x3f8] sm:$0xf]
    %v4942 = vld [vmem:[%s5 + $0x3fc] sm:$0xf]
    %v5007 = vunpack.c.l.b16 %v4879
    %v5008 = vunpack.c.l.b16 %v4880
    %v5009 = vunpack.c.l.b16 %v4881
    %v5010 = vunpack.c.l.b16 %v4882
    %v5011 = vunpack.c.l.b16 %v4883
    %v5012 = vunpack.c.l.b16 %v4884
    %v5013 = vunpack.c.l.b16 %v4885
    %v5014 = vunpack.c.l.b16 %v4886
    %v5015 = vunpack.c.l.b16 %v4887
    %v5016 = vunpack.c.l.b16 %v4888
    %v5017 = vunpack.c.l.b16 %v4889
    %v5018 = vunpack.c.l.b16 %v4890
    %v5019 = vunpack.c.l.b16 %v4891
    %v5020 = vunpack.c.l.b16 %v4892
    %v5021 = vunpack.c.l.b16 %v4893
    %v5022 = vunpack.c.l.b16 %v4894
    %v5023 = vunpack.c.l.b16 %v4895
    %v5024 = vunpack.c.l.b16 %v4896
    %v5025 = vunpack.c.l.b16 %v4897
    %v5026 = vunpack.c.l.b16 %v4898
    %v5027 = vunpack.c.l.b16 %v4899
    %v5028 = vunpack.c.l.b16 %v4900
    %v5029 = vunpack.c.l.b16 %v4901
    %v5030 = vunpack.c.l.b16 %v4902
    %v5031 = vunpack.c.l.b16 %v4903
    %v5032 = vunpack.c.l.b16 %v4904
    %v5033 = vunpack.c.l.b16 %v4905
    %v5034 = vunpack.c.l.b16 %v4906
    %v5035 = vunpack.c.l.b16 %v4907
    %v5036 = vunpack.c.l.b16 %v4908
    %v5037 = vunpack.c.l.b16 %v4909
    %v5038 = vunpack.c.l.b16 %v4910
    %v5039 = vunpack.c.l.b16 %v4911
    %v5040 = vunpack.c.l.b16 %v4912
    %v5041 = vunpack.c.l.b16 %v4913
    %v5042 = vunpack.c.l.b16 %v4914
    %v5043 = vunpack.c.l.b16 %v4915
    %v5044 = vunpack.c.l.b16 %v4916
    %v5045 = vunpack.c.l.b16 %v4917
    %v5046 = vunpack.c.l.b16 %v4918
    %v5047 = vunpack.c.l.b16 %v4919
    %v5048 = vunpack.c.l.b16 %v4920
    %v5049 = vunpack.c.l.b16 %v4921
    %v5050 = vunpack.c.l.b16 %v4922
    %v5051 = vunpack.c.l.b16 %v4923
    %v5052 = vunpack.c.l.b16 %v4924
    %v5053 = vunpack.c.l.b16 %v4925
    %v5054 = vunpack.c.l.b16 %v4926
    %v5055 = vunpack.c.l.b16 %v4927
    %v5056 = vunpack.c.l.b16 %v4928
    %v5057 = vunpack.c.l.b16 %v4929
    %v5058 = vunpack.c.l.b16 %v4930
    %v5059 = vunpack.c.l.b16 %v4931
    %v5060 = vunpack.c.l.b16 %v4932
    %v5061 = vunpack.c.l.b16 %v4933
    %v5062 = vunpack.c.l.b16 %v4934
    %v5063 = vunpack.c.l.b16 %v4935
    %v5064 = vunpack.c.l.b16 %v4936
    %v5065 = vunpack.c.l.b16 %v4937
    %v5066 = vunpack.c.l.b16 %v4938
    %v5067 = vunpack.c.l.b16 %v4939
    %v5068 = vunpack.c.l.b16 %v4940
    %v5069 = vunpack.c.l.b16 %v4941
    %v5070 = vunpack.c.l.b16 %v4942
    %v5071 = vpack.c.b16 %v5008, %v5007
    %v5072 = vpack.c.b16 %v5010, %v5009
    %v5073 = vpack.c.b16 %v5012, %v5011
    %v5074 = vpack.c.b16 %v5014, %v5013
    %v5075 = vpack.c.b16 %v5016, %v5015
    %v5076 = vpack.c.b16 %v5018, %v5017
    %v5077 = vpack.c.b16 %v5020, %v5019
    %v5078 = vpack.c.b16 %v5022, %v5021
    %v5079 = vpack.c.b16 %v5024, %v5023
    %v5080 = vpack.c.b16 %v5026, %v5025
    %v5081 = vpack.c.b16 %v5028, %v5027
    %v5082 = vpack.c.b16 %v5030, %v5029
    %v5083 = vpack.c.b16 %v5032, %v5031
    %v5084 = vpack.c.b16 %v5034, %v5033
    %v5085 = vpack.c.b16 %v5036, %v5035
    %v5086 = vpack.c.b16 %v5038, %v5037
    %v5087 = vpack.c.b16 %v5040, %v5039
    %v5088 = vpack.c.b16 %v5042, %v5041
    %v5089 = vpack.c.b16 %v5044, %v5043
    %v5090 = vpack.c.b16 %v5046, %v5045
    %v5091 = vpack.c.b16 %v5048, %v5047
    %v5092 = vpack.c.b16 %v5050, %v5049
    %v5093 = vpack.c.b16 %v5052, %v5051
    %v5094 = vpack.c.b16 %v5054, %v5053
    %v5095 = vpack.c.b16 %v5056, %v5055
    %v5096 = vpack.c.b16 %v5058, %v5057
    %v5097 = vpack.c.b16 %v5060, %v5059
    %v5098 = vpack.c.b16 %v5062, %v5061
    %v5099 = vpack.c.b16 %v5064, %v5063
    %v5100 = vpack.c.b16 %v5066, %v5065
    %v5101 = vpack.c.b16 %v5068, %v5067
    %v5102 = vpack.c.b16 %v5070, %v5069
    %5135 = vmatprep.subr.bf16.mxu0 0
    %5136 = vmatpush1.bf16.msra.mxu0 %v5071
    %5137 = vmatprep.subr.bf16.mxu0 0
    %5138 = vmatpush1.bf16.msra.mxu0 %v5072
    %5139 = vmatprep.subr.bf16.mxu0 0
    %5140 = vmatpush1.bf16.msra.mxu0 %v5073
    %5141 = vmatprep.subr.bf16.mxu0 0
    %5142 = vmatpush1.bf16.msra.mxu0 %v5074
    %5143 = vmatprep.subr.bf16.mxu0 0
    %5144 = vmatpush1.bf16.msra.mxu0 %v5075
    %5145 = vmatprep.subr.bf16.mxu0 0
    %5146 = vmatpush1.bf16.msra.mxu0 %v5076
    %5147 = vmatprep.subr.bf16.mxu0 0
    %5148 = vmatpush1.bf16.msra.mxu0 %v5077
    %5149 = vmatprep.subr.bf16.mxu0 0
    %5150 = vmatpush1.bf16.msra.mxu0 %v5078
    %5151 = vmatprep.subr.bf16.mxu0 0
    %5152 = vmatpush1.bf16.msra.mxu0 %v5079
    %5153 = vmatprep.subr.bf16.mxu0 0
    %5154 = vmatpush1.bf16.msra.mxu0 %v5080
    %5155 = vmatprep.subr.bf16.mxu0 0
    %5156 = vmatpush1.bf16.msra.mxu0 %v5081
    %5157 = vmatprep.subr.bf16.mxu0 0
    %5158 = vmatpush1.bf16.msra.mxu0 %v5082
    %5159 = vmatprep.subr.bf16.mxu0 0
    %5160 = vmatpush1.bf16.msra.mxu0 %v5083
    %5161 = vmatprep.subr.bf16.mxu0 0
    %5162 = vmatpush1.bf16.msra.mxu0 %v5084
    %5163 = vmatprep.subr.bf16.mxu0 0
    %5164 = vmatpush1.bf16.msra.mxu0 %v5085
    %5165 = vmatprep.subr.bf16.mxu0 0
    %5166 = vmatpush1.bf16.msra.mxu0 %v5086
    %5167 = vmatprep.mubr.bf16.mxu0 %v4872
    %5168 = vmatmul.mubr.bf16.gmra.mrb[0].mxu0 %v4871
    %v5169 = vpop.f32.mrb[0].mxu0
    %v5170 = vadd.f32 0.0, %v5169
    %v5171 = vpop.f32.mrb[0].mxu0
    %v5172 = vpop.f32.mrb[0].mxu0
    %v5173 = vadd.f32 0.0, %v5172
    %v5174 = vpop.f32.mrb[0].mxu0
    %5175 = vmatprep.mubr.bf16.mxu0 %v4876
    %5176 = vmatmul.mubr.bf16.gmra.mrb[0].mxu0 %v4875
    %v5177 = vpop.f32.mrb[0].mxu0
    %v5178 = vadd.f32 0.0, %v5177
    %v5179 = vpop.f32.mrb[0].mxu0
    %v5180 = vpop.f32.mrb[0].mxu0
    %v5181 = vadd.f32 0.0, %v5180
    %v5182 = vpop.f32.mrb[0].mxu0
    %5183 = vdwg.mxu0
    %5184 = vmatprep.subr.bf16.mxu0 0
    %5185 = vmatpush1.bf16.msra.mxu0 %v5087
    %5186 = vmatprep.subr.bf16.mxu0 0
    %5187 = vmatpush1.bf16.msra.mxu0 %v5088
    %5188 = vmatprep.subr.bf16.mxu0 0
    %5189 = vmatpush1.bf16.msra.mxu0 %v5089
    %5190 = vmatprep.subr.bf16.mxu0 0
    %5191 = vmatpush1.bf16.msra.mxu0 %v5090
    %5192 = vmatprep.subr.bf16.mxu0 0
    %5193 = vmatpush1.bf16.msra.mxu0 %v5091
    %5194 = vmatprep.subr.bf16.mxu0 0
    %5195 = vmatpush1.bf16.msra.mxu0 %v5092
    %5196 = vmatprep.subr.bf16.mxu0 0
    %5197 = vmatpush1.bf16.msra.mxu0 %v5093
    %5198 = vmatprep.subr.bf16.mxu0 0
    %5199 = vmatpush1.bf16.msra.mxu0 %v5094
    %5200 = vmatprep.subr.bf16.mxu0 0
    %5201 = vmatpush1.bf16.msra.mxu0 %v5095
    %5202 = vmatprep.subr.bf16.mxu0 0
    %5203 = vmatpush1.bf16.msra.mxu0 %v5096
    %5204 = vmatprep.subr.bf16.mxu0 0
    %5205 = vmatpush1.bf16.msra.mxu0 %v5097
    %5206 = vmatprep.subr.bf16.mxu0 0
    %5207 = vmatpush1.bf16.msra.mxu0 %v5098
    %5208 = vmatprep.subr.bf16.mxu0 0
    %5209 = vmatpush1.bf16.msra.mxu0 %v5099
    %5210 = vmatprep.subr.bf16.mxu0 0
    %5211 = vmatpush1.bf16.msra.mxu0 %v5100
    %5212 = vmatprep.subr.bf16.mxu0 0
    %5213 = vmatpush1.bf16.msra.mxu0 %v5101
    %5214 = vmatprep.subr.bf16.mxu0 0
    %5215 = vmatpush1.bf16.msra.mxu0 %v5102
    %5216 = vmatprep.mubr.bf16.mxu0 %v4874
    %5217 = vmatmul.mubr.bf16.gmra.mrb[0].mxu0 %v4873
    %v5218 = vpop.f32.mrb[0].mxu0
    %v5219 = vadd.f32 %v5170, %v5218
    %v5220 = vpop.f32.mrb[0].mxu0
    %v5221 = vpop.f32.mrb[0].mxu0
    %v5222 = vadd.f32 %v5173, %v5221
    %v5223 = vpop.f32.mrb[0].mxu0
    %5224 = vmatprep.mubr.bf16.mxu0 %v4878
    %5225 = vmatmul.mubr.bf16.gmra.mrb[0].mxu0 %v4877
    %v5226 = vpop.f32.mrb[0].mxu0
    %v5227 = vadd.f32 %v5178, %v5226
    %v5228 = vpop.f32.mrb[0].mxu0
    %v5229 = vpop.f32.mrb[0].mxu0
    %v5230 = vadd.f32 %v5181, %v5229
    %v5231 = vpop.f32.mrb[0].mxu0
    %5232 = vdwg.mxu0
    %v5233 = vadd.f32 %v4675, %v5219
    %v5234 = vadd.f32 %v4676, %v5222
    %v5235 = vadd.f32 %v4677, %v5227
    %v5236 = vadd.f32 %v4678, %v5230
    %v5237 = vadd.f32 %v3001, %v5233
    %v5238 = vadd.f32 %v3002, %v5234
    %v5239 = vadd.f32 %v3003, %v5235
    %v5240 = vadd.f32 %v3004, %v5236
    %v5241 = vlaneseq
    %v5242 = vshrl.u32 %v5241, 7
    %v5243 = vsub.s32 0, %v5242
    %v5244 = vrot.slane %v43, %v5243
    %v5245 = vadd.f32 %v5237, %v5244
    %v5246 = vadd.f32 %v5238, %v5244
    %v5247 = vadd.f32 %v5239, %v5244
    %v5248 = vadd.f32 %v5240, %v5244
    %v5249 = vsel %vm64, %v5245, 0.0
    %5250 = vadd.xlane.f32.xlu0 %v5249
    %v5251 = vpop.xlane.xlu0 %5250
    %v5252 = vsel %vm64, %v5246, 0.0
    %5253 = vadd.xlane.f32.xlu0 %v5252
    %v5254 = vpop.xlane.xlu0 %5253
    %v5255 = vsel %vm64, %v5247, 0.0
    %5256 = vadd.xlane.f32.xlu0 %v5255
    %v5257 = vpop.xlane.xlu0 %5256
    %v5258 = vsel %vm64, %v5248, 0.0
    %5259 = vadd.xlane.f32.xlu0 %v5258
    %v5260 = vpop.xlane.xlu0 %5259
    %v5261 = vmul.f32 %v5251, %v2948
    %v5262 = vmul.f32 %v5254, %v2948
    %v5263 = vmul.f32 %v5257, %v2948
    %v5264 = vmul.f32 %v5260, %v2948
    %v5265 = vsub.f32 %v5245, %v5261
    %v5266 = vsub.f32 %v5246, %v5262
    %v5267 = vsub.f32 %v5247, %v5263
    %v5268 = vsub.f32 %v5248, %v5264
    %v5269 = vmul.f32 %v5265, %v5265
    %v5270 = vmul.f32 %v5266, %v5266
    %v5271 = vmul.f32 %v5267, %v5267
    %v5272 = vmul.f32 %v5268, %v5268
    %v5273 = vsel %vm64, %v5269, 0.0
    %5274 = vadd.xlane.f32.xlu0 %v5273
    %v5275 = vpop.xlane.xlu0 %5274
    %v5276 = vsel %vm64, %v5270, 0.0
    %5277 = vadd.xlane.f32.xlu0 %v5276
    %v5278 = vpop.xlane.xlu0 %5277
    %v5279 = vsel %vm64, %v5271, 0.0
    %5280 = vadd.xlane.f32.xlu0 %v5279
    %v5281 = vpop.xlane.xlu0 %5280
    %v5282 = vsel %vm64, %v5272, 0.0
    %5283 = vadd.xlane.f32.xlu0 %v5282
    %v5284 = vpop.xlane.xlu0 %5283
    %v5285 = vmul.f32 %v5275, %v2948
    %v5286 = vmul.f32 %v5278, %v2948
    %v5287 = vmul.f32 %v5281, %v2948
    %v5288 = vmul.f32 %v5284, %v2948
    %v5289 = vadd.f32 %v5285, 1e-05
    %v5290 = vadd.f32 %v5286, 1e-05
    %v5291 = vadd.f32 %v5287, 1e-05
    %v5292 = vadd.f32 %v5288, 1e-05
    %v5293 = vrsqrt.pop %v5289
    %v5294 = vrsqrt.pop %v5290
    %v5295 = vrsqrt.pop %v5291
    %v5296 = vrsqrt.pop %v5292
    %v5297 = vmul.f32 %v5265, %v5293
    %v5298 = vmul.f32 %v5266, %v5294
    %v5299 = vmul.f32 %v5267, %v5295
    %v5300 = vmul.f32 %v5268, %v5296
    %v5301 = vlaneseq
    %v5302 = vshrl.u32 %v5301, 7
    %v5303 = vsub.s32 0, %v5302
    %v5304 = vrot.slane %v41, %v5303
    %v5305 = vmul.f32 %v5297, %v5304
    %v5306 = vmul.f32 %v5298, %v5304
    %v5307 = vmul.f32 %v5299, %v5304
    %v5308 = vmul.f32 %v5300, %v5304
    %v5309 = vlaneseq
    %v5310 = vshrl.u32 %v5309, 7
    %v5311 = vsub.s32 0, %v5310
    %v5312 = vrot.slane %v42, %v5311
    %v5313 = vadd.f32 %v5305, %v5312
    %v5314 = vadd.f32 %v5306, %v5312
    %v5315 = vadd.f32 %v5307, %v5312
    %v5316 = vadd.f32 %v5308, %v5312
    %v5317 = vlaneseq
    %v5318 = vshrl.u32 %v5317, 7
    %v5319 = vsub.s32 0, %v5318
    %v5320 = vrot.slane %v44, %v5319
    %v5321 = vmul.f32 %v5313, %v5320
    %v5322 = vmul.f32 %v5314, %v5320
    %v5323 = vmul.f32 %v5315, %v5320
    %v5324 = vmul.f32 %v5316, %v5320
    %v5325 = vsel %vm64, %v5321, 0.0
    %5326 = vadd.xlane.f32.xlu0 %v5325
    %v5327 = vpop.xlane.xlu0 %5326
    %v5328 = vsel %vm64, %v5322, 0.0
    %5329 = vadd.xlane.f32.xlu0 %v5328
    %v5330 = vpop.xlane.xlu0 %5329
    %v5331 = vsel %vm64, %v5323, 0.0
    %5332 = vadd.xlane.f32.xlu0 %v5331
    %v5333 = vpop.xlane.xlu0 %5332
    %v5334 = vsel %vm64, %v5324, 0.0
    %5335 = vadd.xlane.f32.xlu0 %v5334
    %v5336 = vpop.xlane.xlu0 %5335
    %v5337 = vlaneseq
    %v5338 = vshrl.u32 %v5337, 7
    %v5339 = vsub.s32 0, %v5338
    %v5340 = vrot.slane %v45, %v5339
    %v5341 = vadd.f32 %v5327, %v5340
    %v5342 = vadd.f32 %v5330, %v5340
    %v5343 = vadd.f32 %v5333, %v5340
    %v5344 = vadd.f32 %v5336, %v5340
    %v5345 = vld [vmem:[%s7] sm:$0xff]
    %v5346 = vld [vmem:[%s7 + $0x8] sm:$0xff]
    %v5348 = vsel %vm858, %v630, 0
    %v5351 = vsel %vm858, %v631, 0
    %v5354 = vsel %vm858, %v632, 0
    %v5357 = vsel %vm858, %v633, 0
    %5359 = vmatprep.subr.mxu0 0.0
    %5360 = vmatpush1.msra.mxu0 %v5345
    %5361 = vmatprep.subr.mxu0 0.0
    %5362 = vmatpush1.msra.mxu0 %v5346
    %5363 = vmatprep.subr.mxu0 0.0
    %5364 = vmatpush1.msra.mxu0 0.0
    %5365 = vmatprep.subr.mxu0 0.0
    %5366 = vmatpush1.msra.mxu0 0.0
    %5367 = vmatprep.subr.mxu0 0.0
    %5368 = vmatpush1.msra.mxu0 0.0
    %5369 = vmatprep.subr.mxu0 0.0
    %5370 = vmatpush1.msra.mxu0 0.0
    %5371 = vmatprep.subr.mxu0 0.0
    %5372 = vmatpush1.msra.mxu0 0.0
    %5373 = vmatprep.subr.mxu0 0.0
    %5374 = vmatpush1.msra.mxu0 0.0
    %5375 = vmatprep.subr.mxu0 0.0
    %5376 = vmatpush1.msra.mxu0 0.0
    %5377 = vmatprep.subr.mxu0 0.0
    %5378 = vmatpush1.msra.mxu0 0.0
    %5379 = vmatprep.subr.mxu0 0.0
    %5380 = vmatpush1.msra.mxu0 0.0
    %5381 = vmatprep.subr.mxu0 0.0
    %5382 = vmatpush1.msra.mxu0 0.0
    %5383 = vmatprep.subr.mxu0 0.0
    %5384 = vmatpush1.msra.mxu0 0.0
    %5385 = vmatprep.subr.mxu0 0.0
    %5386 = vmatpush1.msra.mxu0 0.0
    %5387 = vmatprep.subr.mxu0 0.0
    %5388 = vmatpush1.msra.mxu0 0.0
    %5389 = vmatprep.subr.mxu0 0.0
    %5390 = vmatpush1.msra.mxu0 0.0
    %5391 = vmatprep.subr.mxu0 0.0
    %5392 = vmatpush1.msra.mxu0 0.0
    %5393 = vmatprep.subr.mxu0 0.0
    %5394 = vmatpush1.msra.mxu0 0.0
    %5395 = vmatprep.subr.mxu0 0.0
    %5396 = vmatpush1.msra.mxu0 0.0
    %5397 = vmatprep.subr.mxu0 0.0
    %5398 = vmatpush1.msra.mxu0 0.0
    %5399 = vmatprep.subr.mxu0 0.0
    %5400 = vmatpush1.msra.mxu0 0.0
    %5401 = vmatprep.subr.mxu0 0.0
    %5402 = vmatpush1.msra.mxu0 0.0
    %5403 = vmatprep.subr.mxu0 0.0
    %5404 = vmatpush1.msra.mxu0 0.0
    %5405 = vmatprep.subr.mxu0 0.0
    %5406 = vmatpush1.msra.mxu0 0.0
    %5407 = vmatprep.subr.mxu0 0.0
    %5408 = vmatpush1.msra.mxu0 0.0
    %5409 = vmatprep.subr.mxu0 0.0
    %5410 = vmatpush1.msra.mxu0 0.0
    %5411 = vmatprep.subr.mxu0 0.0
    %5412 = vmatpush1.msra.mxu0 0.0
    %5413 = vmatprep.subr.mxu0 0.0
    %5414 = vmatpush1.msra.mxu0 0.0
    %5415 = vmatprep.subr.mxu0 0.0
    %5416 = vmatpush1.msra.mxu0 0.0
    %5417 = vmatprep.subr.mxu0 0.0
    %5418 = vmatpush1.msra.mxu0 0.0
    %5419 = vmatprep.subr.mxu0 0.0
    %5420 = vmatpush1.msra.mxu0 0.0
    %5421 = vmatprep.subr.mxu0 0.0
    %5422 = vmatpush1.msra.mxu0 0.0
    %5423 = vmatprep.mubr.f32.mxu0 0.0
    %5424 = vmatmul.mubr.f32.gmra.mrb[0].mxu0 %v5348
    %v5425 = vpop.f32.mrb[0].mxu0
    %v5426 = vadd.f32 0.0, %v5425
    %v5427 = vpop.f32.mrb[0].mxu0
    %5428 = vmatprep.mubr.f32.mxu0 0.0
    %5429 = vmatmul.mubr.f32.gmra.mrb[0].mxu0 %v5351
    %v5430 = vpop.f32.mrb[0].mxu0
    %v5431 = vadd.f32 0.0, %v5430
    %v5432 = vpop.f32.mrb[0].mxu0
    %5433 = vmatprep.mubr.f32.mxu0 0.0
    %5434 = vmatmul.mubr.f32.gmra.mrb[0].mxu0 %v5354
    %v5435 = vpop.f32.mrb[0].mxu0
    %v5436 = vadd.f32 0.0, %v5435
    %v5437 = vpop.f32.mrb[0].mxu0
    %5438 = vmatprep.mubr.f32.mxu0 0.0
    %5439 = vmatmul.mubr.f32.gmra.mrb[0].mxu0 %v5357
    %v5440 = vpop.f32.mrb[0].mxu0
    %v5441 = vadd.f32 0.0, %v5440
    %v5442 = vpop.f32.mrb[0].mxu0
    %5443 = vdwg.mxu0
    %5445 = vset.pattern.permute.xlu0 0
    %5446 = vperm.xlu0 %5445, %v5341
    %v5447 = vpop.permute.xlu0 %5446
    %5450 = vset.pattern.permute.xlu0 0
    %5451 = vperm.xlu0 %5450, %v5342
    %v5452 = vpop.permute.xlu0 %5451
    %5455 = vset.pattern.permute.xlu0 0
    %5456 = vperm.xlu0 %5455, %v5343
    %v5457 = vpop.permute.xlu0 %5456
    %5460 = vset.pattern.permute.xlu0 0
    %5461 = vperm.xlu0 %5460, %v5344
    %v5462 = vpop.permute.xlu0 %5461
    %v5464 = vmul.f32 %v5447, %v5426
    %v5465 = vmul.f32 %v5452, %v5431
    %v5466 = vmul.f32 %v5457, %v5436
    %v5467 = vmul.f32 %v5462, %v5441
    %v5468 = vld [vmem:[%s7 + $0x10] sm:$0x1]
    %v5469 = vlaneseq
    %v5470 = vshrl.u32 %v5469, 7
    %v5471 = vsub.s32 0, %v5470
    %v5472 = vrot.slane %v5468, %v5471
    %v5474 = vsel %vm64, %v1290, 0
    %5476 = vmatprep.subr.mxu0 0.0
    %5477 = vmatpush1.msra.mxu0 %v5464
    %5478 = vmatprep.subr.mxu0 0.0
    %5479 = vmatpush1.msra.mxu0 %v5465
    %5480 = vmatprep.subr.mxu0 0.0
    %5481 = vmatpush1.msra.mxu0 %v5466
    %5482 = vmatprep.subr.mxu0 0.0
    %5483 = vmatpush1.msra.mxu0 %v5467
    %5484 = vmatprep.subr.mxu0 0.0
    %5485 = vmatpush1.msra.mxu0 0.0
    %5486 = vmatprep.subr.mxu0 0.0
    %5487 = vmatpush1.msra.mxu0 0.0
    %5488 = vmatprep.subr.mxu0 0.0
    %5489 = vmatpush1.msra.mxu0 0.0
    %5490 = vmatprep.subr.mxu0 0.0
    %5491 = vmatpush1.msra.mxu0 0.0
    %5492 = vmatprep.subr.mxu0 0.0
    %5493 = vmatpush1.msra.mxu0 0.0
    %5494 = vmatprep.subr.mxu0 0.0
    %5495 = vmatpush1.msra.mxu0 0.0
    %5496 = vmatprep.subr.mxu0 0.0
    %5497 = vmatpush1.msra.mxu0 0.0
    %5498 = vmatprep.subr.mxu0 0.0
    %5499 = vmatpush1.msra.mxu0 0.0
    %5500 = vmatprep.subr.mxu0 0.0
    %5501 = vmatpush1.msra.mxu0 0.0
    %5502 = vmatprep.subr.mxu0 0.0
    %5503 = vmatpush1.msra.mxu0 0.0
    %5504 = vmatprep.subr.mxu0 0.0
    %5505 = vmatpush1.msra.mxu0 0.0
    %5506 = vmatprep.subr.mxu0 0.0
    %5507 = vmatpush1.msra.mxu0 0.0
    %5508 = vmatprep.subr.mxu0 0.0
    %5509 = vmatpush1.msra.mxu0 0.0
    %5510 = vmatprep.subr.mxu0 0.0
    %5511 = vmatpush1.msra.mxu0 0.0
    %5512 = vmatprep.subr.mxu0 0.0
    %5513 = vmatpush1.msra.mxu0 0.0
    %5514 = vmatprep.subr.mxu0 0.0
    %5515 = vmatpush1.msra.mxu0 0.0
    %5516 = vmatprep.subr.mxu0 0.0
    %5517 = vmatpush1.msra.mxu0 0.0
    %5518 = vmatprep.subr.mxu0 0.0
    %5519 = vmatpush1.msra.mxu0 0.0
    %5520 = vmatprep.subr.mxu0 0.0
    %5521 = vmatpush1.msra.mxu0 0.0
    %5522 = vmatprep.subr.mxu0 0.0
    %5523 = vmatpush1.msra.mxu0 0.0
    %5524 = vmatprep.subr.mxu0 0.0
    %5525 = vmatpush1.msra.mxu0 0.0
    %5526 = vmatprep.subr.mxu0 0.0
    %5527 = vmatpush1.msra.mxu0 0.0
    %5528 = vmatprep.subr.mxu0 0.0
    %5529 = vmatpush1.msra.mxu0 0.0
    %5530 = vmatprep.subr.mxu0 0.0
    %5531 = vmatpush1.msra.mxu0 0.0
    %5532 = vmatprep.subr.mxu0 0.0
    %5533 = vmatpush1.msra.mxu0 0.0
    %5534 = vmatprep.subr.mxu0 0.0
    %5535 = vmatpush1.msra.mxu0 0.0
    %5536 = vmatprep.subr.mxu0 0.0
    %5537 = vmatpush1.msra.mxu0 0.0
    %5538 = vmatprep.subr.mxu0 0.0
    %5539 = vmatpush1.msra.mxu0 0.0
    %5540 = vmatprep.mubr.f32.mxu0 0.0
    %5541 = vmatmul.mubr.f32.gmra.mrb[0].mxu0 %v5474
    %v5542 = vpop.f32.mrb[0].mxu0
    %v5543 = vadd.f32 %v5472, %v5542
    %v5544 = vpop.f32.mrb[0].mxu0
    %5545 = vdwg.mxu0
    %vm5546 = vcmask 9216
    %5547 = vst.msk [vmem:[#allocation2] sm:$0x3] %vm5546, %v5543
    // Predicated region
    $region34: #{custom_model_forward.1} parent=1 // pred_check
      _
    $region35: #{custom_model_forward.1} parent=1 // pred_check_branch
      %5549 = sbr.rel (0) target = $region37
    $region36: #{custom_model_forward.1} parent=1 // pred_region
      %s5551 = ssub.s32 32, 32
      %5552 = vsyncadd [#allocation3], %s5551
      %s5554 = sshll.u32 [#allocation2], 4
      %s5555 = int_to_ptr.vmem [resolvable:$true] %s5554
      %5557 = dma.vmem_to_hbm [thread:$0]  %s5555, 32, %s8, [#allocation3]
    $region37: #{custom_model_forward.1} parent=1 // pred_fallthru
      _
    // Predicated region
    $region38: #{custom_model_forward.1} parent=1 // pred_check
      _
    $region39: #{custom_model_forward.1} parent=1 // pred_check_branch
      %5559 = sbr.rel (0) target = $region41
    $region40: #{custom_model_forward.1} parent=1 // pred_region
      %5560 = dma.done [#allocation3], 32
    $region41: #{custom_model_forward.1} parent=1 // pred_fallthru
      _
    %5561 = vsyncpa [#allocation3], 1

</llo_original>
